<compile_context>
chip_gen: v7x
topology: tpu7x:2x2x1
jax: 0.10.0
libtpu: 0.0.40
codegen_flags: <defaults>
</compile_context>

<pallas_src>
import jax
import jax.numpy as jnp
from jax import lax
from jax.experimental import pallas as pl
from jax.experimental.pallas import tpu as pltpu

# dot_general dims: contract the last dim of both operands (A[m,k] x B[n,k] -> [m,n]);
# maps to the MXU's native transpose_rhs path.
_NT = (((1,), (1,)), ((), ()))


# --------------------------- fused kernel -------------------------------------
def _fused_kernel(idp_ref, kpts_ref, pose4_ref,
                  w1_ref, b1_ref, w2_ref, b2_ref,
                  wgid_ref, wgwarp_ref, bg1_ref, wg2_ref, bg2_ref,
                  fake_ref, warp_ref,
                  idf_sc, m_sc, acc_sc):
    ki = pl.program_id(2)
    f32 = jnp.float32
    bf16 = jnp.bfloat16

    def corr_feat(pts):
        # netCorr: two pointwise (kernel-size-1 conv1d) layers with ReLU.
        # First matmul K=3 stays f32 (tiny); second matmul runs bf16 on the MXU.
        h = jnp.dot(pts, w1_ref[...], preferred_element_type=f32) + b1_ref[...]
        h = jnp.maximum(h, 0.0)
        f = jnp.dot(h.astype(bf16), w2_ref[...],
                    preferred_element_type=f32) + b2_ref[...]
        f = jnp.maximum(f, 0.0)
        return f.astype(bf16)                       # carries the C^-1/4 fold

    @pl.when(ki == 0)
    def _init():
        idf_sc[...] = corr_feat(idp_ref[0])         # (TQ, Cp) bf16, resident over ki
        m_sc[...] = jnp.full_like(m_sc, -jnp.inf)
        acc_sc[...] = jnp.zeros_like(acc_sc)

    pose_feat = corr_feat(kpts_ref[0])              # (TK, Cp) bf16
    id_feat = idf_sc[...]                           # (TQ, Cp) bf16

    # Correlation tile, transposed: s_t[k, q] = <pose_feat_k, id_feat_q>.
    # bf16 x bf16 on the MXU, f32 accumulation; 1/sqrt(C) already folded in.
    s_t = lax.dot_general(pose_feat, id_feat, _NT,
                          preferred_element_type=f32)          # (TK, TQ)

    m_prev = m_sc[...]                                          # (1, TQ)
    m_new = jnp.maximum(m_prev, jnp.max(s_t, axis=0, keepdims=True))
    alpha = jnp.exp(m_prev - m_new)
    p_t = jnp.exp(s_t - m_new).astype(bf16)                     # (TK, TQ) bf16
    # One MXU matmul accumulates BOTH the warp numerator (rows 0..2) and the
    # softmax denominator (row 3, from the ones row appended to the pose pts).
    acc_sc[...] = alpha * acc_sc[...] + jnp.dot(pose4_ref[0], p_t,
                                                preferred_element_type=f32)
    m_sc[...] = m_new

    @pl.when(ki == pl.num_programs(2) - 1)
    def _finalize():
        acc = acc_sc[...]                                       # (4, TQ)
        inv_l = pl.reciprocal(acc[3:4, :], approx=True)         # EUP slot
        warp_cf = acc[0:3, :] * inv_l                           # (3, TQ)

        # netG: concat(id_feat, warp) folded into two matmuls, channel-first,
        # bf16 weights / bf16 activations, f32 accumulation, f32 biases.
        h_cf = (lax.dot_general(wgid_ref[...], id_feat, _NT,
                                preferred_element_type=f32)
                + jnp.dot(wgwarp_ref[...], warp_cf.astype(bf16),
                          preferred_element_type=f32)
                + bg1_ref[...])
        h_cf = jnp.maximum(h_cf, 0.0)                           # (C, TQ)
        fake_cf = jnp.dot(wg2_ref[...], h_cf.astype(bf16),
                          preferred_element_type=f32) + bg2_ref[...]

        fake_ref[0] = fake_cf.astype(fake_ref.dtype)            # (3, TQ) lane-dense
        warp_ref[0] = warp_cf.astype(warp_ref.dtype)


# ------------------------------ wrapper ----------------------------------------
def _pick_tile(n, cands, max_single=1024):
    for c in cands:
        if n % c == 0:
            return c
    if n <= max_single:
        return n        # single full-extent tile; cheap at this size
    # TODO(synk): masked partial-tile path for large, non-tile-divisible N.
    raise NotImplementedError(
        f"N={n} is not divisible by any of {cands}; masked partial tiles not implemented")


def _full_spec(shape):
    nd = len(shape)
    return pl.BlockSpec(shape, lambda b, qi, ki, _nd=nd: (0,) * _nd)


def init_params(key, hidden=64):
    ks = jax.random.split(key, 6)
    s = 0.1
    return {
        'w1':      s * jax.random.normal(ks[0], (3, hidden), jnp.float32),
        'b1':      jnp.zeros((1, hidden), jnp.float32),
        'w2':      s * jax.random.normal(ks[1], (hidden, hidden), jnp.float32),
        'b2':      jnp.zeros((1, hidden), jnp.float32),
        'wg_id':   s * jax.random.normal(ks[2], (hidden, hidden), jnp.float32),
        'wg_warp': s * jax.random.normal(ks[3], (3, hidden), jnp.float32),
        'bg1':     jnp.zeros((1, hidden), jnp.float32),
        'wg2':     s * jax.random.normal(ks[4], (hidden, 3), jnp.float32),
        'bg2':     jnp.zeros((1, 3), jnp.float32),
    }


def ver2ver_inference(identity_points, pose_points, params):
    """Equivalent of Ver2VerModel.forward(..., mode='inference')."""
    B, N, _ = identity_points.shape
    C = params['w1'].shape[1]
    Cp = max(128, ((C + 127) // 128) * 128)      # lane-dense padded feature dim
    f32, bf16 = jnp.float32, jnp.bfloat16

    # ----- host-side weight folds (exact in f32, see module docstring) -------
    s4 = float(C) ** -0.25
    w1 = params['w1'].astype(f32)                                          # (3, C)
    b1 = params['b1'].astype(f32)                                          # (1, C)
    w2 = jnp.pad(params['w2'] * s4, ((0, 0), (0, Cp - C))).astype(bf16)    # (C, Cp)
    b2 = jnp.pad(params['b2'] * s4, ((0, 0), (0, Cp - C))).astype(f32)     # (1, Cp)

    wgid_t = jnp.pad((params['wg_id'] / s4).T,
                     ((0, 0), (0, Cp - C))).astype(bf16)                   # (C, Cp)
    wgwarp_t = params['wg_warp'].T.astype(bf16)                            # (C, 3)
    bg1_cf = params['bg1'].T.astype(f32)                                   # (C, 1)
    wg2_t = params['wg2'].T.astype(bf16)                                   # (3, C)
    bg2_cf = params['bg2'].T.astype(f32)                                   # (3, 1)

    idp = identity_points.astype(f32)                                      # (B, N, 3)
    posep = pose_points.astype(f32)                                        # (B, N, 3)
    # Channel-first pose points + ones row: warp numerator and softmax
    # denominator come out of a single MXU matmul in the kernel.
    pose4 = jnp.concatenate(
        [jnp.transpose(posep, (0, 2, 1)), jnp.ones((B, 1, N), f32)],
        axis=1).astype(bf16)                                               # (B, 4, N)

    # Tiles capped at 1024 so logits/exp temporaries stay far under the v7x
    # 64 MiB physical / 32 MiB scoped VMEM budget.
    TQ = _pick_tile(N, (1024, 512, 256, 128))
    TK = _pick_tile(N, (1024, 512, 256, 128))
    n_q, n_k = N // TQ, N // TK
    # Note for v7x (2 TCs): B * n_q parallel units; B=2 already keeps both
    # cores busy even when n_q == 1.

    fake_cf, warp_cf = pl.pallas_call(
        _fused_kernel,
        out_shape=(jax.ShapeDtypeStruct((B, 3, N), f32),
                   jax.ShapeDtypeStruct((B, 3, N), f32)),
        grid=(B, n_q, n_k),
        in_specs=[
            pl.BlockSpec((1, TQ, 3), lambda b, qi, ki: (b, qi, 0)),   # id points
            pl.BlockSpec((1, TK, 3), lambda b, qi, ki: (b, ki, 0)),   # pose points (row-major)
            pl.BlockSpec((1, 4, TK), lambda b, qi, ki: (b, 0, ki)),   # pose points cf + ones
            _full_spec(w1.shape), _full_spec(b1.shape),
            _full_spec(w2.shape), _full_spec(b2.shape),
            _full_spec(wgid_t.shape), _full_spec(wgwarp_t.shape),
            _full_spec(bg1_cf.shape), _full_spec(wg2_t.shape),
            _full_spec(bg2_cf.shape),
        ],
        out_specs=(pl.BlockSpec((1, 3, TQ), lambda b, qi, ki: (b, 0, qi)),
                   pl.BlockSpec((1, 3, TQ), lambda b, qi, ki: (b, 0, qi))),
        scratch_shapes=[pltpu.VMEM((TQ, Cp), bf16),   # resident id-tile features
                        pltpu.VMEM((1, TQ), f32),     # running max m
                        pltpu.VMEM((4, TQ), f32)],    # warp numerator (0..2) + denom (3)
        compiler_params=pltpu.CompilerParams(
            dimension_semantics=("parallel", "parallel", "arbitrary"),
            vmem_limit_bytes=32 * 1024 * 1024),
    )(idp, posep, pose4, w1, b1, w2, b2, wgid_t, wgwarp_t, bg1_cf, wg2_t, bg2_cf)

    return {
        'warp_out': jnp.transpose(warp_cf, (0, 2, 1)),   # (B, N, 3), matches pose_points layout
        'fake_points': fake_cf,                          # (B, 3, N), channel-first like netG
        'identity_points': identity_points,
        'pose_points': pose_points,
    }


# --------------------------- pure-JAX reference --------------------------------
def _reference(idp, posep, params):
    def corr_net(x):
        h = jnp.maximum(x @ params['w1'] + params['b1'], 0.0)
        return jnp.maximum(h @ params['w2'] + params['b2'], 0.0)
    idf = corr_net(idp)
    pf = corr_net(posep)
    c = idf.shape[-1]
    corr = jnp.einsum('bnc,bmc->bnm', idf, pf) / jnp.sqrt(jnp.float32(c))
    attn = jax.nn.softmax(corr, axis=-1)
    warp = jnp.einsum('bnm,bmd->bnd', attn, posep)
    h = jnp.maximum(idf @ params['wg_id'] + warp @ params['wg_warp'] + params['bg1'], 0.0)
    fake = h @ params['wg2'] + params['bg2']
    return fake, warp


if __name__ == "__main__":
    key = jax.random.PRNGKey(0)
    k_id, k_pose, k_par = jax.random.split(key, 3)

    B, N, C = 2, 256, 64
    identity_points = jax.random.normal(k_id, (B, N, 3), jnp.float32)
    pose_points = jax.random.normal(k_pose, (B, N, 3), jnp.float32)
    params = init_params(k_par, hidden=C)

    out = ver2ver_inference(identity_points, pose_points, params)
    jax.block_until_ready(out['fake_points'])
    jax.block_until_ready(out['warp_out'])

    assert out['fake_points'].shape == (B, 3, N)
    assert out['warp_out'].shape == (B, N, 3)

    ref_fake, ref_warp = _reference(identity_points, pose_points, params)
    fake_err = float(jnp.max(jnp.abs(jnp.transpose(out['fake_points'], (0, 2, 1)) - ref_fake)))
    warp_err = float(jnp.max(jnp.abs(out['warp_out'] - ref_warp)))
    assert fake_err < 1e-2, f"fake_points mismatch: {fake_err}"
    assert warp_err < 1e-2, f"warp_out mismatch: {warp_err}"

    print("KERNEL_OK")
</pallas_src>

<mosaic_0001>
module attributes {stable_mosaic.version = 11 : i64} {
  func.func @_fused_kernel(%arg0: i32, %arg1: i32, %arg2: i32, %arg3: memref<1x256x3xf32, #tpu.memory_space<vmem>>, %arg4: memref<1x256x3xf32, #tpu.memory_space<vmem>>, %arg5: memref<1x4x256xbf16, #tpu.memory_space<vmem>>, %arg6: memref<3x64xf32, #tpu.memory_space<vmem>>, %arg7: memref<1x64xf32, #tpu.memory_space<vmem>>, %arg8: memref<64x128xbf16, #tpu.memory_space<vmem>>, %arg9: memref<1x128xf32, #tpu.memory_space<vmem>>, %arg10: memref<64x128xbf16, #tpu.memory_space<vmem>>, %arg11: memref<64x3xbf16, #tpu.memory_space<vmem>>, %arg12: memref<64x1xf32, #tpu.memory_space<vmem>>, %arg13: memref<3x64xbf16, #tpu.memory_space<vmem>>, %arg14: memref<3x1xf32, #tpu.memory_space<vmem>>, %arg15: memref<1x3x256xf32, #tpu.memory_space<vmem>>, %arg16: memref<1x3x256xf32, #tpu.memory_space<vmem>>, %arg17: memref<256x128xbf16, #tpu.memory_space<vmem>>, %arg18: memref<1x256xf32, #tpu.memory_space<vmem>>, %arg19: memref<4x256xf32, #tpu.memory_space<vmem>>) attributes {dimension_semantics = [#tpu.dimension_semantics<parallel>, #tpu.dimension_semantics<parallel>, #tpu.dimension_semantics<arbitrary>], iteration_bounds = array<i64: 2, 1, 1>, scalar_prefetch = 0 : i64, scratch_operands = 3 : i64, tpu.core_type = #tpu.core_type<tc>, window_params = [{transform_indices = @transform_0, window_bounds = array<i64: 1, 256, 3>}, {transform_indices = @transform_1, window_bounds = array<i64: 1, 256, 3>}, {transform_indices = @transform_2, window_bounds = array<i64: 1, 4, 256>}, {pipeline_mode = #tpu.pipeline_mode<synchronous>, transform_indices = @transform_3, window_bounds = array<i64: 3, 64>}, {pipeline_mode = #tpu.pipeline_mode<synchronous>, transform_indices = @transform_4, window_bounds = array<i64: 1, 64>}, {pipeline_mode = #tpu.pipeline_mode<synchronous>, transform_indices = @transform_5, window_bounds = array<i64: 64, 128>}, {pipeline_mode = #tpu.pipeline_mode<synchronous>, transform_indices = @transform_6, window_bounds = array<i64: 1, 128>}, {pipeline_mode = #tpu.pipeline_mode<synchronous>, transform_indices = @transform_7, window_bounds = array<i64: 64, 128>}, {pipeline_mode = #tpu.pipeline_mode<synchronous>, transform_indices = @transform_8, window_bounds = array<i64: 64, 3>}, {pipeline_mode = #tpu.pipeline_mode<synchronous>, transform_indices = @transform_9, window_bounds = array<i64: 64, 1>}, {pipeline_mode = #tpu.pipeline_mode<synchronous>, transform_indices = @transform_10, window_bounds = array<i64: 3, 64>}, {pipeline_mode = #tpu.pipeline_mode<synchronous>, transform_indices = @transform_11, window_bounds = array<i64: 3, 1>}, {transform_indices = @transform_12, window_bounds = array<i64: 1, 3, 256>}, {transform_indices = @transform_13, window_bounds = array<i64: 1, 3, 256>}]} {
    %c0_i32 = arith.constant 0 : i32
    %0 = arith.cmpi eq, %arg2, %c0_i32 : i32
    %1 = arith.extui %0 : i1 to i32
    %c0_i32_0 = arith.constant 0 : i32
    %2 = arith.cmpi ne, %1, %c0_i32_0 : i32
    scf.if %2 {
      %c0_32 = arith.constant 0 : index
      %c0_33 = arith.constant 0 : index
      %c0_34 = arith.constant 0 : index
      %45 = vector.load %arg3[%c0_32, %c0_33, %c0_34] : memref<1x256x3xf32, #tpu.memory_space<vmem>>, vector<1x256x3xf32>
      %46 = vector.shape_cast %45 : vector<1x256x3xf32> to vector<256x3xf32>
      %c0_35 = arith.constant 0 : index
      %c0_36 = arith.constant 0 : index
      %47 = vector.load %arg6[%c0_35, %c0_36] : memref<3x64xf32, #tpu.memory_space<vmem>>, vector<3x64xf32>
      %cst_37 = arith.constant dense<0.000000e+00> : vector<256x64xf32>
      %48 = tpu.matmul %46, %47, %cst_37 {dimension_numbers = #tpu.dot_dimension_numbers<[1], [0], [0], [1], [0, 0, 1, 1], [], []>} : vector<256x3xf32>, vector<3x64xf32>, vector<256x64xf32> -> vector<256x64xf32>
      %c0_38 = arith.constant 0 : index
      %c0_39 = arith.constant 0 : index
      %49 = vector.load %arg7[%c0_38, %c0_39] : memref<1x64xf32, #tpu.memory_space<vmem>>, vector<1x64xf32>
      %50 = vector.broadcast %49 : vector<1x64xf32> to vector<256x64xf32>
      %51 = arith.addf %48, %50 : vector<256x64xf32>
      %cst_40 = arith.constant 0.000000e+00 : f32
      %52 = vector.broadcast %cst_40 : f32 to vector<256x64xf32>
      %53 = arith.maximumf %51, %52 : vector<256x64xf32>
      %54 = arith.truncf %53 : vector<256x64xf32> to vector<256x64xbf16>
      %c0_41 = arith.constant 0 : index
      %c0_42 = arith.constant 0 : index
      %55 = vector.load %arg8[%c0_41, %c0_42] : memref<64x128xbf16, #tpu.memory_space<vmem>>, vector<64x128xbf16>
      %cst_43 = arith.constant dense<0.000000e+00> : vector<256x128xf32>
      %56 = tpu.matmul %54, %55, %cst_43 {dimension_numbers = #tpu.dot_dimension_numbers<[1], [0], [0], [1], [0, 0, 1, 1], [], []>} : vector<256x64xbf16>, vector<64x128xbf16>, vector<256x128xf32> -> vector<256x128xf32>
      %c0_44 = arith.constant 0 : index
      %c0_45 = arith.constant 0 : index
      %57 = vector.load %arg9[%c0_44, %c0_45] : memref<1x128xf32, #tpu.memory_space<vmem>>, vector<1x128xf32>
      %58 = vector.broadcast %57 : vector<1x128xf32> to vector<256x128xf32>
      %59 = arith.addf %56, %58 : vector<256x128xf32>
      %cst_46 = arith.constant 0.000000e+00 : f32
      %60 = vector.broadcast %cst_46 : f32 to vector<256x128xf32>
      %61 = arith.maximumf %59, %60 : vector<256x128xf32>
      %62 = arith.truncf %61 : vector<256x128xf32> to vector<256x128xbf16>
      %c0_47 = arith.constant 0 : index
      %c0_48 = arith.constant 0 : index
      %63 = vector.load %arg17[%c0_47, %c0_48] : memref<256x128xbf16, #tpu.memory_space<vmem>>, vector<256x128xbf16>
      tpu.vector_store %arg17[%c0_47, %c0_48], %62 {strides = array<i32>} : memref<256x128xbf16, #tpu.memory_space<vmem>>, vector<256x128xbf16>,
      %cst_49 = arith.constant 0xFF800000 : f32
      %64 = vector.broadcast %cst_49 : f32 to vector<1x256xf32>
      %c0_50 = arith.constant 0 : index
      %c0_51 = arith.constant 0 : index
      %65 = vector.load %arg18[%c0_50, %c0_51] : memref<1x256xf32, #tpu.memory_space<vmem>>, vector<1x256xf32>
      tpu.vector_store %arg18[%c0_50, %c0_51], %64 {strides = array<i32>} : memref<1x256xf32, #tpu.memory_space<vmem>>, vector<1x256xf32>,
      %cst_52 = arith.constant 0.000000e+00 : f32
      %66 = vector.broadcast %cst_52 : f32 to vector<4x256xf32>
      %c0_53 = arith.constant 0 : index
      %c0_54 = arith.constant 0 : index
      %67 = vector.load %arg19[%c0_53, %c0_54] : memref<4x256xf32, #tpu.memory_space<vmem>>, vector<4x256xf32>
      tpu.vector_store %arg19[%c0_53, %c0_54], %66 {strides = array<i32>} : memref<4x256xf32, #tpu.memory_space<vmem>>, vector<4x256xf32>,
    } else {
    }
    %c0 = arith.constant 0 : index
    %c0_1 = arith.constant 0 : index
    %c0_2 = arith.constant 0 : index
    %3 = vector.load %arg4[%c0, %c0_1, %c0_2] : memref<1x256x3xf32, #tpu.memory_space<vmem>>, vector<1x256x3xf32>
    %4 = vector.shape_cast %3 : vector<1x256x3xf32> to vector<256x3xf32>
    %c0_3 = arith.constant 0 : index
    %c0_4 = arith.constant 0 : index
    %5 = vector.load %arg6[%c0_3, %c0_4] : memref<3x64xf32, #tpu.memory_space<vmem>>, vector<3x64xf32>
    %cst = arith.constant dense<0.000000e+00> : vector<256x64xf32>
    %6 = tpu.matmul %4, %5, %cst {dimension_numbers = #tpu.dot_dimension_numbers<[1], [0], [0], [1], [0, 0, 1, 1], [], []>} : vector<256x3xf32>, vector<3x64xf32>, vector<256x64xf32> -> vector<256x64xf32>
    %c0_5 = arith.constant 0 : index
    %c0_6 = arith.constant 0 : index
    %7 = vector.load %arg7[%c0_5, %c0_6] : memref<1x64xf32, #tpu.memory_space<vmem>>, vector<1x64xf32>
    %8 = vector.broadcast %7 : vector<1x64xf32> to vector<256x64xf32>
    %9 = arith.addf %6, %8 : vector<256x64xf32>
    %cst_7 = arith.constant 0.000000e+00 : f32
    %10 = vector.broadcast %cst_7 : f32 to vector<256x64xf32>
    %11 = arith.maximumf %9, %10 : vector<256x64xf32>
    %12 = arith.truncf %11 : vector<256x64xf32> to vector<256x64xbf16>
    %c0_8 = arith.constant 0 : index
    %c0_9 = arith.constant 0 : index
    %13 = vector.load %arg8[%c0_8, %c0_9] : memref<64x128xbf16, #tpu.memory_space<vmem>>, vector<64x128xbf16>
    %cst_10 = arith.constant dense<0.000000e+00> : vector<256x128xf32>
    %14 = tpu.matmul %12, %13, %cst_10 {dimension_numbers = #tpu.dot_dimension_numbers<[1], [0], [0], [1], [0, 0, 1, 1], [], []>} : vector<256x64xbf16>, vector<64x128xbf16>, vector<256x128xf32> -> vector<256x128xf32>
    %c0_11 = arith.constant 0 : index
    %c0_12 = arith.constant 0 : index
    %15 = vector.load %arg9[%c0_11, %c0_12] : memref<1x128xf32, #tpu.memory_space<vmem>>, vector<1x128xf32>
    %16 = vector.broadcast %15 : vector<1x128xf32> to vector<256x128xf32>
    %17 = arith.addf %14, %16 : vector<256x128xf32>
    %cst_13 = arith.constant 0.000000e+00 : f32
    %18 = vector.broadcast %cst_13 : f32 to vector<256x128xf32>
    %19 = arith.maximumf %17, %18 : vector<256x128xf32>
    %20 = arith.truncf %19 : vector<256x128xf32> to vector<256x128xbf16>
    %c0_14 = arith.constant 0 : index
    %c0_15 = arith.constant 0 : index
    %21 = vector.load %arg17[%c0_14, %c0_15] : memref<256x128xbf16, #tpu.memory_space<vmem>>, vector<256x128xbf16>
    %cst_16 = arith.constant dense<0.000000e+00> : vector<256x256xf32>
    %22 = tpu.matmul %20, %21, %cst_16 {dimension_numbers = #tpu.dot_dimension_numbers<[1], [1], [0], [0], [0, 0, 1, 0], [], []>} : vector<256x128xbf16>, vector<256x128xbf16>, vector<256x256xf32> -> vector<256x256xf32>
    %c0_17 = arith.constant 0 : index
    %c0_18 = arith.constant 0 : index
    %23 = vector.load %arg18[%c0_17, %c0_18] : memref<1x256xf32, #tpu.memory_space<vmem>>, vector<1x256xf32>
    %cst_19 = arith.constant dense<0xFF800000> : vector<256xf32>
    %24 = vector.multi_reduction <maximumf>, %22, %cst_19 [0] : vector<256x256xf32> to vector<256xf32>
    %25 = vector.shape_cast %24 : vector<256xf32> to vector<1x256xf32>
    %26 = arith.maximumf %23, %25 : vector<1x256xf32>
    %27 = arith.subf %23, %26 : vector<1x256xf32>
    %28 = math.exp %27 : vector<1x256xf32>
    %29 = vector.broadcast %26 : vector<1x256xf32> to vector<256x256xf32>
    %30 = arith.subf %22, %29 : vector<256x256xf32>
    %31 = math.exp %30 : vector<256x256xf32>
    %32 = arith.truncf %31 : vector<256x256xf32> to vector<256x256xbf16>
    %c0_20 = arith.constant 0 : index
    %c0_21 = arith.constant 0 : index
    %33 = vector.load %arg19[%c0_20, %c0_21] : memref<4x256xf32, #tpu.memory_space<vmem>>, vector<4x256xf32>
    %34 = vector.broadcast %28 : vector<1x256xf32> to vector<4x256xf32>
    %35 = arith.mulf %34, %33 : vector<4x256xf32>
    %c0_22 = arith.constant 0 : index
    %c0_23 = arith.constant 0 : index
    %c0_24 = arith.constant 0 : index
    %36 = vector.load %arg5[%c0_22, %c0_23, %c0_24] : memref<1x4x256xbf16, #tpu.memory_space<vmem>>, vector<1x4x256xbf16>
    %37 = vector.shape_cast %36 : vector<1x4x256xbf16> to vector<4x256xbf16>
    %cst_25 = arith.constant dense<0.000000e+00> : vector<4x256xf32>
    %38 = tpu.matmul %37, %32, %cst_25 {dimension_numbers = #tpu.dot_dimension_numbers<[1], [0], [0], [1], [0, 0, 1, 1], [], []>} : vector<4x256xbf16>, vector<256x256xbf16>, vector<4x256xf32> -> vector<4x256xf32>
    %39 = arith.addf %35, %38 : vector<4x256xf32>
    %c0_26 = arith.constant 0 : index
    %c0_27 = arith.constant 0 : index
    %40 = vector.load %arg19[%c0_26, %c0_27] : memref<4x256xf32, #tpu.memory_space<vmem>>, vector<4x256xf32>
    tpu.vector_store %arg19[%c0_26, %c0_27], %39 {strides = array<i32>} : memref<4x256xf32, #tpu.memory_space<vmem>>, vector<4x256xf32>,
    %c0_28 = arith.constant 0 : index
    %c0_29 = arith.constant 0 : index
    %41 = vector.load %arg18[%c0_28, %c0_29] : memref<1x256xf32, #tpu.memory_space<vmem>>, vector<1x256xf32>
    tpu.vector_store %arg18[%c0_28, %c0_29], %26 {strides = array<i32>} : memref<1x256xf32, #tpu.memory_space<vmem>>, vector<1x256xf32>,
    %c0_i32_30 = arith.constant 0 : i32
    %42 = arith.cmpi eq, %arg2, %c0_i32_30 : i32
    %43 = arith.extui %42 : i1 to i32
    %c0_i32_31 = arith.constant 0 : i32
    %44 = arith.cmpi ne, %43, %c0_i32_31 : i32
    scf.if %44 {
      %c0_32 = arith.constant 0 : index
      %c0_33 = arith.constant 0 : index
      %45 = vector.load %arg19[%c0_32, %c0_33] : memref<4x256xf32, #tpu.memory_space<vmem>>, vector<4x256xf32>
      %46 = vector.extract_strided_slice %45 {offsets = [3, 0], sizes = [1, 256], strides = [1, 1]} : vector<4x256xf32> to vector<1x256xf32>
      %47 = tpu.reciprocal %46 {approx = true} : vector<1x256xf32> -> vector<1x256xf32>
      %48 = vector.extract_strided_slice %45 {offsets = [0, 0], sizes = [3, 256], strides = [1, 1]} : vector<4x256xf32> to vector<3x256xf32>
      %49 = vector.broadcast %47 : vector<1x256xf32> to vector<3x256xf32>
      %50 = arith.mulf %48, %49 : vector<3x256xf32>
      %c0_34 = arith.constant 0 : index
      %c0_35 = arith.constant 0 : index
      %51 = vector.load %arg10[%c0_34, %c0_35] : memref<64x128xbf16, #tpu.memory_space<vmem>>, vector<64x128xbf16>
      %cst_36 = arith.constant dense<0.000000e+00> : vector<64x256xf32>
      %52 = tpu.matmul %51, %21, %cst_36 {dimension_numbers = #tpu.dot_dimension_numbers<[1], [1], [0], [0], [0, 0, 1, 0], [], []>} : vector<64x128xbf16>, vector<256x128xbf16>, vector<64x256xf32> -> vector<64x256xf32>
      %c0_37 = arith.constant 0 : index
      %c0_38 = arith.constant 0 : index
      %53 = vector.load %arg11[%c0_37, %c0_38] : memref<64x3xbf16, #tpu.memory_space<vmem>>, vector<64x3xbf16>
      %54 = arith.truncf %50 : vector<3x256xf32> to vector<3x256xbf16>
      %cst_39 = arith.constant dense<0.000000e+00> : vector<64x256xf32>
      %55 = tpu.matmul %53, %54, %cst_39 {dimension_numbers = #tpu.dot_dimension_numbers<[1], [0], [0], [1], [0, 0, 1, 1], [], []>} : vector<64x3xbf16>, vector<3x256xbf16>, vector<64x256xf32> -> vector<64x256xf32>
      %56 = arith.addf %52, %55 : vector<64x256xf32>
      %c0_40 = arith.constant 0 : index
      %c0_41 = arith.constant 0 : index
      %57 = vector.load %arg12[%c0_40, %c0_41] : memref<64x1xf32, #tpu.memory_space<vmem>>, vector<64x1xf32>
      %58 = vector.broadcast %57 : vector<64x1xf32> to vector<64x256xf32>
      %59 = arith.addf %56, %58 : vector<64x256xf32>
      %cst_42 = arith.constant 0.000000e+00 : f32
      %60 = vector.broadcast %cst_42 : f32 to vector<64x256xf32>
      %61 = arith.maximumf %59, %60 : vector<64x256xf32>
      %c0_43 = arith.constant 0 : index
      %c0_44 = arith.constant 0 : index
      %62 = vector.load %arg13[%c0_43, %c0_44] : memref<3x64xbf16, #tpu.memory_space<vmem>>, vector<3x64xbf16>
      %63 = arith.truncf %61 : vector<64x256xf32> to vector<64x256xbf16>
      %cst_45 = arith.constant dense<0.000000e+00> : vector<3x256xf32>
      %64 = tpu.matmul %62, %63, %cst_45 {dimension_numbers = #tpu.dot_dimension_numbers<[1], [0], [0], [1], [0, 0, 1, 1], [], []>} : vector<3x64xbf16>, vector<64x256xbf16>, vector<3x256xf32> -> vector<3x256xf32>
      %c0_46 = arith.constant 0 : index
      %c0_47 = arith.constant 0 : index
      %65 = vector.load %arg14[%c0_46, %c0_47] : memref<3x1xf32, #tpu.memory_space<vmem>>, vector<3x1xf32>
      %66 = vector.broadcast %65 : vector<3x1xf32> to vector<3x256xf32>
      %67 = arith.addf %64, %66 : vector<3x256xf32>
      %c0_48 = arith.constant 0 : index
      %c0_49 = arith.constant 0 : index
      %c0_50 = arith.constant 0 : index
      %68 = vector.load %arg15[%c0_48, %c0_49, %c0_50] : memref<1x3x256xf32, #tpu.memory_space<vmem>>, vector<1x3x256xf32>
      %69 = vector.shape_cast %68 : vector<1x3x256xf32> to vector<3x256xf32>
      %70 = vector.shape_cast %67 : vector<3x256xf32> to vector<1x3x256xf32>
      tpu.vector_store %arg15[%c0_48, %c0_49, %c0_50], %70 {strides = array<i32>} : memref<1x3x256xf32, #tpu.memory_space<vmem>>, vector<1x3x256xf32>,
      %c0_51 = arith.constant 0 : index
      %c0_52 = arith.constant 0 : index
      %c0_53 = arith.constant 0 : index
      %71 = vector.load %arg16[%c0_51, %c0_52, %c0_53] : memref<1x3x256xf32, #tpu.memory_space<vmem>>, vector<1x3x256xf32>
      %72 = vector.shape_cast %71 : vector<1x3x256xf32> to vector<3x256xf32>
      %73 = vector.shape_cast %50 : vector<3x256xf32> to vector<1x3x256xf32>
      tpu.vector_store %arg16[%c0_51, %c0_52, %c0_53], %73 {strides = array<i32>} : memref<1x3x256xf32, #tpu.memory_space<vmem>>, vector<1x3x256xf32>,
    } else {
    }
    return
  }
  func.func @transform_0(%arg0: i32, %arg1: i32, %arg2: i32) -> (i32, i32, i32) {
    %c0_i32 = arith.constant 0 : i32
    %c0_i32_0 = arith.constant 0 : i32
    return %arg0, %arg1, %c0_i32 : i32, i32, i32
  }
  func.func @transform_1(%arg0: i32, %arg1: i32, %arg2: i32) -> (i32, i32, i32) {
    %c0_i32 = arith.constant 0 : i32
    %c0_i32_0 = arith.constant 0 : i32
    return %arg0, %arg2, %c0_i32 : i32, i32, i32
  }
  func.func @transform_2(%arg0: i32, %arg1: i32, %arg2: i32) -> (i32, i32, i32) {
    %c0_i32 = arith.constant 0 : i32
    %c0_i32_0 = arith.constant 0 : i32
    return %arg0, %c0_i32, %arg2 : i32, i32, i32
  }
  func.func @transform_3(%arg0: i32, %arg1: i32, %arg2: i32) -> (i32, i32) {
    %c0_i32 = arith.constant 0 : i32
    %c0_i32_0 = arith.constant 0 : i32
    %c0_i32_1 = arith.constant 0 : i32
    return %c0_i32, %c0_i32_0 : i32, i32
  }
  func.func @transform_4(%arg0: i32, %arg1: i32, %arg2: i32) -> (i32, i32) {
    %c0_i32 = arith.constant 0 : i32
    %c0_i32_0 = arith.constant 0 : i32
    %c0_i32_1 = arith.constant 0 : i32
    return %c0_i32, %c0_i32_0 : i32, i32
  }
  func.func @transform_5(%arg0: i32, %arg1: i32, %arg2: i32) -> (i32, i32) {
    %c0_i32 = arith.constant 0 : i32
    %c0_i32_0 = arith.constant 0 : i32
    %c0_i32_1 = arith.constant 0 : i32
    return %c0_i32, %c0_i32_0 : i32, i32
  }
  func.func @transform_6(%arg0: i32, %arg1: i32, %arg2: i32) -> (i32, i32) {
    %c0_i32 = arith.constant 0 : i32
    %c0_i32_0 = arith.constant 0 : i32
    %c0_i32_1 = arith.constant 0 : i32
    return %c0_i32, %c0_i32_0 : i32, i32
  }
  func.func @transform_7(%arg0: i32, %arg1: i32, %arg2: i32) -> (i32, i32) {
    %c0_i32 = arith.constant 0 : i32
    %c0_i32_0 = arith.constant 0 : i32
    %c0_i32_1 = arith.constant 0 : i32
    return %c0_i32, %c0_i32_0 : i32, i32
  }
  func.func @transform_8(%arg0: i32, %arg1: i32, %arg2: i32) -> (i32, i32) {
    %c0_i32 = arith.constant 0 : i32
    %c0_i32_0 = arith.constant 0 : i32
    %c0_i32_1 = arith.constant 0 : i32
    return %c0_i32, %c0_i32_0 : i32, i32
  }
  func.func @transform_9(%arg0: i32, %arg1: i32, %arg2: i32) -> (i32, i32) {
    %c0_i32 = arith.constant 0 : i32
    %c0_i32_0 = arith.constant 0 : i32
    %c0_i32_1 = arith.constant 0 : i32
    return %c0_i32, %c0_i32_0 : i32, i32
  }
  func.func @transform_10(%arg0: i32, %arg1: i32, %arg2: i32) -> (i32, i32) {
    %c0_i32 = arith.constant 0 : i32
    %c0_i32_0 = arith.constant 0 : i32
    %c0_i32_1 = arith.constant 0 : i32
    return %c0_i32, %c0_i32_0 : i32, i32
  }
  func.func @transform_11(%arg0: i32, %arg1: i32, %arg2: i32) -> (i32, i32) {
    %c0_i32 = arith.constant 0 : i32
    %c0_i32_0 = arith.constant 0 : i32
    %c0_i32_1 = arith.constant 0 : i32
    return %c0_i32, %c0_i32_0 : i32, i32
  }
  func.func @transform_12(%arg0: i32, %arg1: i32, %arg2: i32) -> (i32, i32, i32) {
    %c0_i32 = arith.constant 0 : i32
    %c0_i32_0 = arith.constant 0 : i32
    return %arg0, %c0_i32, %arg1 : i32, i32, i32
  }
  func.func @transform_13(%arg0: i32, %arg1: i32, %arg2: i32) -> (i32, i32, i32) {
    %c0_i32 = arith.constant 0 : i32
    %c0_i32_0 = arith.constant 0 : i32
    return %arg0, %c0_i32, %arg1 : i32, i32, i32
  }
}

</mosaic_0001>

<llo_original>
// kernel: tpu_custom_call.1
$region0: #{tpu_custom_call.1}
  #allocation0 [shape = 'u32[]', space=smem, size = 0x4, offset = 0x4, fixed_abs, tag = 'smem constant byte address 0x4 - core index']
  #allocation1 [shape = 'u32[144,128]{1,0:T(1,128)}', space=vmem, size = 0x12000, scoped, tag = 'internal scratch']
  #allocation2 [shape = 'bf16[256,128]{1,0:T(16,128)(2,1)}', space=vmem, size = 0x10000, scoped, tag = 'scratch operand']
  #allocation3 [shape = 'f32[1,256]{1,0:T(1,128)}', space=vmem, size = 0x400, scoped, tag = 'scratch operand']
  #allocation4 [shape = 'f32[4,256]{1,0:T(4,128)}', space=vmem, size = 0x1000, scoped, tag = 'scratch operand']
  %s0 = inlined_call_operand.vmem [shape: f32[2,256,3], index: 0, kind: input, shape index: {}]
  %s1 = inlined_call_operand.vmem [shape: f32[2,256,3], index: 1, kind: input, shape index: {}]
  %s2 = inlined_call_operand.vmem [shape: bf16[2,4,256], index: 2, kind: input, shape index: {}]
  %s3 = inlined_call_operand.vmem [shape: f32[3,64], index: 3, kind: input, shape index: {}]
  %s4 = inlined_call_operand.vmem [shape: f32[1,64], index: 4, kind: input, shape index: {}]
  %s5 = inlined_call_operand.vmem [shape: bf16[64,128], index: 5, kind: input, shape index: {}]
  %s6 = inlined_call_operand.vmem [shape: f32[1,128], index: 6, kind: input, shape index: {}]
  %s7 = inlined_call_operand.vmem [shape: bf16[64,128], index: 7, kind: input, shape index: {}]
  %s8 = inlined_call_operand.vmem [shape: bf16[64,3], index: 8, kind: input, shape index: {}]
  %s9 = inlined_call_operand.vmem [shape: f32[64,1], index: 9, kind: input, shape index: {}]
  %s10 = inlined_call_operand.vmem [shape: bf16[3,64], index: 10, kind: input, shape index: {}]
  %s11 = inlined_call_operand.vmem [shape: f32[3,1], index: 11, kind: input, shape index: {}]
  %s12 = inlined_call_operand.vmem [shape: f32[2,3,256], index: 12, kind: output, shape index: {0}]
  %s13 = inlined_call_operand.vmem [shape: f32[2,3,256], index: 13, kind: output, shape index: {1}]
  %14 = xla_tuple %s12, %s13
  %s15 = sld [smem:[#allocation0]]
  $region97: #{tpu_custom_call.1} parent=0
    _
  %s17 = ssub.s32 1, %s15
  %s18 = scalar_select 0, %s17, %s15
  loop: start=0, step=1, limit=4
  $region2: #{tpu_custom_call.1} parent=0 // loop_pre_header
    _
  $region3: #{tpu_custom_call.1} parent=0 // loop_header
    %s20 = sphi 0, %s24
    %p21 = scmp.ge.s32.totalorder %s20, 4
    %s27 = sphi 0, %s46
    %s28 = sphi 0, %s42
    %s29 = sphi 0, %s38
    %s30 = sphi 0, %s27
    %s31 = sphi 0, %s28
    %s32 = sphi 0, %s29
    %s33 = sphi 0, %s30
    %s34 = sphi 0, %s31
    %s35 = sphi 0, %s32
    %s51 = sphi 0, %s53
    %s54 = sphi 0, %s51
    %s55 = sphi 0, %s54
    %s71 = sphi 0, %s55
    %s79 = sphi 0, %s81
    %s82 = sphi 0, %s79
    %s83 = sphi 0, %s82
    %s99 = sphi 0, %s83
    %s107 = sphi 0, %s109
    %s110 = sphi 0, %s107
    %s111 = sphi 0, %s110
    %s127 = sphi 0, %s111
    %s131 = sphi 0, %s131
    %s133 = sphi 0, %s131
    %s134 = sphi 0, %s133
    %s148 = sphi 0, %s134
    %s152 = sphi 0, %s152
    %s154 = sphi 0, %s152
    %s155 = sphi 0, %s154
    %s169 = sphi 0, %s155
    %s173 = sphi 0, %s173
    %s175 = sphi 0, %s173
    %s176 = sphi 0, %s175
    %s190 = sphi 0, %s176
    %s194 = sphi 0, %s194
    %s196 = sphi 0, %s194
    %s197 = sphi 0, %s196
    %s211 = sphi 0, %s197
    %s215 = sphi 0, %s215
    %s217 = sphi 0, %s215
    %s218 = sphi 0, %s217
    %s232 = sphi 0, %s218
    %s236 = sphi 0, %s236
    %s238 = sphi 0, %s236
    %s239 = sphi 0, %s238
    %s253 = sphi 0, %s239
    %s257 = sphi 0, %s257
    %s259 = sphi 0, %s257
    %s260 = sphi 0, %s259
    %s274 = sphi 0, %s260
    %s278 = sphi 0, %s278
    %s280 = sphi 0, %s278
    %s281 = sphi 0, %s280
    %s295 = sphi 0, %s281
    %s299 = sphi 0, %s299
    %s301 = sphi 0, %s299
    %s302 = sphi 0, %s301
    %s316 = sphi 0, %s302
    %s324 = sphi 0, %s326
    %s327 = sphi 0, %s324
    %s328 = sphi 0, %s327
    %s344 = sphi 0, %s328
    %s352 = sphi 0, %s354
    %s355 = sphi 0, %s352
    %s356 = sphi 0, %s355
    %s372 = sphi 0, %s356
  $region4: #{tpu_custom_call.1} parent=0 // loop_header_branch
    %23 = sbr.rel (%p21) target = $region8
  $region5: #{tpu_custom_call.1} parent=0 // loop_body
    %s25 = ssub.s32 %s20, 1
    %s26 = ssub.s32 %s20, 2
    %s36 = sadd.s32 1, %s29
    %p37 = scmp.ge.s32.totalorder %s36, 1
    %s38 = scalar_select %p37, 0, %s36
    %s39 = sadd.s32 1, %s28
    %s40 = scalar_select %p37, %s39, %s28
    %p41 = scmp.ge.s32.totalorder %s40, 1
    %s42 = scalar_select %p41, 0, %s40
    %s43 = sadd.s32 1, %s27
    %s44 = scalar_select %p41, %s43, %s27
    %p45 = scmp.ge.s32.totalorder %s44, 2
    %s46 = scalar_select %p45, 0, %s44
    %s47 = ssub.s32 %s27, %s46
    %s48 = ssub.s32 %s28, %s42
    %s49 = sor.u32 %s47, %s48
    %p50 = scmp.eq.s32.totalorder %s49, 0
    %s52 = sadd.s32 %s51, 1
    %s53 = scalar_select %p50, %s51, %s52
    %p56 = pneg %p50
    %p57 = scmp.eq.s32.totalorder %s20, 1
    %p58 = por %p56, %p57
    %p59 = scmp.ne.s32.totalorder %s51, %s54
    %p60 = scmp.eq.s32.totalorder %s20, 0
    %p61 = por %p59, %p60
    %p62 = scmp.ne.s32.totalorder %s51, %s54
    %p63 = scmp.eq.s32.totalorder %s25, 1
    %p64 = por %p62, %p63
    %p65 = scmp.ne.s32.totalorder %s54, %s55
    %p66 = scmp.eq.s32.totalorder %s25, 0
    %p67 = por %p65, %p66
    %p68 = scmp.ne.s32.totalorder %s54, %s55
    %p69 = scmp.eq.s32.totalorder %s26, 1
    %p70 = por %p68, %p69
    %p72 = scmp.ne.s32.totalorder %s55, %s71
    %p73 = scmp.eq.s32.totalorder %s26, 0
    %p74 = por %p72, %p73
    %s75 = ssub.s32 %s27, %s46
    %s76 = ssub.s32 %s29, %s38
    %s77 = sor.u32 %s75, %s76
    %p78 = scmp.eq.s32.totalorder %s77, 0
    %s80 = sadd.s32 %s79, 1
    %s81 = scalar_select %p78, %s79, %s80
    %p84 = pneg %p78
    %p85 = scmp.eq.s32.totalorder %s20, 1
    %p86 = por %p84, %p85
    %p87 = scmp.ne.s32.totalorder %s79, %s82
    %p88 = scmp.eq.s32.totalorder %s20, 0
    %p89 = por %p87, %p88
    %p90 = scmp.ne.s32.totalorder %s79, %s82
    %p91 = scmp.eq.s32.totalorder %s25, 1
    %p92 = por %p90, %p91
    %p93 = scmp.ne.s32.totalorder %s82, %s83
    %p94 = scmp.eq.s32.totalorder %s25, 0
    %p95 = por %p93, %p94
    %p96 = scmp.ne.s32.totalorder %s82, %s83
    %p97 = scmp.eq.s32.totalorder %s26, 1
    %p98 = por %p96, %p97
    %p100 = scmp.ne.s32.totalorder %s83, %s99
    %p101 = scmp.eq.s32.totalorder %s26, 0
    %p102 = por %p100, %p101
    %s103 = ssub.s32 %s27, %s46
    %s104 = ssub.s32 %s29, %s38
    %s105 = sor.u32 %s103, %s104
    %p106 = scmp.eq.s32.totalorder %s105, 0
    %s108 = sadd.s32 %s107, 1
    %s109 = scalar_select %p106, %s107, %s108
    %p112 = pneg %p106
    %p113 = scmp.eq.s32.totalorder %s20, 1
    %p114 = por %p112, %p113
    %p115 = scmp.ne.s32.totalorder %s107, %s110
    %p116 = scmp.eq.s32.totalorder %s20, 0
    %p117 = por %p115, %p116
    %p118 = scmp.ne.s32.totalorder %s107, %s110
    %p119 = scmp.eq.s32.totalorder %s25, 1
    %p120 = por %p118, %p119
    %p121 = scmp.ne.s32.totalorder %s110, %s111
    %p122 = scmp.eq.s32.totalorder %s25, 0
    %p123 = por %p121, %p122
    %p124 = scmp.ne.s32.totalorder %s110, %s111
    %p125 = scmp.eq.s32.totalorder %s26, 1
    %p126 = por %p124, %p125
    %p128 = scmp.ne.s32.totalorder %s111, %s127
    %p129 = scmp.eq.s32.totalorder %s26, 0
    %p130 = por %p128, %p129
    %s132 = sadd.s32 %s131, 1
    %p135 = scmp.eq.s32.totalorder %s20, 1
    %p136 = scmp.ne.s32.totalorder %s131, %s133
    %p137 = scmp.eq.s32.totalorder %s20, 0
    %p138 = por %p136, %p137
    %p139 = scmp.ne.s32.totalorder %s131, %s133
    %p140 = scmp.eq.s32.totalorder %s25, 1
    %p141 = por %p139, %p140
    %p142 = scmp.ne.s32.totalorder %s133, %s134
    %p143 = scmp.eq.s32.totalorder %s25, 0
    %p144 = por %p142, %p143
    %p145 = scmp.ne.s32.totalorder %s133, %s134
    %p146 = scmp.eq.s32.totalorder %s26, 1
    %p147 = por %p145, %p146
    %p149 = scmp.ne.s32.totalorder %s134, %s148
    %p150 = scmp.eq.s32.totalorder %s26, 0
    %p151 = por %p149, %p150
    %s153 = sadd.s32 %s152, 1
    %p156 = scmp.eq.s32.totalorder %s20, 1
    %p157 = scmp.ne.s32.totalorder %s152, %s154
    %p158 = scmp.eq.s32.totalorder %s20, 0
    %p159 = por %p157, %p158
    %p160 = scmp.ne.s32.totalorder %s152, %s154
    %p161 = scmp.eq.s32.totalorder %s25, 1
    %p162 = por %p160, %p161
    %p163 = scmp.ne.s32.totalorder %s154, %s155
    %p164 = scmp.eq.s32.totalorder %s25, 0
    %p165 = por %p163, %p164
    %p166 = scmp.ne.s32.totalorder %s154, %s155
    %p167 = scmp.eq.s32.totalorder %s26, 1
    %p168 = por %p166, %p167
    %p170 = scmp.ne.s32.totalorder %s155, %s169
    %p171 = scmp.eq.s32.totalorder %s26, 0
    %p172 = por %p170, %p171
    %s174 = sadd.s32 %s173, 1
    %p177 = scmp.eq.s32.totalorder %s20, 1
    %p178 = scmp.ne.s32.totalorder %s173, %s175
    %p179 = scmp.eq.s32.totalorder %s20, 0
    %p180 = por %p178, %p179
    %p181 = scmp.ne.s32.totalorder %s173, %s175
    %p182 = scmp.eq.s32.totalorder %s25, 1
    %p183 = por %p181, %p182
    %p184 = scmp.ne.s32.totalorder %s175, %s176
    %p185 = scmp.eq.s32.totalorder %s25, 0
    %p186 = por %p184, %p185
    %p187 = scmp.ne.s32.totalorder %s175, %s176
    %p188 = scmp.eq.s32.totalorder %s26, 1
    %p189 = por %p187, %p188
    %p191 = scmp.ne.s32.totalorder %s176, %s190
    %p192 = scmp.eq.s32.totalorder %s26, 0
    %p193 = por %p191, %p192
    %s195 = sadd.s32 %s194, 1
    %p198 = scmp.eq.s32.totalorder %s20, 1
    %p199 = scmp.ne.s32.totalorder %s194, %s196
    %p200 = scmp.eq.s32.totalorder %s20, 0
    %p201 = por %p199, %p200
    %p202 = scmp.ne.s32.totalorder %s194, %s196
    %p203 = scmp.eq.s32.totalorder %s25, 1
    %p204 = por %p202, %p203
    %p205 = scmp.ne.s32.totalorder %s196, %s197
    %p206 = scmp.eq.s32.totalorder %s25, 0
    %p207 = por %p205, %p206
    %p208 = scmp.ne.s32.totalorder %s196, %s197
    %p209 = scmp.eq.s32.totalorder %s26, 1
    %p210 = por %p208, %p209
    %p212 = scmp.ne.s32.totalorder %s197, %s211
    %p213 = scmp.eq.s32.totalorder %s26, 0
    %p214 = por %p212, %p213
    %s216 = sadd.s32 %s215, 1
    %p219 = scmp.eq.s32.totalorder %s20, 1
    %p220 = scmp.ne.s32.totalorder %s215, %s217
    %p221 = scmp.eq.s32.totalorder %s20, 0
    %p222 = por %p220, %p221
    %p223 = scmp.ne.s32.totalorder %s215, %s217
    %p224 = scmp.eq.s32.totalorder %s25, 1
    %p225 = por %p223, %p224
    %p226 = scmp.ne.s32.totalorder %s217, %s218
    %p227 = scmp.eq.s32.totalorder %s25, 0
    %p228 = por %p226, %p227
    %p229 = scmp.ne.s32.totalorder %s217, %s218
    %p230 = scmp.eq.s32.totalorder %s26, 1
    %p231 = por %p229, %p230
    %p233 = scmp.ne.s32.totalorder %s218, %s232
    %p234 = scmp.eq.s32.totalorder %s26, 0
    %p235 = por %p233, %p234
    %s237 = sadd.s32 %s236, 1
    %p240 = scmp.eq.s32.totalorder %s20, 1
    %p241 = scmp.ne.s32.totalorder %s236, %s238
    %p242 = scmp.eq.s32.totalorder %s20, 0
    %p243 = por %p241, %p242
    %p244 = scmp.ne.s32.totalorder %s236, %s238
    %p245 = scmp.eq.s32.totalorder %s25, 1
    %p246 = por %p244, %p245
    %p247 = scmp.ne.s32.totalorder %s238, %s239
    %p248 = scmp.eq.s32.totalorder %s25, 0
    %p249 = por %p247, %p248
    %p250 = scmp.ne.s32.totalorder %s238, %s239
    %p251 = scmp.eq.s32.totalorder %s26, 1
    %p252 = por %p250, %p251
    %p254 = scmp.ne.s32.totalorder %s239, %s253
    %p255 = scmp.eq.s32.totalorder %s26, 0
    %p256 = por %p254, %p255
    %s258 = sadd.s32 %s257, 1
    %p261 = scmp.eq.s32.totalorder %s20, 1
    %p262 = scmp.ne.s32.totalorder %s257, %s259
    %p263 = scmp.eq.s32.totalorder %s20, 0
    %p264 = por %p262, %p263
    %p265 = scmp.ne.s32.totalorder %s257, %s259
    %p266 = scmp.eq.s32.totalorder %s25, 1
    %p267 = por %p265, %p266
    %p268 = scmp.ne.s32.totalorder %s259, %s260
    %p269 = scmp.eq.s32.totalorder %s25, 0
    %p270 = por %p268, %p269
    %p271 = scmp.ne.s32.totalorder %s259, %s260
    %p272 = scmp.eq.s32.totalorder %s26, 1
    %p273 = por %p271, %p272
    %p275 = scmp.ne.s32.totalorder %s260, %s274
    %p276 = scmp.eq.s32.totalorder %s26, 0
    %p277 = por %p275, %p276
    %s279 = sadd.s32 %s278, 1
    %p282 = scmp.eq.s32.totalorder %s20, 1
    %p283 = scmp.ne.s32.totalorder %s278, %s280
    %p284 = scmp.eq.s32.totalorder %s20, 0
    %p285 = por %p283, %p284
    %p286 = scmp.ne.s32.totalorder %s278, %s280
    %p287 = scmp.eq.s32.totalorder %s25, 1
    %p288 = por %p286, %p287
    %p289 = scmp.ne.s32.totalorder %s280, %s281
    %p290 = scmp.eq.s32.totalorder %s25, 0
    %p291 = por %p289, %p290
    %p292 = scmp.ne.s32.totalorder %s280, %s281
    %p293 = scmp.eq.s32.totalorder %s26, 1
    %p294 = por %p292, %p293
    %p296 = scmp.ne.s32.totalorder %s281, %s295
    %p297 = scmp.eq.s32.totalorder %s26, 0
    %p298 = por %p296, %p297
    %s300 = sadd.s32 %s299, 1
    %p303 = scmp.eq.s32.totalorder %s20, 1
    %p304 = scmp.ne.s32.totalorder %s299, %s301
    %p305 = scmp.eq.s32.totalorder %s20, 0
    %p306 = por %p304, %p305
    %p307 = scmp.ne.s32.totalorder %s299, %s301
    %p308 = scmp.eq.s32.totalorder %s25, 1
    %p309 = por %p307, %p308
    %p310 = scmp.ne.s32.totalorder %s301, %s302
    %p311 = scmp.eq.s32.totalorder %s25, 0
    %p312 = por %p310, %p311
    %p313 = scmp.ne.s32.totalorder %s301, %s302
    %p314 = scmp.eq.s32.totalorder %s26, 1
    %p315 = por %p313, %p314
    %p317 = scmp.ne.s32.totalorder %s302, %s316
    %p318 = scmp.eq.s32.totalorder %s26, 0
    %p319 = por %p317, %p318
    %s320 = ssub.s32 %s27, %s46
    %s321 = ssub.s32 %s28, %s42
    %s322 = sor.u32 %s320, %s321
    %p323 = scmp.eq.s32.totalorder %s322, 0
    %s325 = sadd.s32 %s324, 1
    %s326 = scalar_select %p323, %s324, %s325
    %p329 = pneg %p323
    %p330 = scmp.eq.s32.totalorder %s20, 1
    %p331 = por %p329, %p330
    %p332 = scmp.ne.s32.totalorder %s324, %s327
    %p333 = scmp.eq.s32.totalorder %s20, 0
    %p334 = por %p332, %p333
    %p335 = scmp.ne.s32.totalorder %s324, %s327
    %p336 = scmp.eq.s32.totalorder %s25, 1
    %p337 = por %p335, %p336
    %p338 = scmp.ne.s32.totalorder %s327, %s328
    %p339 = scmp.eq.s32.totalorder %s25, 0
    %p340 = por %p338, %p339
    %p341 = scmp.ne.s32.totalorder %s327, %s328
    %p342 = scmp.eq.s32.totalorder %s26, 1
    %p343 = por %p341, %p342
    %p345 = scmp.ne.s32.totalorder %s328, %s344
    %p346 = scmp.eq.s32.totalorder %s26, 0
    %p347 = por %p345, %p346
    %s348 = ssub.s32 %s27, %s46
    %s349 = ssub.s32 %s28, %s42
    %s350 = sor.u32 %s348, %s349
    %p351 = scmp.eq.s32.totalorder %s350, 0
    %s353 = sadd.s32 %s352, 1
    %s354 = scalar_select %p351, %s352, %s353
    %p357 = pneg %p351
    %p358 = scmp.eq.s32.totalorder %s20, 1
    %p359 = por %p357, %p358
    %p360 = scmp.ne.s32.totalorder %s352, %s355
    %p361 = scmp.eq.s32.totalorder %s20, 0
    %p362 = por %p360, %p361
    %p363 = scmp.ne.s32.totalorder %s352, %s355
    %p364 = scmp.eq.s32.totalorder %s25, 1
    %p365 = por %p363, %p364
    %p366 = scmp.ne.s32.totalorder %s355, %s356
    %p367 = scmp.eq.s32.totalorder %s25, 0
    %p368 = por %p366, %p367
    %p369 = scmp.ne.s32.totalorder %s355, %s356
    %p370 = scmp.eq.s32.totalorder %s26, 1
    %p371 = por %p369, %p370
    %p373 = scmp.ne.s32.totalorder %s356, %s372
    %p374 = scmp.eq.s32.totalorder %s26, 0
    %p375 = por %p373, %p374
    %p376 = scmp.le.s32.totalorder 1, %s20
    %p377 = scmp.lt.s32.totalorder %s20, 3
    %p378 = pnand %p376, %p377
    %p379 = pneg %p378
    // Predicated region
    $region9: #{tpu_custom_call.1} parent=5 // pred_check
      _
    $region10: #{tpu_custom_call.1} parent=5 // pred_check_branch
      %381 = sbr.rel (%p378) target = $region12
    $region11: #{tpu_custom_call.1} parent=5 // pred_region
      %s382 = ssub.s32 %s20, 1
      // Predicated region
      $region13: #{tpu_custom_call.1} parent=11 // pred_check
        %p383 = pneg %p144
      $region14: #{tpu_custom_call.1} parent=11 // pred_check_branch
        %385 = sbr.rel (%p383) target = $region16
      $region15: #{tpu_custom_call.1} parent=11 // pred_region
        _
      $region16: #{tpu_custom_call.1} parent=11 // pred_fallthru
        _
      // Predicated region
      $region17: #{tpu_custom_call.1} parent=11 // pred_check
        %p386 = pneg %p165
      $region18: #{tpu_custom_call.1} parent=11 // pred_check_branch
        %388 = sbr.rel (%p386) target = $region20
      $region19: #{tpu_custom_call.1} parent=11 // pred_region
        _
      $region20: #{tpu_custom_call.1} parent=11 // pred_fallthru
        _
      // Predicated region
      $region21: #{tpu_custom_call.1} parent=11 // pred_check
        %p389 = pneg %p186
      $region22: #{tpu_custom_call.1} parent=11 // pred_check_branch
        %391 = sbr.rel (%p389) target = $region24
      $region23: #{tpu_custom_call.1} parent=11 // pred_region
        _
      $region24: #{tpu_custom_call.1} parent=11 // pred_fallthru
        _
      // Predicated region
      $region25: #{tpu_custom_call.1} parent=11 // pred_check
        %p392 = pneg %p207
      $region26: #{tpu_custom_call.1} parent=11 // pred_check_branch
        %394 = sbr.rel (%p392) target = $region28
      $region27: #{tpu_custom_call.1} parent=11 // pred_region
        _
      $region28: #{tpu_custom_call.1} parent=11 // pred_fallthru
        _
      // Predicated region
      $region29: #{tpu_custom_call.1} parent=11 // pred_check
        %p395 = pneg %p228
      $region30: #{tpu_custom_call.1} parent=11 // pred_check_branch
        %397 = sbr.rel (%p395) target = $region32
      $region31: #{tpu_custom_call.1} parent=11 // pred_region
        _
      $region32: #{tpu_custom_call.1} parent=11 // pred_fallthru
        _
      // Predicated region
      $region33: #{tpu_custom_call.1} parent=11 // pred_check
        %p398 = pneg %p249
      $region34: #{tpu_custom_call.1} parent=11 // pred_check_branch
        %400 = sbr.rel (%p398) target = $region36
      $region35: #{tpu_custom_call.1} parent=11 // pred_region
        _
      $region36: #{tpu_custom_call.1} parent=11 // pred_fallthru
        _
      // Predicated region
      $region37: #{tpu_custom_call.1} parent=11 // pred_check
        %p401 = pneg %p270
      $region38: #{tpu_custom_call.1} parent=11 // pred_check_branch
        %403 = sbr.rel (%p401) target = $region40
      $region39: #{tpu_custom_call.1} parent=11 // pred_region
        _
      $region40: #{tpu_custom_call.1} parent=11 // pred_fallthru
        _
      // Predicated region
      $region41: #{tpu_custom_call.1} parent=11 // pred_check
        %p404 = pneg %p291
      $region42: #{tpu_custom_call.1} parent=11 // pred_check_branch
        %406 = sbr.rel (%p404) target = $region44
      $region43: #{tpu_custom_call.1} parent=11 // pred_region
        _
      $region44: #{tpu_custom_call.1} parent=11 // pred_fallthru
        _
      // Predicated region
      $region45: #{tpu_custom_call.1} parent=11 // pred_check
        %p407 = pneg %p312
      $region46: #{tpu_custom_call.1} parent=11 // pred_check_branch
        %409 = sbr.rel (%p407) target = $region48
      $region47: #{tpu_custom_call.1} parent=11 // pred_region
        _
      $region48: #{tpu_custom_call.1} parent=11 // pred_fallthru
        _
    $region12: #{tpu_custom_call.1} parent=5 // pred_fallthru
      _
    %p410 = scmp.lt.s32.totalorder %s20, 2
    // Predicated region
    $region49: #{tpu_custom_call.1} parent=5 // pred_check
      %p411 = pneg %p410
    $region50: #{tpu_custom_call.1} parent=5 // pred_check_branch
      %413 = sbr.rel (%p411) target = $region52
    $region51: #{tpu_custom_call.1} parent=5 // pred_region
      // Predicated region
      $region53: #{tpu_custom_call.1} parent=51 // pred_check
        %p414 = pneg %p61
      $region54: #{tpu_custom_call.1} parent=51 // pred_check_branch
        %416 = sbr.rel (%p414) target = $region56
      $region55: #{tpu_custom_call.1} parent=51 // pred_region
        %s417 = smul.u32 32, %s28
        %p418 = scmp.lt.s32.totalorder %s27, 1
        %s419 = scalar_select %p418, %s27, 1
        %p420 = scmp.lt.s32.totalorder %s417, 31
        %s421 = scalar_select %p420, %s417, 31
        %s422 = smul.addr %s419, 32
        %s423 = sadd.s32 %s421, %s422
        %s424 = smul.addr %s423, 8
        %s425 = scalar_lea.vmem %s0, %s424
        %s426 = smul.u32 32, %s28
      $region56: #{tpu_custom_call.1} parent=51 // pred_fallthru
        _
      // Predicated region
      $region57: #{tpu_custom_call.1} parent=51 // pred_check
        %p427 = pneg %p89
      $region58: #{tpu_custom_call.1} parent=51 // pred_check_branch
        %429 = sbr.rel (%p427) target = $region60
      $region59: #{tpu_custom_call.1} parent=51 // pred_region
        %s430 = smul.u32 32, %s29
        %p431 = scmp.lt.s32.totalorder %s27, 1
        %s432 = scalar_select %p431, %s27, 1
        %p433 = scmp.lt.s32.totalorder %s430, 31
        %s434 = scalar_select %p433, %s430, 31
        %s435 = smul.addr %s432, 32
        %s436 = sadd.s32 %s434, %s435
        %s437 = smul.addr %s436, 8
        %s438 = scalar_lea.vmem %s1, %s437
        %s439 = smul.u32 32, %s29
      $region60: #{tpu_custom_call.1} parent=51 // pred_fallthru
        _
      // Predicated region
      $region61: #{tpu_custom_call.1} parent=51 // pred_check
        %p440 = pneg %p117
      $region62: #{tpu_custom_call.1} parent=51 // pred_check_branch
        %442 = sbr.rel (%p440) target = $region64
      $region63: #{tpu_custom_call.1} parent=51 // pred_region
        %s443 = smul.u32 2, %s29
        %p444 = scmp.lt.s32.totalorder %s27, 1
        %s445 = scalar_select %p444, %s27, 1
        %p446 = scmp.lt.s32.totalorder %s443, 1
        %s447 = scalar_select %p446, %s443, 1
        %s448 = smul.addr %s445, 2
        %s449 = sadd.s32 %s447, %s448
        %s450 = smul.addr %s449, 2
        %s451 = scalar_lea.vmem %s2, %s450
        %s452 = smul.u32 2, %s29
      $region64: #{tpu_custom_call.1} parent=51 // pred_fallthru
        _
    $region52: #{tpu_custom_call.1} parent=5 // pred_fallthru
      _
    %p453 = scmp.le.s32.totalorder 1, %s20
    %p454 = scmp.lt.s32.totalorder %s20, 3
    %p455 = pnand %p453, %p454
    %p456 = pneg %p455
    // Predicated region
    $region65: #{tpu_custom_call.1} parent=5 // pred_check
      _
    $region66: #{tpu_custom_call.1} parent=5 // pred_check_branch
      %458 = sbr.rel (%p455) target = $region68
    $region67: #{tpu_custom_call.1} parent=5 // pred_region
      %s459 = ssub.s32 %s20, 1
      %s460 = smul.u32 32, %s31
      %p461 = scmp.lt.s32.totalorder %s30, 1
      %s462 = scalar_select %p461, %s30, 1
      %p463 = scmp.lt.s32.totalorder %s460, 31
      %s464 = scalar_select %p463, %s460, 31
      %s465 = smul.addr %s462, 32
      %s466 = sadd.s32 %s464, %s465
      %s467 = smul.addr %s466, 8
      %s468 = scalar_lea.vmem %s0, %s467
      %p469 = pneg %p67
      %p470 = pneg %p64
      %s471 = smul.u32 32, %s32
      %p472 = scmp.lt.s32.totalorder %s30, 1
      %s473 = scalar_select %p472, %s30, 1
      %p474 = scmp.lt.s32.totalorder %s471, 31
      %s475 = scalar_select %p474, %s471, 31
      %s476 = smul.addr %s473, 32
      %s477 = sadd.s32 %s475, %s476
      %s478 = smul.addr %s477, 8
      %s479 = scalar_lea.vmem %s1, %s478
      %p480 = pneg %p95
      %p481 = pneg %p92
      %s482 = smul.u32 2, %s32
      %p483 = scmp.lt.s32.totalorder %s30, 1
      %s484 = scalar_select %p483, %s30, 1
      %p485 = scmp.lt.s32.totalorder %s482, 1
      %s486 = scalar_select %p485, %s482, 1
      %s487 = smul.addr %s484, 2
      %s488 = sadd.s32 %s486, %s487
      %s489 = smul.addr %s488, 2
      %s490 = scalar_lea.vmem %s2, %s489
      %p491 = pneg %p123
      %p492 = pneg %p120
      %p493 = pneg %p144
      %p494 = pneg %p141
      %p495 = pneg %p165
      %p496 = pneg %p162
      %p497 = pneg %p186
      %p498 = pneg %p183
      %p499 = pneg %p207
      %p500 = pneg %p204
      %p501 = pneg %p228
      %p502 = pneg %p225
      %p503 = pneg %p249
      %p504 = pneg %p246
      %p505 = pneg %p270
      %p506 = pneg %p267
      %p507 = pneg %p291
      %p508 = pneg %p288
      %p509 = pneg %p312
      %p510 = pneg %p309
      %p511 = pneg %p340
      %p512 = pneg %p337
      %s513 = smul.u32 2, %s31
      %p514 = scmp.lt.s32.totalorder %s30, 1
      %s515 = scalar_select %p514, %s30, 1
      %p516 = scmp.lt.s32.totalorder %s513, 1
      %s517 = scalar_select %p516, %s513, 1
      %s518 = smul.addr %s515, 2
      %s519 = sadd.s32 %s517, %s518
      %s520 = smul.addr %s519, 4
      %s521 = scalar_lea.vmem %s12, %s520
      %p522 = pneg %p368
      %p523 = pneg %p365
      %s524 = smul.u32 2, %s31
      %p525 = scmp.lt.s32.totalorder %s30, 1
      %s526 = scalar_select %p525, %s30, 1
      %p527 = scmp.lt.s32.totalorder %s524, 1
      %s528 = scalar_select %p527, %s524, 1
      %s529 = smul.addr %s526, 2
      %s530 = sadd.s32 %s528, %s529
      %s531 = smul.addr %s530, 4
      %s532 = scalar_lea.vmem %s13, %s531
      %s533 = smul.u32 32, %s31
      %p534 = scmp.lt.s32.totalorder %s30, 1
      %s535 = scalar_select %p534, %s30, 1
      %p536 = scmp.lt.s32.totalorder %s533, 31
      %s537 = scalar_select %p536, %s533, 31
      %s538 = smul.addr %s535, 32
      %s539 = sadd.s32 %s537, %s538
      %s540 = smul.addr %s539, 8
      %s541 = scalar_lea.vmem %s0, %s540
      %s542 = smul.u32 32, %s31
      %s543 = smul.u32 32, %s32
      %p544 = scmp.lt.s32.totalorder %s30, 1
      %s545 = scalar_select %p544, %s30, 1
      %p546 = scmp.lt.s32.totalorder %s543, 31
      %s547 = scalar_select %p546, %s543, 31
      %s548 = smul.addr %s545, 32
      %s549 = sadd.s32 %s547, %s548
      %s550 = smul.addr %s549, 8
      %s551 = scalar_lea.vmem %s1, %s550
      %s552 = smul.u32 32, %s32
      %s553 = smul.u32 2, %s32
      %p554 = scmp.lt.s32.totalorder %s30, 1
      %s555 = scalar_select %p554, %s30, 1
      %p556 = scmp.lt.s32.totalorder %s553, 1
      %s557 = scalar_select %p556, %s553, 1
      %s558 = smul.addr %s555, 2
      %s559 = sadd.s32 %s557, %s558
      %s560 = smul.addr %s559, 2
      %s561 = scalar_lea.vmem %s2, %s560
      %s562 = smul.u32 2, %s32
      %s563 = smul.u32 2, %s31
      %p564 = scmp.lt.s32.totalorder %s30, 1
      %s565 = scalar_select %p564, %s30, 1
      %p566 = scmp.lt.s32.totalorder %s563, 1
      %s567 = scalar_select %p566, %s563, 1
      %s568 = smul.addr %s565, 2
      %s569 = sadd.s32 %s567, %s568
      %s570 = smul.addr %s569, 4
      %s571 = scalar_lea.vmem %s12, %s570
      %s572 = smul.u32 2, %s31
      %s573 = smul.u32 2, %s31
      %p574 = scmp.lt.s32.totalorder %s30, 1
      %s575 = scalar_select %p574, %s30, 1
      %p576 = scmp.lt.s32.totalorder %s573, 1
      %s577 = scalar_select %p576, %s573, 1
      %s578 = smul.addr %s575, 2
      %s579 = sadd.s32 %s577, %s578
      %s580 = smul.addr %s579, 4
      %s581 = scalar_lea.vmem %s13, %s580
      %s582 = smul.u32 2, %s31
      %p584 = scmp.eq.s32.totalorder %s32, 0
      // Predicated region
      $region69: #{tpu_custom_call.1} parent=67 // pred_check
        %p585 = pneg %p584
      $region70: #{tpu_custom_call.1} parent=67 // pred_check_branch
        %587 = sbr.rel (%p585) target = $region72
      $region71: #{tpu_custom_call.1} parent=67 // pred_region
        %v588 = vld [vmem:[%s541] sm:$0xff]
        %v589 = vld [vmem:[%s541 + $0x8] sm:$0xff]
        %v590 = vld [vmem:[%s541 + $0x10] sm:$0xff]
        %v591 = vld [vmem:[%s541 + $0x18] sm:$0xff]
        %v592 = vld [vmem:[%s541 + $0x20] sm:$0xff]
        %v593 = vld [vmem:[%s541 + $0x28] sm:$0xff]
        %v594 = vld [vmem:[%s541 + $0x30] sm:$0xff]
        %v595 = vld [vmem:[%s541 + $0x38] sm:$0xff]
        %v596 = vld [vmem:[%s541 + $0x40] sm:$0xff]
        %v597 = vld [vmem:[%s541 + $0x48] sm:$0xff]
        %v598 = vld [vmem:[%s541 + $0x50] sm:$0xff]
        %v599 = vld [vmem:[%s541 + $0x58] sm:$0xff]
        %v600 = vld [vmem:[%s541 + $0x60] sm:$0xff]
        %v601 = vld [vmem:[%s541 + $0x68] sm:$0xff]
        %v602 = vld [vmem:[%s541 + $0x70] sm:$0xff]
        %v603 = vld [vmem:[%s541 + $0x78] sm:$0xff]
        %v604 = vld [vmem:[%s541 + $0x80] sm:$0xff]
        %v605 = vld [vmem:[%s541 + $0x88] sm:$0xff]
        %v606 = vld [vmem:[%s541 + $0x90] sm:$0xff]
        %v607 = vld [vmem:[%s541 + $0x98] sm:$0xff]
        %v608 = vld [vmem:[%s541 + $0xa0] sm:$0xff]
        %v609 = vld [vmem:[%s541 + $0xa8] sm:$0xff]
        %v610 = vld [vmem:[%s541 + $0xb0] sm:$0xff]
        %v611 = vld [vmem:[%s541 + $0xb8] sm:$0xff]
        %v612 = vld [vmem:[%s541 + $0xc0] sm:$0xff]
        %v613 = vld [vmem:[%s541 + $0xc8] sm:$0xff]
        %v614 = vld [vmem:[%s541 + $0xd0] sm:$0xff]
        %v615 = vld [vmem:[%s541 + $0xd8] sm:$0xff]
        %v616 = vld [vmem:[%s541 + $0xe0] sm:$0xff]
        %v617 = vld [vmem:[%s541 + $0xe8] sm:$0xff]
        %v618 = vld [vmem:[%s541 + $0xf0] sm:$0xff]
        %v619 = vld [vmem:[%s541 + $0xf8] sm:$0xff]
        %v620 = vld [vmem:[%s3] sm:$0x7]
        %v621 = vld [vmem:[%s4] sm:$0x1]
        %v623 = vlaneseq
        %v624 = vshrl.u32 %v623, 7
        %v625 = vsub.s32 0, %v624
        %v626 = vrot.slane %v621, %v625
        %vm628 = vcmask 23552
        %v630 = vsel %vm628, %v588, 0
        %v633 = vsel %vm628, %v589, 0
        %v636 = vsel %vm628, %v590, 0
        %v639 = vsel %vm628, %v591, 0
        %v642 = vsel %vm628, %v592, 0
        %v645 = vsel %vm628, %v593, 0
        %v648 = vsel %vm628, %v594, 0
        %v651 = vsel %vm628, %v595, 0
        %v654 = vsel %vm628, %v596, 0
        %v657 = vsel %vm628, %v597, 0
        %v660 = vsel %vm628, %v598, 0
        %v663 = vsel %vm628, %v599, 0
        %v666 = vsel %vm628, %v600, 0
        %v669 = vsel %vm628, %v601, 0
        %v672 = vsel %vm628, %v602, 0
        %v675 = vsel %vm628, %v603, 0
        %v678 = vsel %vm628, %v604, 0
        %v681 = vsel %vm628, %v605, 0
        %v684 = vsel %vm628, %v606, 0
        %v687 = vsel %vm628, %v607, 0
        %v690 = vsel %vm628, %v608, 0
        %v693 = vsel %vm628, %v609, 0
        %v696 = vsel %vm628, %v610, 0
        %v699 = vsel %vm628, %v611, 0
        %v702 = vsel %vm628, %v612, 0
        %v705 = vsel %vm628, %v613, 0
        %v708 = vsel %vm628, %v614, 0
        %v711 = vsel %vm628, %v615, 0
        %v714 = vsel %vm628, %v616, 0
        %v717 = vsel %vm628, %v617, 0
        %v720 = vsel %vm628, %v618, 0
        %v723 = vsel %vm628, %v619, 0
        %vm725 = vcmask 1042432
        %v727 = vsel %vm725, %v620, 0
        %729 = vmatprep.subr.mxu0 0.0
        %730 = vmatpush1.msra.mxu0 %v727
        %731 = vmatprep.subr.mxu0 0.0
        %732 = vmatpush1.msra.mxu0 0.0
        %733 = vmatprep.subr.mxu0 0.0
        %734 = vmatpush1.msra.mxu0 0.0
        %735 = vmatprep.subr.mxu0 0.0
        %736 = vmatpush1.msra.mxu0 0.0
        %737 = vmatprep.subr.mxu0 0.0
        %738 = vmatpush1.msra.mxu0 0.0
        %739 = vmatprep.subr.mxu0 0.0
        %740 = vmatpush1.msra.mxu0 0.0
        %741 = vmatprep.subr.mxu0 0.0
        %742 = vmatpush1.msra.mxu0 0.0
        %743 = vmatprep.subr.mxu0 0.0
        %744 = vmatpush1.msra.mxu0 0.0
        %745 = vmatprep.subr.mxu0 0.0
        %746 = vmatpush1.msra.mxu0 0.0
        %747 = vmatprep.subr.mxu0 0.0
        %748 = vmatpush1.msra.mxu0 0.0
        %749 = vmatprep.subr.mxu0 0.0
        %750 = vmatpush1.msra.mxu0 0.0
        %751 = vmatprep.subr.mxu0 0.0
        %752 = vmatpush1.msra.mxu0 0.0
        %753 = vmatprep.subr.mxu0 0.0
        %754 = vmatpush1.msra.mxu0 0.0
        %755 = vmatprep.subr.mxu0 0.0
        %756 = vmatpush1.msra.mxu0 0.0
        %757 = vmatprep.subr.mxu0 0.0
        %758 = vmatpush1.msra.mxu0 0.0
        %759 = vmatprep.subr.mxu0 0.0
        %760 = vmatpush1.msra.mxu0 0.0
        %761 = vmatprep.subr.mxu0 0.0
        %762 = vmatpush1.msra.mxu0 0.0
        %763 = vmatprep.subr.mxu0 0.0
        %764 = vmatpush1.msra.mxu0 0.0
        %765 = vmatprep.subr.mxu0 0.0
        %766 = vmatpush1.msra.mxu0 0.0
        %767 = vmatprep.subr.mxu0 0.0
        %768 = vmatpush1.msra.mxu0 0.0
        %769 = vmatprep.subr.mxu0 0.0
        %770 = vmatpush1.msra.mxu0 0.0
        %771 = vmatprep.subr.mxu0 0.0
        %772 = vmatpush1.msra.mxu0 0.0
        %773 = vmatprep.subr.mxu0 0.0
        %774 = vmatpush1.msra.mxu0 0.0
        %775 = vmatprep.subr.mxu0 0.0
        %776 = vmatpush1.msra.mxu0 0.0
        %777 = vmatprep.subr.mxu0 0.0
        %778 = vmatpush1.msra.mxu0 0.0
        %779 = vmatprep.subr.mxu0 0.0
        %780 = vmatpush1.msra.mxu0 0.0
        %781 = vmatprep.subr.mxu0 0.0
        %782 = vmatpush1.msra.mxu0 0.0
        %783 = vmatprep.subr.mxu0 0.0
        %784 = vmatpush1.msra.mxu0 0.0
        %785 = vmatprep.subr.mxu0 0.0
        %786 = vmatpush1.msra.mxu0 0.0
        %787 = vmatprep.subr.mxu0 0.0
        %788 = vmatpush1.msra.mxu0 0.0
        %789 = vmatprep.subr.mxu0 0.0
        %790 = vmatpush1.msra.mxu0 0.0
        %791 = vmatprep.subr.mxu0 0.0
        %792 = vmatpush1.msra.mxu0 0.0
        %793 = vmatprep.mubr.f32.mxu0 0.0
        %794 = vmatmul.mubr.f32.gmra.mrb[0].mxu0 %v630
        %v795 = vpop.f32.mrb[0].mxu0
        %v796 = vadd.f32 %v626, %v795
        %v797 = vpop.f32.mrb[0].mxu0
        %798 = vmatprep.mubr.f32.mxu0 0.0
        %799 = vmatmul.mubr.f32.gmra.mrb[0].mxu0 %v633
        %v800 = vpop.f32.mrb[0].mxu0
        %v801 = vadd.f32 %v626, %v800
        %v802 = vpop.f32.mrb[0].mxu0
        %803 = vmatprep.mubr.f32.mxu0 0.0
        %804 = vmatmul.mubr.f32.gmra.mrb[0].mxu0 %v636
        %v805 = vpop.f32.mrb[0].mxu0
        %v806 = vadd.f32 %v626, %v805
        %v807 = vpop.f32.mrb[0].mxu0
        %808 = vmatprep.mubr.f32.mxu0 0.0
        %809 = vmatmul.mubr.f32.gmra.mrb[0].mxu0 %v639
        %v810 = vpop.f32.mrb[0].mxu0
        %v811 = vadd.f32 %v626, %v810
        %v812 = vpop.f32.mrb[0].mxu0
        %813 = vmatprep.mubr.f32.mxu0 0.0
        %814 = vmatmul.mubr.f32.gmra.mrb[0].mxu0 %v642
        %v815 = vpop.f32.mrb[0].mxu0
        %v816 = vadd.f32 %v626, %v815
        %v817 = vpop.f32.mrb[0].mxu0
        %818 = vmatprep.mubr.f32.mxu0 0.0
        %819 = vmatmul.mubr.f32.gmra.mrb[0].mxu0 %v645
        %v820 = vpop.f32.mrb[0].mxu0
        %v821 = vadd.f32 %v626, %v820
        %v822 = vpop.f32.mrb[0].mxu0
        %823 = vmatprep.mubr.f32.mxu0 0.0
        %824 = vmatmul.mubr.f32.gmra.mrb[0].mxu0 %v648
        %v825 = vpop.f32.mrb[0].mxu0
        %v826 = vadd.f32 %v626, %v825
        %v827 = vpop.f32.mrb[0].mxu0
        %828 = vmatprep.mubr.f32.mxu0 0.0
        %829 = vmatmul.mubr.f32.gmra.mrb[0].mxu0 %v651
        %v830 = vpop.f32.mrb[0].mxu0
        %v831 = vadd.f32 %v626, %v830
        %v832 = vpop.f32.mrb[0].mxu0
        %833 = vmatprep.mubr.f32.mxu0 0.0
        %834 = vmatmul.mubr.f32.gmra.mrb[0].mxu0 %v654
        %v835 = vpop.f32.mrb[0].mxu0
        %v836 = vadd.f32 %v626, %v835
        %v837 = vpop.f32.mrb[0].mxu0
        %838 = vmatprep.mubr.f32.mxu0 0.0
        %839 = vmatmul.mubr.f32.gmra.mrb[0].mxu0 %v657
        %v840 = vpop.f32.mrb[0].mxu0
        %v841 = vadd.f32 %v626, %v840
        %v842 = vpop.f32.mrb[0].mxu0
        %843 = vmatprep.mubr.f32.mxu0 0.0
        %844 = vmatmul.mubr.f32.gmra.mrb[0].mxu0 %v660
        %v845 = vpop.f32.mrb[0].mxu0
        %v846 = vadd.f32 %v626, %v845
        %v847 = vpop.f32.mrb[0].mxu0
        %848 = vmatprep.mubr.f32.mxu0 0.0
        %849 = vmatmul.mubr.f32.gmra.mrb[0].mxu0 %v663
        %v850 = vpop.f32.mrb[0].mxu0
        %v851 = vadd.f32 %v626, %v850
        %v852 = vpop.f32.mrb[0].mxu0
        %853 = vmatprep.mubr.f32.mxu0 0.0
        %854 = vmatmul.mubr.f32.gmra.mrb[0].mxu0 %v666
        %v855 = vpop.f32.mrb[0].mxu0
        %v856 = vadd.f32 %v626, %v855
        %v857 = vpop.f32.mrb[0].mxu0
        %858 = vmatprep.mubr.f32.mxu0 0.0
        %859 = vmatmul.mubr.f32.gmra.mrb[0].mxu0 %v669
        %v860 = vpop.f32.mrb[0].mxu0
        %v861 = vadd.f32 %v626, %v860
        %v862 = vpop.f32.mrb[0].mxu0
        %863 = vmatprep.mubr.f32.mxu0 0.0
        %864 = vmatmul.mubr.f32.gmra.mrb[0].mxu0 %v672
        %v865 = vpop.f32.mrb[0].mxu0
        %v866 = vadd.f32 %v626, %v865
        %v867 = vpop.f32.mrb[0].mxu0
        %868 = vmatprep.mubr.f32.mxu0 0.0
        %869 = vmatmul.mubr.f32.gmra.mrb[0].mxu0 %v675
        %v870 = vpop.f32.mrb[0].mxu0
        %v871 = vadd.f32 %v626, %v870
        %v872 = vpop.f32.mrb[0].mxu0
        %873 = vmatprep.mubr.f32.mxu0 0.0
        %874 = vmatmul.mubr.f32.gmra.mrb[0].mxu0 %v678
        %v875 = vpop.f32.mrb[0].mxu0
        %v876 = vadd.f32 %v626, %v875
        %v877 = vpop.f32.mrb[0].mxu0
        %878 = vmatprep.mubr.f32.mxu0 0.0
        %879 = vmatmul.mubr.f32.gmra.mrb[0].mxu0 %v681
        %v880 = vpop.f32.mrb[0].mxu0
        %v881 = vadd.f32 %v626, %v880
        %v882 = vpop.f32.mrb[0].mxu0
        %883 = vmatprep.mubr.f32.mxu0 0.0
        %884 = vmatmul.mubr.f32.gmra.mrb[0].mxu0 %v684
        %v885 = vpop.f32.mrb[0].mxu0
        %v886 = vadd.f32 %v626, %v885
        %v887 = vpop.f32.mrb[0].mxu0
        %888 = vmatprep.mubr.f32.mxu0 0.0
        %889 = vmatmul.mubr.f32.gmra.mrb[0].mxu0 %v687
        %v890 = vpop.f32.mrb[0].mxu0
        %v891 = vadd.f32 %v626, %v890
        %v892 = vpop.f32.mrb[0].mxu0
        %893 = vmatprep.mubr.f32.mxu0 0.0
        %894 = vmatmul.mubr.f32.gmra.mrb[0].mxu0 %v690
        %v895 = vpop.f32.mrb[0].mxu0
        %v896 = vadd.f32 %v626, %v895
        %v897 = vpop.f32.mrb[0].mxu0
        %898 = vmatprep.mubr.f32.mxu0 0.0
        %899 = vmatmul.mubr.f32.gmra.mrb[0].mxu0 %v693
        %v900 = vpop.f32.mrb[0].mxu0
        %v901 = vadd.f32 %v626, %v900
        %v902 = vpop.f32.mrb[0].mxu0
        %903 = vmatprep.mubr.f32.mxu0 0.0
        %904 = vmatmul.mubr.f32.gmra.mrb[0].mxu0 %v696
        %v905 = vpop.f32.mrb[0].mxu0
        %v906 = vadd.f32 %v626, %v905
        %v907 = vpop.f32.mrb[0].mxu0
        %908 = vmatprep.mubr.f32.mxu0 0.0
        %909 = vmatmul.mubr.f32.gmra.mrb[0].mxu0 %v699
        %v910 = vpop.f32.mrb[0].mxu0
        %v911 = vadd.f32 %v626, %v910
        %v912 = vpop.f32.mrb[0].mxu0
        %913 = vmatprep.mubr.f32.mxu0 0.0
        %914 = vmatmul.mubr.f32.gmra.mrb[0].mxu0 %v702
        %v915 = vpop.f32.mrb[0].mxu0
        %v916 = vadd.f32 %v626, %v915
        %v917 = vpop.f32.mrb[0].mxu0
        %918 = vmatprep.mubr.f32.mxu0 0.0
        %919 = vmatmul.mubr.f32.gmra.mrb[0].mxu0 %v705
        %v920 = vpop.f32.mrb[0].mxu0
        %v921 = vadd.f32 %v626, %v920
        %v922 = vpop.f32.mrb[0].mxu0
        %923 = vmatprep.mubr.f32.mxu0 0.0
        %924 = vmatmul.mubr.f32.gmra.mrb[0].mxu0 %v708
        %v925 = vpop.f32.mrb[0].mxu0
        %v926 = vadd.f32 %v626, %v925
        %v927 = vpop.f32.mrb[0].mxu0
        %928 = vmatprep.mubr.f32.mxu0 0.0
        %929 = vmatmul.mubr.f32.gmra.mrb[0].mxu0 %v711
        %v930 = vpop.f32.mrb[0].mxu0
        %v931 = vadd.f32 %v626, %v930
        %v932 = vpop.f32.mrb[0].mxu0
        %933 = vmatprep.mubr.f32.mxu0 0.0
        %934 = vmatmul.mubr.f32.gmra.mrb[0].mxu0 %v714
        %v935 = vpop.f32.mrb[0].mxu0
        %v936 = vadd.f32 %v626, %v935
        %v937 = vpop.f32.mrb[0].mxu0
        %938 = vmatprep.mubr.f32.mxu0 0.0
        %939 = vmatmul.mubr.f32.gmra.mrb[0].mxu0 %v717
        %v940 = vpop.f32.mrb[0].mxu0
        %v941 = vadd.f32 %v626, %v940
        %v942 = vpop.f32.mrb[0].mxu0
        %943 = vmatprep.mubr.f32.mxu0 0.0
        %944 = vmatmul.mubr.f32.gmra.mrb[0].mxu0 %v720
        %v945 = vpop.f32.mrb[0].mxu0
        %v946 = vadd.f32 %v626, %v945
        %v947 = vpop.f32.mrb[0].mxu0
        %948 = vmatprep.mubr.f32.mxu0 0.0
        %949 = vmatmul.mubr.f32.gmra.mrb[0].mxu0 %v723
        %v950 = vpop.f32.mrb[0].mxu0
        %v951 = vadd.f32 %v626, %v950
        %v952 = vpop.f32.mrb[0].mxu0
        %953 = vdwg.mxu0
        %v954 = vmax.f32 %v796, 0.0
        %v955 = vmax.f32 %v801, 0.0
        %v956 = vmax.f32 %v806, 0.0
        %v957 = vmax.f32 %v811, 0.0
        %v958 = vmax.f32 %v816, 0.0
        %v959 = vmax.f32 %v821, 0.0
        %v960 = vmax.f32 %v826, 0.0
        %v961 = vmax.f32 %v831, 0.0
        %v962 = vmax.f32 %v836, 0.0
        %v963 = vmax.f32 %v841, 0.0
        %v964 = vmax.f32 %v846, 0.0
        %v965 = vmax.f32 %v851, 0.0
        %v966 = vmax.f32 %v856, 0.0
        %v967 = vmax.f32 %v861, 0.0
        %v968 = vmax.f32 %v866, 0.0
        %v969 = vmax.f32 %v871, 0.0
        %v970 = vmax.f32 %v876, 0.0
        %v971 = vmax.f32 %v881, 0.0
        %v972 = vmax.f32 %v886, 0.0
        %v973 = vmax.f32 %v891, 0.0
        %v974 = vmax.f32 %v896, 0.0
        %v975 = vmax.f32 %v901, 0.0
        %v976 = vmax.f32 %v906, 0.0
        %v977 = vmax.f32 %v911, 0.0
        %v978 = vmax.f32 %v916, 0.0
        %v979 = vmax.f32 %v921, 0.0
        %v980 = vmax.f32 %v926, 0.0
        %v981 = vmax.f32 %v931, 0.0
        %v982 = vmax.f32 %v936, 0.0
        %v983 = vmax.f32 %v941, 0.0
        %v984 = vmax.f32 %v946, 0.0
        %v985 = vmax.f32 %v951, 0.0
        %v986 = vpack.c.bf16 %v955, %v954
        %v987 = vpack.c.bf16 %v957, %v956
        %v988 = vpack.c.bf16 %v959, %v958
        %v989 = vpack.c.bf16 %v961, %v960
        %v990 = vpack.c.bf16 %v963, %v962
        %v991 = vpack.c.bf16 %v965, %v964
        %v992 = vpack.c.bf16 %v967, %v966
        %v993 = vpack.c.bf16 %v969, %v968
        %v994 = vpack.c.bf16 %v971, %v970
        %v995 = vpack.c.bf16 %v973, %v972
        %v996 = vpack.c.bf16 %v975, %v974
        %v997 = vpack.c.bf16 %v977, %v976
        %v998 = vpack.c.bf16 %v979, %v978
        %v999 = vpack.c.bf16 %v981, %v980
        %v1000 = vpack.c.bf16 %v983, %v982
        %v1001 = vpack.c.bf16 %v985, %v984
        %v1002 = vld [vmem:[%s5] sm:$0xf]
        %v1003 = vld [vmem:[%s5 + $0x4] sm:$0xf]
        %v1004 = vld [vmem:[%s5 + $0x8] sm:$0xf]
        %v1005 = vld [vmem:[%s5 + $0xc] sm:$0xf]
        %v1006 = vld [vmem:[%s5 + $0x10] sm:$0xf]
        %v1007 = vld [vmem:[%s5 + $0x14] sm:$0xf]
        %v1008 = vld [vmem:[%s5 + $0x18] sm:$0xf]
        %v1009 = vld [vmem:[%s5 + $0x1c] sm:$0xf]
        %v1010 = vld [vmem:[%s6] sm:$0x1]
        %v1012 = vlaneseq
        %v1013 = vshrl.u32 %v1012, 7
        %v1014 = vsub.s32 0, %v1013
        %v1015 = vrot.slane %v1010, %v1014
        %v1025 = vunpack.c.l.b16 %v1002
        %v1026 = vunpack.c.l.b16 %v1003
        %v1027 = vunpack.c.l.b16 %v1004
        %v1028 = vunpack.c.l.b16 %v1005
        %v1029 = vunpack.c.l.b16 %v1006
        %v1030 = vunpack.c.l.b16 %v1007
        %v1031 = vunpack.c.l.b16 %v1008
        %v1032 = vunpack.c.l.b16 %v1009
        %v1033 = vpack.c.b16 %v1026, %v1025
        %v1034 = vpack.c.b16 %v1028, %v1027
        %v1035 = vpack.c.b16 %v1030, %v1029
        %v1036 = vpack.c.b16 %v1032, %v1031
        %vm1041 = vcmask 523264
        %v1043 = vsel %vm1041, %v986, 0
        %v1046 = vsel %vm1041, %v987, 0
        %v1049 = vsel %vm1041, %v988, 0
        %v1052 = vsel %vm1041, %v989, 0
        %v1055 = vsel %vm1041, %v990, 0
        %v1058 = vsel %vm1041, %v991, 0
        %v1061 = vsel %vm1041, %v992, 0
        %v1064 = vsel %vm1041, %v993, 0
        %v1067 = vsel %vm1041, %v994, 0
        %v1070 = vsel %vm1041, %v995, 0
        %v1073 = vsel %vm1041, %v996, 0
        %v1076 = vsel %vm1041, %v997, 0
        %v1079 = vsel %vm1041, %v998, 0
        %v1082 = vsel %vm1041, %v999, 0
        %v1085 = vsel %vm1041, %v1000, 0
        %v1088 = vsel %vm1041, %v1001, 0
        %1090 = vmatprep.subr.bf16.mxu0 0
        %1091 = vmatpush1.bf16.msra.mxu0 %v1033
        %1092 = vmatprep.subr.bf16.mxu0 0
        %1093 = vmatpush1.bf16.msra.mxu0 %v1034
        %1094 = vmatprep.subr.bf16.mxu0 0
        %1095 = vmatpush1.bf16.msra.mxu0 %v1035
        %1096 = vmatprep.subr.bf16.mxu0 0
        %1097 = vmatpush1.bf16.msra.mxu0 %v1036
        %1098 = vmatprep.subr.bf16.mxu0 0
        %1099 = vmatpush1.bf16.msra.mxu0 0
        %1100 = vmatprep.subr.bf16.mxu0 0
        %1101 = vmatpush1.bf16.msra.mxu0 0
        %1102 = vmatprep.subr.bf16.mxu0 0
        %1103 = vmatpush1.bf16.msra.mxu0 0
        %1104 = vmatprep.subr.bf16.mxu0 0
        %1105 = vmatpush1.bf16.msra.mxu0 0
        %1106 = vmatprep.subr.bf16.mxu0 0
        %1107 = vmatpush1.bf16.msra.mxu0 0
        %1108 = vmatprep.subr.bf16.mxu0 0
        %1109 = vmatpush1.bf16.msra.mxu0 0
        %1110 = vmatprep.subr.bf16.mxu0 0
        %1111 = vmatpush1.bf16.msra.mxu0 0
        %1112 = vmatprep.subr.bf16.mxu0 0
        %1113 = vmatpush1.bf16.msra.mxu0 0
        %1114 = vmatprep.subr.bf16.mxu0 0
        %1115 = vmatpush1.bf16.msra.mxu0 0
        %1116 = vmatprep.subr.bf16.mxu0 0
        %1117 = vmatpush1.bf16.msra.mxu0 0
        %1118 = vmatprep.subr.bf16.mxu0 0
        %1119 = vmatpush1.bf16.msra.mxu0 0
        %1120 = vmatprep.subr.bf16.mxu0 0
        %1121 = vmatpush1.bf16.msra.mxu0 0
        %1122 = vmatprep.mubr.bf16.mxu0 0
        %1123 = vmatmul.mubr.bf16.gmra.mrb[0].mxu0 %v1043
        %v1124 = vpop.f32.mrb[0].mxu0
        %v1125 = vadd.f32 %v1015, %v1124
        %v1126 = vpop.f32.mrb[0].mxu0
        %v1127 = vpop.f32.mrb[0].mxu0
        %v1128 = vadd.f32 %v1015, %v1127
        %v1129 = vpop.f32.mrb[0].mxu0
        %1130 = vmatprep.mubr.bf16.mxu0 0
        %1131 = vmatmul.mubr.bf16.gmra.mrb[0].mxu0 %v1046
        %v1132 = vpop.f32.mrb[0].mxu0
        %v1133 = vadd.f32 %v1015, %v1132
        %v1134 = vpop.f32.mrb[0].mxu0
        %v1135 = vpop.f32.mrb[0].mxu0
        %v1136 = vadd.f32 %v1015, %v1135
        %v1137 = vpop.f32.mrb[0].mxu0
        %1138 = vmatprep.mubr.bf16.mxu0 0
        %1139 = vmatmul.mubr.bf16.gmra.mrb[0].mxu0 %v1049
        %v1140 = vpop.f32.mrb[0].mxu0
        %v1141 = vadd.f32 %v1015, %v1140
        %v1142 = vpop.f32.mrb[0].mxu0
        %v1143 = vpop.f32.mrb[0].mxu0
        %v1144 = vadd.f32 %v1015, %v1143
        %v1145 = vpop.f32.mrb[0].mxu0
        %1146 = vmatprep.mubr.bf16.mxu0 0
        %1147 = vmatmul.mubr.bf16.gmra.mrb[0].mxu0 %v1052
        %v1148 = vpop.f32.mrb[0].mxu0
        %v1149 = vadd.f32 %v1015, %v1148
        %v1150 = vpop.f32.mrb[0].mxu0
        %v1151 = vpop.f32.mrb[0].mxu0
        %v1152 = vadd.f32 %v1015, %v1151
        %v1153 = vpop.f32.mrb[0].mxu0
        %1154 = vmatprep.mubr.bf16.mxu0 0
        %1155 = vmatmul.mubr.bf16.gmra.mrb[0].mxu0 %v1055
        %v1156 = vpop.f32.mrb[0].mxu0
        %v1157 = vadd.f32 %v1015, %v1156
        %v1158 = vpop.f32.mrb[0].mxu0
        %v1159 = vpop.f32.mrb[0].mxu0
        %v1160 = vadd.f32 %v1015, %v1159
        %v1161 = vpop.f32.mrb[0].mxu0
        %1162 = vmatprep.mubr.bf16.mxu0 0
        %1163 = vmatmul.mubr.bf16.gmra.mrb[0].mxu0 %v1058
        %v1164 = vpop.f32.mrb[0].mxu0
        %v1165 = vadd.f32 %v1015, %v1164
        %v1166 = vpop.f32.mrb[0].mxu0
        %v1167 = vpop.f32.mrb[0].mxu0
        %v1168 = vadd.f32 %v1015, %v1167
        %v1169 = vpop.f32.mrb[0].mxu0
        %1170 = vmatprep.mubr.bf16.mxu0 0
        %1171 = vmatmul.mubr.bf16.gmra.mrb[0].mxu0 %v1061
        %v1172 = vpop.f32.mrb[0].mxu0
        %v1173 = vadd.f32 %v1015, %v1172
        %v1174 = vpop.f32.mrb[0].mxu0
        %v1175 = vpop.f32.mrb[0].mxu0
        %v1176 = vadd.f32 %v1015, %v1175
        %v1177 = vpop.f32.mrb[0].mxu0
        %1178 = vmatprep.mubr.bf16.mxu0 0
        %1179 = vmatmul.mubr.bf16.gmra.mrb[0].mxu0 %v1064
        %v1180 = vpop.f32.mrb[0].mxu0
        %v1181 = vadd.f32 %v1015, %v1180
        %v1182 = vpop.f32.mrb[0].mxu0
        %v1183 = vpop.f32.mrb[0].mxu0
        %v1184 = vadd.f32 %v1015, %v1183
        %v1185 = vpop.f32.mrb[0].mxu0
        %1186 = vmatprep.mubr.bf16.mxu0 0
        %1187 = vmatmul.mubr.bf16.gmra.mrb[0].mxu0 %v1067
        %v1188 = vpop.f32.mrb[0].mxu0
        %v1189 = vadd.f32 %v1015, %v1188
        %v1190 = vpop.f32.mrb[0].mxu0
        %v1191 = vpop.f32.mrb[0].mxu0
        %v1192 = vadd.f32 %v1015, %v1191
        %v1193 = vpop.f32.mrb[0].mxu0
        %1194 = vmatprep.mubr.bf16.mxu0 0
        %1195 = vmatmul.mubr.bf16.gmra.mrb[0].mxu0 %v1070
        %v1196 = vpop.f32.mrb[0].mxu0
        %v1197 = vadd.f32 %v1015, %v1196
        %v1198 = vpop.f32.mrb[0].mxu0
        %v1199 = vpop.f32.mrb[0].mxu0
        %v1200 = vadd.f32 %v1015, %v1199
        %v1201 = vpop.f32.mrb[0].mxu0
        %1202 = vmatprep.mubr.bf16.mxu0 0
        %1203 = vmatmul.mubr.bf16.gmra.mrb[0].mxu0 %v1073
        %v1204 = vpop.f32.mrb[0].mxu0
        %v1205 = vadd.f32 %v1015, %v1204
        %v1206 = vpop.f32.mrb[0].mxu0
        %v1207 = vpop.f32.mrb[0].mxu0
        %v1208 = vadd.f32 %v1015, %v1207
        %v1209 = vpop.f32.mrb[0].mxu0
        %1210 = vmatprep.mubr.bf16.mxu0 0
        %1211 = vmatmul.mubr.bf16.gmra.mrb[0].mxu0 %v1076
        %v1212 = vpop.f32.mrb[0].mxu0
        %v1213 = vadd.f32 %v1015, %v1212
        %v1214 = vpop.f32.mrb[0].mxu0
        %v1215 = vpop.f32.mrb[0].mxu0
        %v1216 = vadd.f32 %v1015, %v1215
        %v1217 = vpop.f32.mrb[0].mxu0
        %1218 = vmatprep.mubr.bf16.mxu0 0
        %1219 = vmatmul.mubr.bf16.gmra.mrb[0].mxu0 %v1079
        %v1220 = vpop.f32.mrb[0].mxu0
        %v1221 = vadd.f32 %v1015, %v1220
        %v1222 = vpop.f32.mrb[0].mxu0
        %v1223 = vpop.f32.mrb[0].mxu0
        %v1224 = vadd.f32 %v1015, %v1223
        %v1225 = vpop.f32.mrb[0].mxu0
        %1226 = vmatprep.mubr.bf16.mxu0 0
        %1227 = vmatmul.mubr.bf16.gmra.mrb[0].mxu0 %v1082
        %v1228 = vpop.f32.mrb[0].mxu0
        %v1229 = vadd.f32 %v1015, %v1228
        %v1230 = vpop.f32.mrb[0].mxu0
        %v1231 = vpop.f32.mrb[0].mxu0
        %v1232 = vadd.f32 %v1015, %v1231
        %v1233 = vpop.f32.mrb[0].mxu0
        %1234 = vmatprep.mubr.bf16.mxu0 0
        %1235 = vmatmul.mubr.bf16.gmra.mrb[0].mxu0 %v1085
        %v1236 = vpop.f32.mrb[0].mxu0
        %v1237 = vadd.f32 %v1015, %v1236
        %v1238 = vpop.f32.mrb[0].mxu0
        %v1239 = vpop.f32.mrb[0].mxu0
        %v1240 = vadd.f32 %v1015, %v1239
        %v1241 = vpop.f32.mrb[0].mxu0
        %1242 = vmatprep.mubr.bf16.mxu0 0
        %1243 = vmatmul.mubr.bf16.gmra.mrb[0].mxu0 %v1088
        %v1244 = vpop.f32.mrb[0].mxu0
        %v1245 = vadd.f32 %v1015, %v1244
        %v1246 = vpop.f32.mrb[0].mxu0
        %v1247 = vpop.f32.mrb[0].mxu0
        %v1248 = vadd.f32 %v1015, %v1247
        %v1249 = vpop.f32.mrb[0].mxu0
        %1250 = vdwg.mxu0
        %v1251 = vmax.f32 %v1125, 0.0
        %v1252 = vmax.f32 %v1128, 0.0
        %v1253 = vmax.f32 %v1133, 0.0
        %v1254 = vmax.f32 %v1136, 0.0
        %v1255 = vmax.f32 %v1141, 0.0
        %v1256 = vmax.f32 %v1144, 0.0
        %v1257 = vmax.f32 %v1149, 0.0
        %v1258 = vmax.f32 %v1152, 0.0
        %v1259 = vmax.f32 %v1157, 0.0
        %v1260 = vmax.f32 %v1160, 0.0
        %v1261 = vmax.f32 %v1165, 0.0
        %v1262 = vmax.f32 %v1168, 0.0
        %v1263 = vmax.f32 %v1173, 0.0
        %v1264 = vmax.f32 %v1176, 0.0
        %v1265 = vmax.f32 %v1181, 0.0
        %v1266 = vmax.f32 %v1184, 0.0
        %v1267 = vmax.f32 %v1189, 0.0
        %v1268 = vmax.f32 %v1192, 0.0
        %v1269 = vmax.f32 %v1197, 0.0
        %v1270 = vmax.f32 %v1200, 0.0
        %v1271 = vmax.f32 %v1205, 0.0
        %v1272 = vmax.f32 %v1208, 0.0
        %v1273 = vmax.f32 %v1213, 0.0
        %v1274 = vmax.f32 %v1216, 0.0
        %v1275 = vmax.f32 %v1221, 0.0
        %v1276 = vmax.f32 %v1224, 0.0
        %v1277 = vmax.f32 %v1229, 0.0
        %v1278 = vmax.f32 %v1232, 0.0
        %v1279 = vmax.f32 %v1237, 0.0
        %v1280 = vmax.f32 %v1240, 0.0
        %v1281 = vmax.f32 %v1245, 0.0
        %v1282 = vmax.f32 %v1248, 0.0
        %v1283 = vpack.c.bf16 %v1252, %v1251
        %v1284 = vpack.c.bf16 %v1254, %v1253
        %v1285 = vpack.c.bf16 %v1256, %v1255
        %v1286 = vpack.c.bf16 %v1258, %v1257
        %v1287 = vpack.c.bf16 %v1260, %v1259
        %v1288 = vpack.c.bf16 %v1262, %v1261
        %v1289 = vpack.c.bf16 %v1264, %v1263
        %v1290 = vpack.c.bf16 %v1266, %v1265
        %v1291 = vpack.c.bf16 %v1268, %v1267
        %v1292 = vpack.c.bf16 %v1270, %v1269
        %v1293 = vpack.c.bf16 %v1272, %v1271
        %v1294 = vpack.c.bf16 %v1274, %v1273
        %v1295 = vpack.c.bf16 %v1276, %v1275
        %v1296 = vpack.c.bf16 %v1278, %v1277
        %v1297 = vpack.c.bf16 %v1280, %v1279
        %v1298 = vpack.c.bf16 %v1282, %v1281
        %1299 = vst [vmem:[#allocation2] sm:$0xff] %v1283
        %1300 = vst [vmem:[#allocation2 + $0x8] sm:$0xff] %v1284
        %1301 = vst [vmem:[#allocation2 + $0x10] sm:$0xff] %v1285
        %1302 = vst [vmem:[#allocation2 + $0x18] sm:$0xff] %v1286
        %1303 = vst [vmem:[#allocation2 + $0x20] sm:$0xff] %v1287
        %1304 = vst [vmem:[#allocation2 + $0x28] sm:$0xff] %v1288
        %1305 = vst [vmem:[#allocation2 + $0x30] sm:$0xff] %v1289
        %1306 = vst [vmem:[#allocation2 + $0x38] sm:$0xff] %v1290
        %1307 = vst [vmem:[#allocation2 + $0x40] sm:$0xff] %v1291
        %1308 = vst [vmem:[#allocation2 + $0x48] sm:$0xff] %v1292
        %1309 = vst [vmem:[#allocation2 + $0x50] sm:$0xff] %v1293
        %1310 = vst [vmem:[#allocation2 + $0x58] sm:$0xff] %v1294
        %1311 = vst [vmem:[#allocation2 + $0x60] sm:$0xff] %v1295
        %1312 = vst [vmem:[#allocation2 + $0x68] sm:$0xff] %v1296
        %1313 = vst [vmem:[#allocation2 + $0x70] sm:$0xff] %v1297
        %1314 = vst [vmem:[#allocation2 + $0x78] sm:$0xff] %v1298
        %v1315 = vlaneseq
        %vm1316 = vcmp.ge.s32.totalorder %v1315, 0
        %vm1317 = vcmp.lt.s32.totalorder %v1315, 256
        %vm1318 = vmand %vm1316, %vm1317
        %1319 = vst.msk [vmem:[#allocation3] sm:$0x3] %vm1318, -inf
        %1320 = vst [vmem:[#allocation4] sm:$0xff] 0.0
      $region72: #{tpu_custom_call.1} parent=67 // pred_fallthru
        _
      %v1321 = vld [vmem:[%s551] sm:$0xff]
      %v1322 = vld [vmem:[%s551 + $0x8] sm:$0xff]
      %v1323 = vld [vmem:[%s551 + $0x10] sm:$0xff]
      %v1324 = vld [vmem:[%s551 + $0x18] sm:$0xff]
      %v1325 = vld [vmem:[%s551 + $0x20] sm:$0xff]
      %v1326 = vld [vmem:[%s551 + $0x28] sm:$0xff]
      %v1327 = vld [vmem:[%s551 + $0x30] sm:$0xff]
      %v1328 = vld [vmem:[%s551 + $0x38] sm:$0xff]
      %v1329 = vld [vmem:[%s551 + $0x40] sm:$0xff]
      %v1330 = vld [vmem:[%s551 + $0x48] sm:$0xff]
      %v1331 = vld [vmem:[%s551 + $0x50] sm:$0xff]
      %v1332 = vld [vmem:[%s551 + $0x58] sm:$0xff]
      %v1333 = vld [vmem:[%s551 + $0x60] sm:$0xff]
      %v1334 = vld [vmem:[%s551 + $0x68] sm:$0xff]
      %v1335 = vld [vmem:[%s551 + $0x70] sm:$0xff]
      %v1336 = vld [vmem:[%s551 + $0x78] sm:$0xff]
      %v1337 = vld [vmem:[%s551 + $0x80] sm:$0xff]
      %v1338 = vld [vmem:[%s551 + $0x88] sm:$0xff]
      %v1339 = vld [vmem:[%s551 + $0x90] sm:$0xff]
      %v1340 = vld [vmem:[%s551 + $0x98] sm:$0xff]
      %v1341 = vld [vmem:[%s551 + $0xa0] sm:$0xff]
      %v1342 = vld [vmem:[%s551 + $0xa8] sm:$0xff]
      %v1343 = vld [vmem:[%s551 + $0xb0] sm:$0xff]
      %v1344 = vld [vmem:[%s551 + $0xb8] sm:$0xff]
      %v1345 = vld [vmem:[%s551 + $0xc0] sm:$0xff]
      %v1346 = vld [vmem:[%s551 + $0xc8] sm:$0xff]
      %v1347 = vld [vmem:[%s551 + $0xd0] sm:$0xff]
      %v1348 = vld [vmem:[%s551 + $0xd8] sm:$0xff]
      %v1349 = vld [vmem:[%s551 + $0xe0] sm:$0xff]
      %v1350 = vld [vmem:[%s551 + $0xe8] sm:$0xff]
      %v1351 = vld [vmem:[%s551 + $0xf0] sm:$0xff]
      %v1352 = vld [vmem:[%s551 + $0xf8] sm:$0xff]
      %v1353 = vld [vmem:[%s3] sm:$0x7]
      %v1354 = vld [vmem:[%s4] sm:$0x1]
      %v1356 = vlaneseq
      %v1357 = vshrl.u32 %v1356, 7
      %v1358 = vsub.s32 0, %v1357
      %v1359 = vrot.slane %v1354, %v1358
      %vm1361 = vcmask 23552
      %v1363 = vsel %vm1361, %v1321, 0
      %v1366 = vsel %vm1361, %v1322, 0
      %v1369 = vsel %vm1361, %v1323, 0
      %v1372 = vsel %vm1361, %v1324, 0
      %v1375 = vsel %vm1361, %v1325, 0
      %v1378 = vsel %vm1361, %v1326, 0
      %v1381 = vsel %vm1361, %v1327, 0
      %v1384 = vsel %vm1361, %v1328, 0
      %v1387 = vsel %vm1361, %v1329, 0
      %v1390 = vsel %vm1361, %v1330, 0
      %v1393 = vsel %vm1361, %v1331, 0
      %v1396 = vsel %vm1361, %v1332, 0
      %v1399 = vsel %vm1361, %v1333, 0
      %v1402 = vsel %vm1361, %v1334, 0
      %v1405 = vsel %vm1361, %v1335, 0
      %v1408 = vsel %vm1361, %v1336, 0
      %v1411 = vsel %vm1361, %v1337, 0
      %v1414 = vsel %vm1361, %v1338, 0
      %v1417 = vsel %vm1361, %v1339, 0
      %v1420 = vsel %vm1361, %v1340, 0
      %v1423 = vsel %vm1361, %v1341, 0
      %v1426 = vsel %vm1361, %v1342, 0
      %v1429 = vsel %vm1361, %v1343, 0
      %v1432 = vsel %vm1361, %v1344, 0
      %v1435 = vsel %vm1361, %v1345, 0
      %v1438 = vsel %vm1361, %v1346, 0
      %v1441 = vsel %vm1361, %v1347, 0
      %v1444 = vsel %vm1361, %v1348, 0
      %v1447 = vsel %vm1361, %v1349, 0
      %v1450 = vsel %vm1361, %v1350, 0
      %v1453 = vsel %vm1361, %v1351, 0
      %v1456 = vsel %vm1361, %v1352, 0
      %vm1458 = vcmask 1042432
      %v1460 = vsel %vm1458, %v1353, 0
      %1462 = vmatprep.subr.mxu0 0.0
      %1463 = vmatpush1.msra.mxu0 %v1460
      %1464 = vmatprep.subr.mxu0 0.0
      %1465 = vmatpush1.msra.mxu0 0.0
      %1466 = vmatprep.subr.mxu0 0.0
      %1467 = vmatpush1.msra.mxu0 0.0
      %1468 = vmatprep.subr.mxu0 0.0
      %1469 = vmatpush1.msra.mxu0 0.0
      %1470 = vmatprep.subr.mxu0 0.0
      %1471 = vmatpush1.msra.mxu0 0.0
      %1472 = vmatprep.subr.mxu0 0.0
      %1473 = vmatpush1.msra.mxu0 0.0
      %1474 = vmatprep.subr.mxu0 0.0
      %1475 = vmatpush1.msra.mxu0 0.0
      %1476 = vmatprep.subr.mxu0 0.0
      %1477 = vmatpush1.msra.mxu0 0.0
      %1478 = vmatprep.subr.mxu0 0.0
      %1479 = vmatpush1.msra.mxu0 0.0
      %1480 = vmatprep.subr.mxu0 0.0
      %1481 = vmatpush1.msra.mxu0 0.0
      %1482 = vmatprep.subr.mxu0 0.0
      %1483 = vmatpush1.msra.mxu0 0.0
      %1484 = vmatprep.subr.mxu0 0.0
      %1485 = vmatpush1.msra.mxu0 0.0
      %1486 = vmatprep.subr.mxu0 0.0
      %1487 = vmatpush1.msra.mxu0 0.0
      %1488 = vmatprep.subr.mxu0 0.0
      %1489 = vmatpush1.msra.mxu0 0.0
      %1490 = vmatprep.subr.mxu0 0.0
      %1491 = vmatpush1.msra.mxu0 0.0
      %1492 = vmatprep.subr.mxu0 0.0
      %1493 = vmatpush1.msra.mxu0 0.0
      %1494 = vmatprep.subr.mxu0 0.0
      %1495 = vmatpush1.msra.mxu0 0.0
      %1496 = vmatprep.subr.mxu0 0.0
      %1497 = vmatpush1.msra.mxu0 0.0
      %1498 = vmatprep.subr.mxu0 0.0
      %1499 = vmatpush1.msra.mxu0 0.0
      %1500 = vmatprep.subr.mxu0 0.0
      %1501 = vmatpush1.msra.mxu0 0.0
      %1502 = vmatprep.subr.mxu0 0.0
      %1503 = vmatpush1.msra.mxu0 0.0
      %1504 = vmatprep.subr.mxu0 0.0
      %1505 = vmatpush1.msra.mxu0 0.0
      %1506 = vmatprep.subr.mxu0 0.0
      %1507 = vmatpush1.msra.mxu0 0.0
      %1508 = vmatprep.subr.mxu0 0.0
      %1509 = vmatpush1.msra.mxu0 0.0
      %1510 = vmatprep.subr.mxu0 0.0
      %1511 = vmatpush1.msra.mxu0 0.0
      %1512 = vmatprep.subr.mxu0 0.0
      %1513 = vmatpush1.msra.mxu0 0.0
      %1514 = vmatprep.subr.mxu0 0.0
      %1515 = vmatpush1.msra.mxu0 0.0
      %1516 = vmatprep.subr.mxu0 0.0
      %1517 = vmatpush1.msra.mxu0 0.0
      %1518 = vmatprep.subr.mxu0 0.0
      %1519 = vmatpush1.msra.mxu0 0.0
      %1520 = vmatprep.subr.mxu0 0.0
      %1521 = vmatpush1.msra.mxu0 0.0
      %1522 = vmatprep.subr.mxu0 0.0
      %1523 = vmatpush1.msra.mxu0 0.0
      %1524 = vmatprep.subr.mxu0 0.0
      %1525 = vmatpush1.msra.mxu0 0.0
      %1526 = vmatprep.mubr.f32.mxu0 0.0
      %1527 = vmatmul.mubr.f32.gmra.mrb[0].mxu0 %v1363
      %v1528 = vpop.f32.mrb[0].mxu0
      %v1529 = vadd.f32 %v1359, %v1528
      %v1530 = vpop.f32.mrb[0].mxu0
      %1531 = vmatprep.mubr.f32.mxu0 0.0
      %1532 = vmatmul.mubr.f32.gmra.mrb[0].mxu0 %v1366
      %v1533 = vpop.f32.mrb[0].mxu0
      %v1534 = vadd.f32 %v1359, %v1533
      %v1535 = vpop.f32.mrb[0].mxu0
      %1536 = vmatprep.mubr.f32.mxu0 0.0
      %1537 = vmatmul.mubr.f32.gmra.mrb[0].mxu0 %v1369
      %v1538 = vpop.f32.mrb[0].mxu0
      %v1539 = vadd.f32 %v1359, %v1538
      %v1540 = vpop.f32.mrb[0].mxu0
      %1541 = vmatprep.mubr.f32.mxu0 0.0
      %1542 = vmatmul.mubr.f32.gmra.mrb[0].mxu0 %v1372
      %v1543 = vpop.f32.mrb[0].mxu0
      %v1544 = vadd.f32 %v1359, %v1543
      %v1545 = vpop.f32.mrb[0].mxu0
      %1546 = vmatprep.mubr.f32.mxu0 0.0
      %1547 = vmatmul.mubr.f32.gmra.mrb[0].mxu0 %v1375
      %v1548 = vpop.f32.mrb[0].mxu0
      %v1549 = vadd.f32 %v1359, %v1548
      %v1550 = vpop.f32.mrb[0].mxu0
      %1551 = vmatprep.mubr.f32.mxu0 0.0
      %1552 = vmatmul.mubr.f32.gmra.mrb[0].mxu0 %v1378
      %v1553 = vpop.f32.mrb[0].mxu0
      %v1554 = vadd.f32 %v1359, %v1553
      %v1555 = vpop.f32.mrb[0].mxu0
      %1556 = vmatprep.mubr.f32.mxu0 0.0
      %1557 = vmatmul.mubr.f32.gmra.mrb[0].mxu0 %v1381
      %v1558 = vpop.f32.mrb[0].mxu0
      %v1559 = vadd.f32 %v1359, %v1558
      %v1560 = vpop.f32.mrb[0].mxu0
      %1561 = vmatprep.mubr.f32.mxu0 0.0
      %1562 = vmatmul.mubr.f32.gmra.mrb[0].mxu0 %v1384
      %v1563 = vpop.f32.mrb[0].mxu0
      %v1564 = vadd.f32 %v1359, %v1563
      %v1565 = vpop.f32.mrb[0].mxu0
      %1566 = vmatprep.mubr.f32.mxu0 0.0
      %1567 = vmatmul.mubr.f32.gmra.mrb[0].mxu0 %v1387
      %v1568 = vpop.f32.mrb[0].mxu0
      %v1569 = vadd.f32 %v1359, %v1568
      %v1570 = vpop.f32.mrb[0].mxu0
      %1571 = vmatprep.mubr.f32.mxu0 0.0
      %1572 = vmatmul.mubr.f32.gmra.mrb[0].mxu0 %v1390
      %v1573 = vpop.f32.mrb[0].mxu0
      %v1574 = vadd.f32 %v1359, %v1573
      %v1575 = vpop.f32.mrb[0].mxu0
      %1576 = vmatprep.mubr.f32.mxu0 0.0
      %1577 = vmatmul.mubr.f32.gmra.mrb[0].mxu0 %v1393
      %v1578 = vpop.f32.mrb[0].mxu0
      %v1579 = vadd.f32 %v1359, %v1578
      %v1580 = vpop.f32.mrb[0].mxu0
      %1581 = vmatprep.mubr.f32.mxu0 0.0
      %1582 = vmatmul.mubr.f32.gmra.mrb[0].mxu0 %v1396
      %v1583 = vpop.f32.mrb[0].mxu0
      %v1584 = vadd.f32 %v1359, %v1583
      %v1585 = vpop.f32.mrb[0].mxu0
      %1586 = vmatprep.mubr.f32.mxu0 0.0
      %1587 = vmatmul.mubr.f32.gmra.mrb[0].mxu0 %v1399
      %v1588 = vpop.f32.mrb[0].mxu0
      %v1589 = vadd.f32 %v1359, %v1588
      %v1590 = vpop.f32.mrb[0].mxu0
      %1591 = vmatprep.mubr.f32.mxu0 0.0
      %1592 = vmatmul.mubr.f32.gmra.mrb[0].mxu0 %v1402
      %v1593 = vpop.f32.mrb[0].mxu0
      %v1594 = vadd.f32 %v1359, %v1593
      %v1595 = vpop.f32.mrb[0].mxu0
      %1596 = vmatprep.mubr.f32.mxu0 0.0
      %1597 = vmatmul.mubr.f32.gmra.mrb[0].mxu0 %v1405
      %v1598 = vpop.f32.mrb[0].mxu0
      %v1599 = vadd.f32 %v1359, %v1598
      %v1600 = vpop.f32.mrb[0].mxu0
      %1601 = vmatprep.mubr.f32.mxu0 0.0
      %1602 = vmatmul.mubr.f32.gmra.mrb[0].mxu0 %v1408
      %v1603 = vpop.f32.mrb[0].mxu0
      %v1604 = vadd.f32 %v1359, %v1603
      %v1605 = vpop.f32.mrb[0].mxu0
      %1606 = vmatprep.mubr.f32.mxu0 0.0
      %1607 = vmatmul.mubr.f32.gmra.mrb[0].mxu0 %v1411
      %v1608 = vpop.f32.mrb[0].mxu0
      %v1609 = vadd.f32 %v1359, %v1608
      %v1610 = vpop.f32.mrb[0].mxu0
      %1611 = vmatprep.mubr.f32.mxu0 0.0
      %1612 = vmatmul.mubr.f32.gmra.mrb[0].mxu0 %v1414
      %v1613 = vpop.f32.mrb[0].mxu0
      %v1614 = vadd.f32 %v1359, %v1613
      %v1615 = vpop.f32.mrb[0].mxu0
      %1616 = vmatprep.mubr.f32.mxu0 0.0
      %1617 = vmatmul.mubr.f32.gmra.mrb[0].mxu0 %v1417
      %v1618 = vpop.f32.mrb[0].mxu0
      %v1619 = vadd.f32 %v1359, %v1618
      %v1620 = vpop.f32.mrb[0].mxu0
      %1621 = vmatprep.mubr.f32.mxu0 0.0
      %1622 = vmatmul.mubr.f32.gmra.mrb[0].mxu0 %v1420
      %v1623 = vpop.f32.mrb[0].mxu0
      %v1624 = vadd.f32 %v1359, %v1623
      %v1625 = vpop.f32.mrb[0].mxu0
      %1626 = vmatprep.mubr.f32.mxu0 0.0
      %1627 = vmatmul.mubr.f32.gmra.mrb[0].mxu0 %v1423
      %v1628 = vpop.f32.mrb[0].mxu0
      %v1629 = vadd.f32 %v1359, %v1628
      %v1630 = vpop.f32.mrb[0].mxu0
      %1631 = vmatprep.mubr.f32.mxu0 0.0
      %1632 = vmatmul.mubr.f32.gmra.mrb[0].mxu0 %v1426
      %v1633 = vpop.f32.mrb[0].mxu0
      %v1634 = vadd.f32 %v1359, %v1633
      %v1635 = vpop.f32.mrb[0].mxu0
      %1636 = vmatprep.mubr.f32.mxu0 0.0
      %1637 = vmatmul.mubr.f32.gmra.mrb[0].mxu0 %v1429
      %v1638 = vpop.f32.mrb[0].mxu0
      %v1639 = vadd.f32 %v1359, %v1638
      %v1640 = vpop.f32.mrb[0].mxu0
      %1641 = vmatprep.mubr.f32.mxu0 0.0
      %1642 = vmatmul.mubr.f32.gmra.mrb[0].mxu0 %v1432
      %v1643 = vpop.f32.mrb[0].mxu0
      %v1644 = vadd.f32 %v1359, %v1643
      %v1645 = vpop.f32.mrb[0].mxu0
      %1646 = vmatprep.mubr.f32.mxu0 0.0
      %1647 = vmatmul.mubr.f32.gmra.mrb[0].mxu0 %v1435
      %v1648 = vpop.f32.mrb[0].mxu0
      %v1649 = vadd.f32 %v1359, %v1648
      %v1650 = vpop.f32.mrb[0].mxu0
      %1651 = vmatprep.mubr.f32.mxu0 0.0
      %1652 = vmatmul.mubr.f32.gmra.mrb[0].mxu0 %v1438
      %v1653 = vpop.f32.mrb[0].mxu0
      %v1654 = vadd.f32 %v1359, %v1653
      %v1655 = vpop.f32.mrb[0].mxu0
      %1656 = vmatprep.mubr.f32.mxu0 0.0
      %1657 = vmatmul.mubr.f32.gmra.mrb[0].mxu0 %v1441
      %v1658 = vpop.f32.mrb[0].mxu0
      %v1659 = vadd.f32 %v1359, %v1658
      %v1660 = vpop.f32.mrb[0].mxu0
      %1661 = vmatprep.mubr.f32.mxu0 0.0
      %1662 = vmatmul.mubr.f32.gmra.mrb[0].mxu0 %v1444
      %v1663 = vpop.f32.mrb[0].mxu0
      %v1664 = vadd.f32 %v1359, %v1663
      %v1665 = vpop.f32.mrb[0].mxu0
      %1666 = vmatprep.mubr.f32.mxu0 0.0
      %1667 = vmatmul.mubr.f32.gmra.mrb[0].mxu0 %v1447
      %v1668 = vpop.f32.mrb[0].mxu0
      %v1669 = vadd.f32 %v1359, %v1668
      %v1670 = vpop.f32.mrb[0].mxu0
      %1671 = vmatprep.mubr.f32.mxu0 0.0
      %1672 = vmatmul.mubr.f32.gmra.mrb[0].mxu0 %v1450
      %v1673 = vpop.f32.mrb[0].mxu0
      %v1674 = vadd.f32 %v1359, %v1673
      %v1675 = vpop.f32.mrb[0].mxu0
      %1676 = vmatprep.mubr.f32.mxu0 0.0
      %1677 = vmatmul.mubr.f32.gmra.mrb[0].mxu0 %v1453
      %v1678 = vpop.f32.mrb[0].mxu0
      %v1679 = vadd.f32 %v1359, %v1678
      %v1680 = vpop.f32.mrb[0].mxu0
      %1681 = vmatprep.mubr.f32.mxu0 0.0
      %1682 = vmatmul.mubr.f32.gmra.mrb[0].mxu0 %v1456
      %v1683 = vpop.f32.mrb[0].mxu0
      %v1684 = vadd.f32 %v1359, %v1683
      %v1685 = vpop.f32.mrb[0].mxu0
      %1686 = vdwg.mxu0
      %v1687 = vmax.f32 %v1529, 0.0
      %v1688 = vmax.f32 %v1534, 0.0
      %v1689 = vmax.f32 %v1539, 0.0
      %v1690 = vmax.f32 %v1544, 0.0
      %v1691 = vmax.f32 %v1549, 0.0
      %v1692 = vmax.f32 %v1554, 0.0
      %v1693 = vmax.f32 %v1559, 0.0
      %v1694 = vmax.f32 %v1564, 0.0
      %v1695 = vmax.f32 %v1569, 0.0
      %v1696 = vmax.f32 %v1574, 0.0
      %v1697 = vmax.f32 %v1579, 0.0
      %v1698 = vmax.f32 %v1584, 0.0
      %v1699 = vmax.f32 %v1589, 0.0
      %v1700 = vmax.f32 %v1594, 0.0
      %v1701 = vmax.f32 %v1599, 0.0
      %v1702 = vmax.f32 %v1604, 0.0
      %v1703 = vmax.f32 %v1609, 0.0
      %v1704 = vmax.f32 %v1614, 0.0
      %v1705 = vmax.f32 %v1619, 0.0
      %v1706 = vmax.f32 %v1624, 0.0
      %v1707 = vmax.f32 %v1629, 0.0
      %v1708 = vmax.f32 %v1634, 0.0
      %v1709 = vmax.f32 %v1639, 0.0
      %v1710 = vmax.f32 %v1644, 0.0
      %v1711 = vmax.f32 %v1649, 0.0
      %v1712 = vmax.f32 %v1654, 0.0
      %v1713 = vmax.f32 %v1659, 0.0
      %v1714 = vmax.f32 %v1664, 0.0
      %v1715 = vmax.f32 %v1669, 0.0
      %v1716 = vmax.f32 %v1674, 0.0
      %v1717 = vmax.f32 %v1679, 0.0
      %v1718 = vmax.f32 %v1684, 0.0
      %v1719 = vpack.c.bf16 %v1688, %v1687
      %v1720 = vpack.c.bf16 %v1690, %v1689
      %v1721 = vpack.c.bf16 %v1692, %v1691
      %v1722 = vpack.c.bf16 %v1694, %v1693
      %v1723 = vpack.c.bf16 %v1696, %v1695
      %v1724 = vpack.c.bf16 %v1698, %v1697
      %v1725 = vpack.c.bf16 %v1700, %v1699
      %v1726 = vpack.c.bf16 %v1702, %v1701
      %v1727 = vpack.c.bf16 %v1704, %v1703
      %v1728 = vpack.c.bf16 %v1706, %v1705
      %v1729 = vpack.c.bf16 %v1708, %v1707
      %v1730 = vpack.c.bf16 %v1710, %v1709
      %v1731 = vpack.c.bf16 %v1712, %v1711
      %v1732 = vpack.c.bf16 %v1714, %v1713
      %v1733 = vpack.c.bf16 %v1716, %v1715
      %v1734 = vpack.c.bf16 %v1718, %v1717
      %v1735 = vld [vmem:[%s5] sm:$0xf]
      %v1736 = vld [vmem:[%s5 + $0x4] sm:$0xf]
      %v1737 = vld [vmem:[%s5 + $0x8] sm:$0xf]
      %v1738 = vld [vmem:[%s5 + $0xc] sm:$0xf]
      %v1739 = vld [vmem:[%s5 + $0x10] sm:$0xf]
      %v1740 = vld [vmem:[%s5 + $0x14] sm:$0xf]
      %v1741 = vld [vmem:[%s5 + $0x18] sm:$0xf]
      %v1742 = vld [vmem:[%s5 + $0x1c] sm:$0xf]
      %v1743 = vld [vmem:[%s6] sm:$0x1]
      %v1745 = vlaneseq
      %v1746 = vshrl.u32 %v1745, 7
      %v1747 = vsub.s32 0, %v1746
      %v1748 = vrot.slane %v1743, %v1747
      %v1758 = vunpack.c.l.b16 %v1735
      %v1759 = vunpack.c.l.b16 %v1736
      %v1760 = vunpack.c.l.b16 %v1737
      %v1761 = vunpack.c.l.b16 %v1738
      %v1762 = vunpack.c.l.b16 %v1739
      %v1763 = vunpack.c.l.b16 %v1740
      %v1764 = vunpack.c.l.b16 %v1741
      %v1765 = vunpack.c.l.b16 %v1742
      %v1766 = vpack.c.b16 %v1759, %v1758
      %v1767 = vpack.c.b16 %v1761, %v1760
      %v1768 = vpack.c.b16 %v1763, %v1762
      %v1769 = vpack.c.b16 %v1765, %v1764
      %vm1774 = vcmask 523264
      %v1776 = vsel %vm1774, %v1719, 0
      %v1779 = vsel %vm1774, %v1720, 0
      %v1782 = vsel %vm1774, %v1721, 0
      %v1785 = vsel %vm1774, %v1722, 0
      %v1788 = vsel %vm1774, %v1723, 0
      %v1791 = vsel %vm1774, %v1724, 0
      %v1794 = vsel %vm1774, %v1725, 0
      %v1797 = vsel %vm1774, %v1726, 0
      %v1800 = vsel %vm1774, %v1727, 0
      %v1803 = vsel %vm1774, %v1728, 0
      %v1806 = vsel %vm1774, %v1729, 0
      %v1809 = vsel %vm1774, %v1730, 0
      %v1812 = vsel %vm1774, %v1731, 0
      %v1815 = vsel %vm1774, %v1732, 0
      %v1818 = vsel %vm1774, %v1733, 0
      %v1821 = vsel %vm1774, %v1734, 0
      %1823 = vmatprep.subr.bf16.mxu0 0
      %1824 = vmatpush1.bf16.msra.mxu0 %v1766
      %1825 = vmatprep.subr.bf16.mxu0 0
      %1826 = vmatpush1.bf16.msra.mxu0 %v1767
      %1827 = vmatprep.subr.bf16.mxu0 0
      %1828 = vmatpush1.bf16.msra.mxu0 %v1768
      %1829 = vmatprep.subr.bf16.mxu0 0
      %1830 = vmatpush1.bf16.msra.mxu0 %v1769
      %1831 = vmatprep.subr.bf16.mxu0 0
      %1832 = vmatpush1.bf16.msra.mxu0 0
      %1833 = vmatprep.subr.bf16.mxu0 0
      %1834 = vmatpush1.bf16.msra.mxu0 0
      %1835 = vmatprep.subr.bf16.mxu0 0
      %1836 = vmatpush1.bf16.msra.mxu0 0
      %1837 = vmatprep.subr.bf16.mxu0 0
      %1838 = vmatpush1.bf16.msra.mxu0 0
      %1839 = vmatprep.subr.bf16.mxu0 0
      %1840 = vmatpush1.bf16.msra.mxu0 0
      %1841 = vmatprep.subr.bf16.mxu0 0
      %1842 = vmatpush1.bf16.msra.mxu0 0
      %1843 = vmatprep.subr.bf16.mxu0 0
      %1844 = vmatpush1.bf16.msra.mxu0 0
      %1845 = vmatprep.subr.bf16.mxu0 0
      %1846 = vmatpush1.bf16.msra.mxu0 0
      %1847 = vmatprep.subr.bf16.mxu0 0
      %1848 = vmatpush1.bf16.msra.mxu0 0
      %1849 = vmatprep.subr.bf16.mxu0 0
      %1850 = vmatpush1.bf16.msra.mxu0 0
      %1851 = vmatprep.subr.bf16.mxu0 0
      %1852 = vmatpush1.bf16.msra.mxu0 0
      %1853 = vmatprep.subr.bf16.mxu0 0
      %1854 = vmatpush1.bf16.msra.mxu0 0
      %1855 = vmatprep.mubr.bf16.mxu0 0
      %1856 = vmatmul.mubr.bf16.gmra.mrb[0].mxu0 %v1776
      %v1857 = vpop.f32.mrb[0].mxu0
      %v1858 = vadd.f32 %v1748, %v1857
      %v1859 = vpop.f32.mrb[0].mxu0
      %v1860 = vpop.f32.mrb[0].mxu0
      %v1861 = vadd.f32 %v1748, %v1860
      %v1862 = vpop.f32.mrb[0].mxu0
      %1863 = vmatprep.mubr.bf16.mxu0 0
      %1864 = vmatmul.mubr.bf16.gmra.mrb[0].mxu0 %v1779
      %v1865 = vpop.f32.mrb[0].mxu0
      %v1866 = vadd.f32 %v1748, %v1865
      %v1867 = vpop.f32.mrb[0].mxu0
      %v1868 = vpop.f32.mrb[0].mxu0
      %v1869 = vadd.f32 %v1748, %v1868
      %v1870 = vpop.f32.mrb[0].mxu0
      %1871 = vmatprep.mubr.bf16.mxu0 0
      %1872 = vmatmul.mubr.bf16.gmra.mrb[0].mxu0 %v1782
      %v1873 = vpop.f32.mrb[0].mxu0
      %v1874 = vadd.f32 %v1748, %v1873
      %v1875 = vpop.f32.mrb[0].mxu0
      %v1876 = vpop.f32.mrb[0].mxu0
      %v1877 = vadd.f32 %v1748, %v1876
      %v1878 = vpop.f32.mrb[0].mxu0
      %1879 = vmatprep.mubr.bf16.mxu0 0
      %1880 = vmatmul.mubr.bf16.gmra.mrb[0].mxu0 %v1785
      %v1881 = vpop.f32.mrb[0].mxu0
      %v1882 = vadd.f32 %v1748, %v1881
      %v1883 = vpop.f32.mrb[0].mxu0
      %v1884 = vpop.f32.mrb[0].mxu0
      %v1885 = vadd.f32 %v1748, %v1884
      %v1886 = vpop.f32.mrb[0].mxu0
      %1887 = vmatprep.mubr.bf16.mxu0 0
      %1888 = vmatmul.mubr.bf16.gmra.mrb[0].mxu0 %v1788
      %v1889 = vpop.f32.mrb[0].mxu0
      %v1890 = vadd.f32 %v1748, %v1889
      %v1891 = vpop.f32.mrb[0].mxu0
      %v1892 = vpop.f32.mrb[0].mxu0
      %v1893 = vadd.f32 %v1748, %v1892
      %v1894 = vpop.f32.mrb[0].mxu0
      %1895 = vmatprep.mubr.bf16.mxu0 0
      %1896 = vmatmul.mubr.bf16.gmra.mrb[0].mxu0 %v1791
      %v1897 = vpop.f32.mrb[0].mxu0
      %v1898 = vadd.f32 %v1748, %v1897
      %v1899 = vpop.f32.mrb[0].mxu0
      %v1900 = vpop.f32.mrb[0].mxu0
      %v1901 = vadd.f32 %v1748, %v1900
      %v1902 = vpop.f32.mrb[0].mxu0
      %1903 = vmatprep.mubr.bf16.mxu0 0
      %1904 = vmatmul.mubr.bf16.gmra.mrb[0].mxu0 %v1794
      %v1905 = vpop.f32.mrb[0].mxu0
      %v1906 = vadd.f32 %v1748, %v1905
      %v1907 = vpop.f32.mrb[0].mxu0
      %v1908 = vpop.f32.mrb[0].mxu0
      %v1909 = vadd.f32 %v1748, %v1908
      %v1910 = vpop.f32.mrb[0].mxu0
      %1911 = vmatprep.mubr.bf16.mxu0 0
      %1912 = vmatmul.mubr.bf16.gmra.mrb[0].mxu0 %v1797
      %v1913 = vpop.f32.mrb[0].mxu0
      %v1914 = vadd.f32 %v1748, %v1913
      %v1915 = vpop.f32.mrb[0].mxu0
      %v1916 = vpop.f32.mrb[0].mxu0
      %v1917 = vadd.f32 %v1748, %v1916
      %v1918 = vpop.f32.mrb[0].mxu0
      %1919 = vmatprep.mubr.bf16.mxu0 0
      %1920 = vmatmul.mubr.bf16.gmra.mrb[0].mxu0 %v1800
      %v1921 = vpop.f32.mrb[0].mxu0
      %v1922 = vadd.f32 %v1748, %v1921
      %v1923 = vpop.f32.mrb[0].mxu0
      %v1924 = vpop.f32.mrb[0].mxu0
      %v1925 = vadd.f32 %v1748, %v1924
      %v1926 = vpop.f32.mrb[0].mxu0
      %1927 = vmatprep.mubr.bf16.mxu0 0
      %1928 = vmatmul.mubr.bf16.gmra.mrb[0].mxu0 %v1803
      %v1929 = vpop.f32.mrb[0].mxu0
      %v1930 = vadd.f32 %v1748, %v1929
      %v1931 = vpop.f32.mrb[0].mxu0
      %v1932 = vpop.f32.mrb[0].mxu0
      %v1933 = vadd.f32 %v1748, %v1932
      %v1934 = vpop.f32.mrb[0].mxu0
      %1935 = vmatprep.mubr.bf16.mxu0 0
      %1936 = vmatmul.mubr.bf16.gmra.mrb[0].mxu0 %v1806
      %v1937 = vpop.f32.mrb[0].mxu0
      %v1938 = vadd.f32 %v1748, %v1937
      %v1939 = vpop.f32.mrb[0].mxu0
      %v1940 = vpop.f32.mrb[0].mxu0
      %v1941 = vadd.f32 %v1748, %v1940
      %v1942 = vpop.f32.mrb[0].mxu0
      %1943 = vmatprep.mubr.bf16.mxu0 0
      %1944 = vmatmul.mubr.bf16.gmra.mrb[0].mxu0 %v1809
      %v1945 = vpop.f32.mrb[0].mxu0
      %v1946 = vadd.f32 %v1748, %v1945
      %v1947 = vpop.f32.mrb[0].mxu0
      %v1948 = vpop.f32.mrb[0].mxu0
      %v1949 = vadd.f32 %v1748, %v1948
      %v1950 = vpop.f32.mrb[0].mxu0
      %1951 = vmatprep.mubr.bf16.mxu0 0
      %1952 = vmatmul.mubr.bf16.gmra.mrb[0].mxu0 %v1812
      %v1953 = vpop.f32.mrb[0].mxu0
      %v1954 = vadd.f32 %v1748, %v1953
      %v1955 = vpop.f32.mrb[0].mxu0
      %v1956 = vpop.f32.mrb[0].mxu0
      %v1957 = vadd.f32 %v1748, %v1956
      %v1958 = vpop.f32.mrb[0].mxu0
      %1959 = vmatprep.mubr.bf16.mxu0 0
      %1960 = vmatmul.mubr.bf16.gmra.mrb[0].mxu0 %v1815
      %v1961 = vpop.f32.mrb[0].mxu0
      %v1962 = vadd.f32 %v1748, %v1961
      %v1963 = vpop.f32.mrb[0].mxu0
      %v1964 = vpop.f32.mrb[0].mxu0
      %v1965 = vadd.f32 %v1748, %v1964
      %v1966 = vpop.f32.mrb[0].mxu0
      %1967 = vmatprep.mubr.bf16.mxu0 0
      %1968 = vmatmul.mubr.bf16.gmra.mrb[0].mxu0 %v1818
      %v1969 = vpop.f32.mrb[0].mxu0
      %v1970 = vadd.f32 %v1748, %v1969
      %v1971 = vpop.f32.mrb[0].mxu0
      %v1972 = vpop.f32.mrb[0].mxu0
      %v1973 = vadd.f32 %v1748, %v1972
      %v1974 = vpop.f32.mrb[0].mxu0
      %1975 = vmatprep.mubr.bf16.mxu0 0
      %1976 = vmatmul.mubr.bf16.gmra.mrb[0].mxu0 %v1821
      %v1977 = vpop.f32.mrb[0].mxu0
      %v1978 = vadd.f32 %v1748, %v1977
      %v1979 = vpop.f32.mrb[0].mxu0
      %v1980 = vpop.f32.mrb[0].mxu0
      %v1981 = vadd.f32 %v1748, %v1980
      %v1982 = vpop.f32.mrb[0].mxu0
      %1983 = vdwg.mxu0
      %v1984 = vmax.f32 %v1858, 0.0
      %v1985 = vmax.f32 %v1861, 0.0
      %v1986 = vmax.f32 %v1866, 0.0
      %v1987 = vmax.f32 %v1869, 0.0
      %v1988 = vmax.f32 %v1874, 0.0
      %v1989 = vmax.f32 %v1877, 0.0
      %v1990 = vmax.f32 %v1882, 0.0
      %v1991 = vmax.f32 %v1885, 0.0
      %v1992 = vmax.f32 %v1890, 0.0
      %v1993 = vmax.f32 %v1893, 0.0
      %v1994 = vmax.f32 %v1898, 0.0
      %v1995 = vmax.f32 %v1901, 0.0
      %v1996 = vmax.f32 %v1906, 0.0
      %v1997 = vmax.f32 %v1909, 0.0
      %v1998 = vmax.f32 %v1914, 0.0
      %v1999 = vmax.f32 %v1917, 0.0
      %v2000 = vmax.f32 %v1922, 0.0
      %v2001 = vmax.f32 %v1925, 0.0
      %v2002 = vmax.f32 %v1930, 0.0
      %v2003 = vmax.f32 %v1933, 0.0
      %v2004 = vmax.f32 %v1938, 0.0
      %v2005 = vmax.f32 %v1941, 0.0
      %v2006 = vmax.f32 %v1946, 0.0
      %v2007 = vmax.f32 %v1949, 0.0
      %v2008 = vmax.f32 %v1954, 0.0
      %v2009 = vmax.f32 %v1957, 0.0
      %v2010 = vmax.f32 %v1962, 0.0
      %v2011 = vmax.f32 %v1965, 0.0
      %v2012 = vmax.f32 %v1970, 0.0
      %v2013 = vmax.f32 %v1973, 0.0
      %v2014 = vmax.f32 %v1978, 0.0
      %v2015 = vmax.f32 %v1981, 0.0
      %v2016 = vpack.c.bf16 %v1985, %v1984
      %v2017 = vpack.c.bf16 %v1987, %v1986
      %v2018 = vpack.c.bf16 %v1989, %v1988
      %v2019 = vpack.c.bf16 %v1991, %v1990
      %v2020 = vpack.c.bf16 %v1993, %v1992
      %v2021 = vpack.c.bf16 %v1995, %v1994
      %v2022 = vpack.c.bf16 %v1997, %v1996
      %v2023 = vpack.c.bf16 %v1999, %v1998
      %v2024 = vpack.c.bf16 %v2001, %v2000
      %v2025 = vpack.c.bf16 %v2003, %v2002
      %v2026 = vpack.c.bf16 %v2005, %v2004
      %v2027 = vpack.c.bf16 %v2007, %v2006
      %v2028 = vpack.c.bf16 %v2009, %v2008
      %v2029 = vpack.c.bf16 %v2011, %v2010
      %v2030 = vpack.c.bf16 %v2013, %v2012
      %v2031 = vpack.c.bf16 %v2015, %v2014
      %v2032 = vld [vmem:[#allocation2] sm:$0xff]
      %v2033 = vld [vmem:[#allocation2 + $0x8] sm:$0xff]
      %v2034 = vld [vmem:[#allocation2 + $0x10] sm:$0xff]
      %v2035 = vld [vmem:[#allocation2 + $0x18] sm:$0xff]
      %v2036 = vld [vmem:[#allocation2 + $0x20] sm:$0xff]
      %v2037 = vld [vmem:[#allocation2 + $0x28] sm:$0xff]
      %v2038 = vld [vmem:[#allocation2 + $0x30] sm:$0xff]
      %v2039 = vld [vmem:[#allocation2 + $0x38] sm:$0xff]
      %v2040 = vld [vmem:[#allocation2 + $0x40] sm:$0xff]
      %v2041 = vld [vmem:[#allocation2 + $0x48] sm:$0xff]
      %v2042 = vld [vmem:[#allocation2 + $0x50] sm:$0xff]
      %v2043 = vld [vmem:[#allocation2 + $0x58] sm:$0xff]
      %v2044 = vld [vmem:[#allocation2 + $0x60] sm:$0xff]
      %v2045 = vld [vmem:[#allocation2 + $0x68] sm:$0xff]
      %v2046 = vld [vmem:[#allocation2 + $0x70] sm:$0xff]
      %v2047 = vld [vmem:[#allocation2 + $0x78] sm:$0xff]
      %2048 = vmatprep.subr.bf16.mxu0 0
      %2049 = vmatpush1.bf16.xpose.msra.mxu0 %v2032
      %2050 = vmatprep.subr.bf16.mxu0 0
      %2051 = vmatpush1.bf16.xpose.msra.mxu0 %v2033
      %2052 = vmatprep.subr.bf16.mxu0 0
      %2053 = vmatpush1.bf16.xpose.msra.mxu0 %v2034
      %2054 = vmatprep.subr.bf16.mxu0 0
      %2055 = vmatpush1.bf16.xpose.msra.mxu0 %v2035
      %2056 = vmatprep.subr.bf16.mxu0 0
      %2057 = vmatpush1.bf16.xpose.msra.mxu0 %v2036
      %2058 = vmatprep.subr.bf16.mxu0 0
      %2059 = vmatpush1.bf16.xpose.msra.mxu0 %v2037
      %2060 = vmatprep.subr.bf16.mxu0 0
      %2061 = vmatpush1.bf16.xpose.msra.mxu0 %v2038
      %2062 = vmatprep.subr.bf16.mxu0 0
      %2063 = vmatpush1.bf16.xpose.msra.mxu0 %v2039
      %2064 = vmatprep.subr.bf16.mxu0 0
      %2065 = vmatpush1.bf16.xpose.msra.mxu0 %v2040
      %2066 = vmatprep.subr.bf16.mxu0 0
      %2067 = vmatpush1.bf16.xpose.msra.mxu0 %v2041
      %2068 = vmatprep.subr.bf16.mxu0 0
      %2069 = vmatpush1.bf16.xpose.msra.mxu0 %v2042
      %2070 = vmatprep.subr.bf16.mxu0 0
      %2071 = vmatpush1.bf16.xpose.msra.mxu0 %v2043
      %2072 = vmatprep.subr.bf16.mxu0 0
      %2073 = vmatpush1.bf16.xpose.msra.mxu0 %v2044
      %2074 = vmatprep.subr.bf16.mxu0 0
      %2075 = vmatpush1.bf16.xpose.msra.mxu0 %v2045
      %2076 = vmatprep.subr.bf16.mxu0 0
      %2077 = vmatpush1.bf16.xpose.msra.mxu0 %v2046
      %2078 = vmatprep.subr.bf16.mxu0 0
      %2079 = vmatpush1.bf16.xpose.msra.mxu0 %v2047
      %2080 = vmatprep.mubr.bf16.mxu0 0
      %2081 = vmatmul.mubr.bf16.gmra.mrb[0].mxu0 %v2016
      %v2082 = vpop.f32.mrb[0].mxu0
      %v2083 = vadd.f32 0.0, %v2082
      %v2084 = vpop.f32.mrb[0].mxu0
      %v2085 = vadd.f32 0.0, %v2084
      %v2086 = vpop.f32.mrb[0].mxu0
      %v2087 = vadd.f32 0.0, %v2086
      %v2088 = vpop.f32.mrb[0].mxu0
      %v2089 = vadd.f32 0.0, %v2088
      %2090 = vmatprep.mubr.bf16.mxu0 0
      %2091 = vmatmul.mubr.bf16.gmra.mrb[0].mxu0 %v2017
      %v2092 = vpop.f32.mrb[0].mxu0
      %v2093 = vadd.f32 0.0, %v2092
      %v2094 = vpop.f32.mrb[0].mxu0
      %v2095 = vadd.f32 0.0, %v2094
      %v2096 = vpop.f32.mrb[0].mxu0
      %v2097 = vadd.f32 0.0, %v2096
      %v2098 = vpop.f32.mrb[0].mxu0
      %v2099 = vadd.f32 0.0, %v2098
      %2100 = vmatprep.mubr.bf16.mxu0 0
      %2101 = vmatmul.mubr.bf16.gmra.mrb[0].mxu0 %v2018
      %v2102 = vpop.f32.mrb[0].mxu0
      %v2103 = vadd.f32 0.0, %v2102
      %v2104 = vpop.f32.mrb[0].mxu0
      %v2105 = vadd.f32 0.0, %v2104
      %v2106 = vpop.f32.mrb[0].mxu0
      %v2107 = vadd.f32 0.0, %v2106
      %v2108 = vpop.f32.mrb[0].mxu0
      %v2109 = vadd.f32 0.0, %v2108
      %2110 = vmatprep.mubr.bf16.mxu0 0
      %2111 = vmatmul.mubr.bf16.gmra.mrb[0].mxu0 %v2019
      %v2112 = vpop.f32.mrb[0].mxu0
      %v2113 = vadd.f32 0.0, %v2112
      %v2114 = vpop.f32.mrb[0].mxu0
      %v2115 = vadd.f32 0.0, %v2114
      %v2116 = vpop.f32.mrb[0].mxu0
      %v2117 = vadd.f32 0.0, %v2116
      %v2118 = vpop.f32.mrb[0].mxu0
      %v2119 = vadd.f32 0.0, %v2118
      %2120 = vmatprep.mubr.bf16.mxu0 0
      %2121 = vmatmul.mubr.bf16.gmra.mrb[0].mxu0 %v2020
      %v2122 = vpop.f32.mrb[0].mxu0
      %v2123 = vadd.f32 0.0, %v2122
      %v2124 = vpop.f32.mrb[0].mxu0
      %v2125 = vadd.f32 0.0, %v2124
      %v2126 = vpop.f32.mrb[0].mxu0
      %v2127 = vadd.f32 0.0, %v2126
      %v2128 = vpop.f32.mrb[0].mxu0
      %v2129 = vadd.f32 0.0, %v2128
      %2130 = vmatprep.mubr.bf16.mxu0 0
      %2131 = vmatmul.mubr.bf16.gmra.mrb[0].mxu0 %v2021
      %v2132 = vpop.f32.mrb[0].mxu0
      %v2133 = vadd.f32 0.0, %v2132
      %v2134 = vpop.f32.mrb[0].mxu0
      %v2135 = vadd.f32 0.0, %v2134
      %v2136 = vpop.f32.mrb[0].mxu0
      %v2137 = vadd.f32 0.0, %v2136
      %v2138 = vpop.f32.mrb[0].mxu0
      %v2139 = vadd.f32 0.0, %v2138
      %2140 = vmatprep.mubr.bf16.mxu0 0
      %2141 = vmatmul.mubr.bf16.gmra.mrb[0].mxu0 %v2022
      %v2142 = vpop.f32.mrb[0].mxu0
      %v2143 = vadd.f32 0.0, %v2142
      %v2144 = vpop.f32.mrb[0].mxu0
      %v2145 = vadd.f32 0.0, %v2144
      %v2146 = vpop.f32.mrb[0].mxu0
      %v2147 = vadd.f32 0.0, %v2146
      %v2148 = vpop.f32.mrb[0].mxu0
      %v2149 = vadd.f32 0.0, %v2148
      %2150 = vmatprep.mubr.bf16.mxu0 0
      %2151 = vmatmul.mubr.bf16.gmra.mrb[0].mxu0 %v2023
      %v2152 = vpop.f32.mrb[0].mxu0
      %v2153 = vadd.f32 0.0, %v2152
      %v2154 = vpop.f32.mrb[0].mxu0
      %v2155 = vadd.f32 0.0, %v2154
      %v2156 = vpop.f32.mrb[0].mxu0
      %v2157 = vadd.f32 0.0, %v2156
      %v2158 = vpop.f32.mrb[0].mxu0
      %v2159 = vadd.f32 0.0, %v2158
      %2160 = vmatprep.mubr.bf16.mxu0 0
      %2161 = vmatmul.mubr.bf16.gmra.mrb[0].mxu0 %v2024
      %v2162 = vpop.f32.mrb[0].mxu0
      %v2163 = vadd.f32 0.0, %v2162
      %v2164 = vpop.f32.mrb[0].mxu0
      %v2165 = vadd.f32 0.0, %v2164
      %v2166 = vpop.f32.mrb[0].mxu0
      %v2167 = vadd.f32 0.0, %v2166
      %v2168 = vpop.f32.mrb[0].mxu0
      %v2169 = vadd.f32 0.0, %v2168
      %2170 = vmatprep.mubr.bf16.mxu0 0
      %2171 = vmatmul.mubr.bf16.gmra.mrb[0].mxu0 %v2025
      %v2172 = vpop.f32.mrb[0].mxu0
      %v2173 = vadd.f32 0.0, %v2172
      %v2174 = vpop.f32.mrb[0].mxu0
      %v2175 = vadd.f32 0.0, %v2174
      %v2176 = vpop.f32.mrb[0].mxu0
      %v2177 = vadd.f32 0.0, %v2176
      %v2178 = vpop.f32.mrb[0].mxu0
      %v2179 = vadd.f32 0.0, %v2178
      %2180 = vmatprep.mubr.bf16.mxu0 0
      %2181 = vmatmul.mubr.bf16.gmra.mrb[0].mxu0 %v2026
      %v2182 = vpop.f32.mrb[0].mxu0
      %v2183 = vadd.f32 0.0, %v2182
      %v2184 = vpop.f32.mrb[0].mxu0
      %v2185 = vadd.f32 0.0, %v2184
      %v2186 = vpop.f32.mrb[0].mxu0
      %v2187 = vadd.f32 0.0, %v2186
      %v2188 = vpop.f32.mrb[0].mxu0
      %v2189 = vadd.f32 0.0, %v2188
      %2190 = vmatprep.mubr.bf16.mxu0 0
      %2191 = vmatmul.mubr.bf16.gmra.mrb[0].mxu0 %v2027
      %v2192 = vpop.f32.mrb[0].mxu0
      %v2193 = vadd.f32 0.0, %v2192
      %v2194 = vpop.f32.mrb[0].mxu0
      %v2195 = vadd.f32 0.0, %v2194
      %v2196 = vpop.f32.mrb[0].mxu0
      %v2197 = vadd.f32 0.0, %v2196
      %v2198 = vpop.f32.mrb[0].mxu0
      %v2199 = vadd.f32 0.0, %v2198
      %2200 = vmatprep.mubr.bf16.mxu0 0
      %2201 = vmatmul.mubr.bf16.gmra.mrb[0].mxu0 %v2028
      %v2202 = vpop.f32.mrb[0].mxu0
      %v2203 = vadd.f32 0.0, %v2202
      %v2204 = vpop.f32.mrb[0].mxu0
      %v2205 = vadd.f32 0.0, %v2204
      %v2206 = vpop.f32.mrb[0].mxu0
      %v2207 = vadd.f32 0.0, %v2206
      %v2208 = vpop.f32.mrb[0].mxu0
      %v2209 = vadd.f32 0.0, %v2208
      %2210 = vmatprep.mubr.bf16.mxu0 0
      %2211 = vmatmul.mubr.bf16.gmra.mrb[0].mxu0 %v2029
      %v2212 = vpop.f32.mrb[0].mxu0
      %v2213 = vadd.f32 0.0, %v2212
      %v2214 = vpop.f32.mrb[0].mxu0
      %v2215 = vadd.f32 0.0, %v2214
      %v2216 = vpop.f32.mrb[0].mxu0
      %v2217 = vadd.f32 0.0, %v2216
      %v2218 = vpop.f32.mrb[0].mxu0
      %v2219 = vadd.f32 0.0, %v2218
      %2220 = vmatprep.mubr.bf16.mxu0 0
      %2221 = vmatmul.mubr.bf16.gmra.mrb[0].mxu0 %v2030
      %v2222 = vpop.f32.mrb[0].mxu0
      %v2223 = vadd.f32 0.0, %v2222
      %v2224 = vpop.f32.mrb[0].mxu0
      %v2225 = vadd.f32 0.0, %v2224
      %v2226 = vpop.f32.mrb[0].mxu0
      %v2227 = vadd.f32 0.0, %v2226
      %v2228 = vpop.f32.mrb[0].mxu0
      %v2229 = vadd.f32 0.0, %v2228
      %2230 = vmatprep.mubr.bf16.mxu0 0
      %2231 = vmatmul.mubr.bf16.gmra.mrb[0].mxu0 %v2031
      %v2232 = vpop.f32.mrb[0].mxu0
      %v2233 = vadd.f32 0.0, %v2232
      %v2234 = vpop.f32.mrb[0].mxu0
      %v2235 = vadd.f32 0.0, %v2234
      %v2236 = vpop.f32.mrb[0].mxu0
      %v2237 = vadd.f32 0.0, %v2236
      %v2238 = vpop.f32.mrb[0].mxu0
      %v2239 = vadd.f32 0.0, %v2238
      %2240 = vdwg.mxu0
      %v2241 = vld [vmem:[#allocation3] sm:$0x3]
      %v2242 = vmax.f32 %v2083, %v2093
      %v2243 = vmax.f32 %v2087, %v2097
      %v2244 = vmax.f32 %v2242, %v2103
      %v2245 = vmax.f32 %v2243, %v2107
      %v2246 = vmax.f32 %v2244, %v2113
      %v2247 = vmax.f32 %v2245, %v2117
      %v2248 = vmax.f32 %v2246, %v2123
      %v2249 = vmax.f32 %v2247, %v2127
      %v2250 = vmax.f32 %v2248, %v2133
      %v2251 = vmax.f32 %v2249, %v2137
      %v2252 = vmax.f32 %v2250, %v2143
      %v2253 = vmax.f32 %v2251, %v2147
      %v2254 = vmax.f32 %v2252, %v2153
      %v2255 = vmax.f32 %v2253, %v2157
      %v2256 = vmax.f32 %v2254, %v2163
      %v2257 = vmax.f32 %v2255, %v2167
      %v2258 = vmax.f32 %v2256, %v2173
      %v2259 = vmax.f32 %v2257, %v2177
      %v2260 = vmax.f32 %v2258, %v2183
      %v2261 = vmax.f32 %v2259, %v2187
      %v2262 = vmax.f32 %v2260, %v2193
      %v2263 = vmax.f32 %v2261, %v2197
      %v2264 = vmax.f32 %v2262, %v2203
      %v2265 = vmax.f32 %v2263, %v2207
      %v2266 = vmax.f32 %v2264, %v2213
      %v2267 = vmax.f32 %v2265, %v2217
      %v2268 = vmax.f32 %v2266, %v2223
      %v2269 = vmax.f32 %v2267, %v2227
      %v2270 = vmax.f32 %v2268, %v2233
      %v2271 = vmax.f32 %v2269, %v2237
      %v2272 = vmax.f32 %v2270, %v2271
      %v2273 = vrot.slane %v2272, 4
      %v2274 = vmax.f32 %v2272, %v2273
      %v2275 = vrot.slane %v2274, 2
      %v2276 = vmax.f32 %v2274, %v2275
      %v2277 = vrot.slane %v2276, 1
      %v2278 = vmax.f32 %v2276, %v2277
      %v2279 = vmax.f32 %v2085, %v2095
      %v2280 = vmax.f32 %v2089, %v2099
      %v2281 = vmax.f32 %v2279, %v2105
      %v2282 = vmax.f32 %v2280, %v2109
      %v2283 = vmax.f32 %v2281, %v2115
      %v2284 = vmax.f32 %v2282, %v2119
      %v2285 = vmax.f32 %v2283, %v2125
      %v2286 = vmax.f32 %v2284, %v2129
      %v2287 = vmax.f32 %v2285, %v2135
      %v2288 = vmax.f32 %v2286, %v2139
      %v2289 = vmax.f32 %v2287, %v2145
      %v2290 = vmax.f32 %v2288, %v2149
      %v2291 = vmax.f32 %v2289, %v2155
      %v2292 = vmax.f32 %v2290, %v2159
      %v2293 = vmax.f32 %v2291, %v2165
      %v2294 = vmax.f32 %v2292, %v2169
      %v2295 = vmax.f32 %v2293, %v2175
      %v2296 = vmax.f32 %v2294, %v2179
      %v2297 = vmax.f32 %v2295, %v2185
      %v2298 = vmax.f32 %v2296, %v2189
      %v2299 = vmax.f32 %v2297, %v2195
      %v2300 = vmax.f32 %v2298, %v2199
      %v2301 = vmax.f32 %v2299, %v2205
      %v2302 = vmax.f32 %v2300, %v2209
      %v2303 = vmax.f32 %v2301, %v2215
      %v2304 = vmax.f32 %v2302, %v2219
      %v2305 = vmax.f32 %v2303, %v2225
      %v2306 = vmax.f32 %v2304, %v2229
      %v2307 = vmax.f32 %v2305, %v2235
      %v2308 = vmax.f32 %v2306, %v2239
      %v2309 = vmax.f32 %v2307, %v2308
      %v2310 = vrot.slane %v2309, 4
      %v2311 = vmax.f32 %v2309, %v2310
      %v2312 = vrot.slane %v2311, 2
      %v2313 = vmax.f32 %v2311, %v2312
      %v2314 = vrot.slane %v2313, 1
      %v2315 = vmax.f32 %v2313, %v2314
      %v2318 = vcombine.low %v2278, %v2315
      %v2320 = vunpack.c.l.s4 1966171168
      %v2321 = vunpack.c.0.s8 %v2320
      %v2322 = vlaneseq
      %v2323 = vshrl.u32 %v2322, 7
      %v2324 = vsub.s32 %v2321, %v2323
      %v2325 = vrot.slane %v2318, %v2324
      %v2327 = vunpack.c.l.s4 1966171168
      %v2328 = vunpack.c.0.s8 %v2327
      %v2329 = vlaneseq
      %v2330 = vshrl.u32 %v2329, 7
      %v2331 = vsub.s32 %v2328, %v2330
      %v2332 = vrot.slane %v2325, %v2331
      %v2334 = vmax.f32 %v2241, %v2332
      %v2335 = vsub.f32 %v2241, %v2334
      %v2336 = vmul.f32 %v2335, 1.442695
      %v2337 = vpow.pop %v2336
      %v2339 = vlaneseq
      %v2340 = vshrl.u32 %v2339, 7
      %v2341 = vsub.s32 0, %v2340
      %v2342 = vrot.slane %v2334, %v2341
      %v2343 = vlaneseq
      %v2344 = vshrl.u32 %v2343, 7
      %v2345 = vsub.s32 1, %v2344
      %v2346 = vrot.slane %v2334, %v2345
      %v2349 = vsub.f32 %v2083, %v2342
      %v2350 = vsub.f32 %v2085, %v2346
      %v2351 = vsub.f32 %v2087, %v2342
      %v2352 = vsub.f32 %v2089, %v2346
      %v2353 = vsub.f32 %v2093, %v2342
      %v2354 = vsub.f32 %v2095, %v2346
      %v2355 = vsub.f32 %v2097, %v2342
      %v2356 = vsub.f32 %v2099, %v2346
      %v2357 = vsub.f32 %v2103, %v2342
      %v2358 = vsub.f32 %v2105, %v2346
      %v2359 = vsub.f32 %v2107, %v2342
      %v2360 = vsub.f32 %v2109, %v2346
      %v2361 = vsub.f32 %v2113, %v2342
      %v2362 = vsub.f32 %v2115, %v2346
      %v2363 = vsub.f32 %v2117, %v2342
      %v2364 = vsub.f32 %v2119, %v2346
      %v2365 = vsub.f32 %v2123, %v2342
      %v2366 = vsub.f32 %v2125, %v2346
      %v2367 = vsub.f32 %v2127, %v2342
      %v2368 = vsub.f32 %v2129, %v2346
      %v2369 = vsub.f32 %v2133, %v2342
      %v2370 = vsub.f32 %v2135, %v2346
      %v2371 = vsub.f32 %v2137, %v2342
      %v2372 = vsub.f32 %v2139, %v2346
      %v2373 = vsub.f32 %v2143, %v2342
      %v2374 = vsub.f32 %v2145, %v2346
      %v2375 = vsub.f32 %v2147, %v2342
      %v2376 = vsub.f32 %v2149, %v2346
      %v2377 = vsub.f32 %v2153, %v2342
      %v2378 = vsub.f32 %v2155, %v2346
      %v2379 = vsub.f32 %v2157, %v2342
      %v2380 = vsub.f32 %v2159, %v2346
      %v2381 = vsub.f32 %v2163, %v2342
      %v2382 = vsub.f32 %v2165, %v2346
      %v2383 = vsub.f32 %v2167, %v2342
      %v2384 = vsub.f32 %v2169, %v2346
      %v2385 = vsub.f32 %v2173, %v2342
      %v2386 = vsub.f32 %v2175, %v2346
      %v2387 = vsub.f32 %v2177, %v2342
      %v2388 = vsub.f32 %v2179, %v2346
      %v2389 = vsub.f32 %v2183, %v2342
      %v2390 = vsub.f32 %v2185, %v2346
      %v2391 = vsub.f32 %v2187, %v2342
      %v2392 = vsub.f32 %v2189, %v2346
      %v2393 = vsub.f32 %v2193, %v2342
      %v2394 = vsub.f32 %v2195, %v2346
      %v2395 = vsub.f32 %v2197, %v2342
      %v2396 = vsub.f32 %v2199, %v2346
      %v2397 = vsub.f32 %v2203, %v2342
      %v2398 = vsub.f32 %v2205, %v2346
      %v2399 = vsub.f32 %v2207, %v2342
      %v2400 = vsub.f32 %v2209, %v2346
      %v2401 = vsub.f32 %v2213, %v2342
      %v2402 = vsub.f32 %v2215, %v2346
      %v2403 = vsub.f32 %v2217, %v2342
      %v2404 = vsub.f32 %v2219, %v2346
      %v2405 = vsub.f32 %v2223, %v2342
      %v2406 = vsub.f32 %v2225, %v2346
      %v2407 = vsub.f32 %v2227, %v2342
      %v2408 = vsub.f32 %v2229, %v2346
      %v2409 = vsub.f32 %v2233, %v2342
      %v2410 = vsub.f32 %v2235, %v2346
      %v2411 = vsub.f32 %v2237, %v2342
      %v2412 = vsub.f32 %v2239, %v2346
      %v2413 = vmul.f32 %v2349, 1.442695
      %v2414 = vpow.pop %v2413
      %v2415 = vmul.f32 %v2350, 1.442695
      %v2416 = vpow.pop %v2415
      %v2417 = vmul.f32 %v2351, 1.442695
      %v2418 = vpow.pop %v2417
      %v2419 = vmul.f32 %v2352, 1.442695
      %v2420 = vpow.pop %v2419
      %v2421 = vmul.f32 %v2353, 1.442695
      %v2422 = vpow.pop %v2421
      %v2423 = vmul.f32 %v2354, 1.442695
      %v2424 = vpow.pop %v2423
      %v2425 = vmul.f32 %v2355, 1.442695
      %v2426 = vpow.pop %v2425
      %v2427 = vmul.f32 %v2356, 1.442695
      %v2428 = vpow.pop %v2427
      %v2429 = vmul.f32 %v2357, 1.442695
      %v2430 = vpow.pop %v2429
      %v2431 = vmul.f32 %v2358, 1.442695
      %v2432 = vpow.pop %v2431
      %v2433 = vmul.f32 %v2359, 1.442695
      %v2434 = vpow.pop %v2433
      %v2435 = vmul.f32 %v2360, 1.442695
      %v2436 = vpow.pop %v2435
      %v2437 = vmul.f32 %v2361, 1.442695
      %v2438 = vpow.pop %v2437
      %v2439 = vmul.f32 %v2362, 1.442695
      %v2440 = vpow.pop %v2439
      %v2441 = vmul.f32 %v2363, 1.442695
      %v2442 = vpow.pop %v2441
      %v2443 = vmul.f32 %v2364, 1.442695
      %v2444 = vpow.pop %v2443
      %v2445 = vmul.f32 %v2365, 1.442695
      %v2446 = vpow.pop %v2445
      %v2447 = vmul.f32 %v2366, 1.442695
      %v2448 = vpow.pop %v2447
      %v2449 = vmul.f32 %v2367, 1.442695
      %v2450 = vpow.pop %v2449
      %v2451 = vmul.f32 %v2368, 1.442695
      %v2452 = vpow.pop %v2451
      %v2453 = vmul.f32 %v2369, 1.442695
      %v2454 = vpow.pop %v2453
      %v2455 = vmul.f32 %v2370, 1.442695
      %v2456 = vpow.pop %v2455
      %v2457 = vmul.f32 %v2371, 1.442695
      %v2458 = vpow.pop %v2457
      %v2459 = vmul.f32 %v2372, 1.442695
      %v2460 = vpow.pop %v2459
      %v2461 = vmul.f32 %v2373, 1.442695
      %v2462 = vpow.pop %v2461
      %v2463 = vmul.f32 %v2374, 1.442695
      %v2464 = vpow.pop %v2463
      %v2465 = vmul.f32 %v2375, 1.442695
      %v2466 = vpow.pop %v2465
      %v2467 = vmul.f32 %v2376, 1.442695
      %v2468 = vpow.pop %v2467
      %v2469 = vmul.f32 %v2377, 1.442695
      %v2470 = vpow.pop %v2469
      %v2471 = vmul.f32 %v2378, 1.442695
      %v2472 = vpow.pop %v2471
      %v2473 = vmul.f32 %v2379, 1.442695
      %v2474 = vpow.pop %v2473
      %v2475 = vmul.f32 %v2380, 1.442695
      %v2476 = vpow.pop %v2475
      %v2477 = vmul.f32 %v2381, 1.442695
      %v2478 = vpow.pop %v2477
      %v2479 = vmul.f32 %v2382, 1.442695
      %v2480 = vpow.pop %v2479
      %v2481 = vmul.f32 %v2383, 1.442695
      %v2482 = vpow.pop %v2481
      %v2483 = vmul.f32 %v2384, 1.442695
      %v2484 = vpow.pop %v2483
      %v2485 = vmul.f32 %v2385, 1.442695
      %v2486 = vpow.pop %v2485
      %v2487 = vmul.f32 %v2386, 1.442695
      %v2488 = vpow.pop %v2487
      %v2489 = vmul.f32 %v2387, 1.442695
      %v2490 = vpow.pop %v2489
      %v2491 = vmul.f32 %v2388, 1.442695
      %v2492 = vpow.pop %v2491
      %v2493 = vmul.f32 %v2389, 1.442695
      %v2494 = vpow.pop %v2493
      %v2495 = vmul.f32 %v2390, 1.442695
      %v2496 = vpow.pop %v2495
      %v2497 = vmul.f32 %v2391, 1.442695
      %v2498 = vpow.pop %v2497
      %v2499 = vmul.f32 %v2392, 1.442695
      %v2500 = vpow.pop %v2499
      %v2501 = vmul.f32 %v2393, 1.442695
      %v2502 = vpow.pop %v2501
      %v2503 = vmul.f32 %v2394, 1.442695
      %v2504 = vpow.pop %v2503
      %v2505 = vmul.f32 %v2395, 1.442695
      %v2506 = vpow.pop %v2505
      %v2507 = vmul.f32 %v2396, 1.442695
      %v2508 = vpow.pop %v2507
      %v2509 = vmul.f32 %v2397, 1.442695
      %v2510 = vpow.pop %v2509
      %v2511 = vmul.f32 %v2398, 1.442695
      %v2512 = vpow.pop %v2511
      %v2513 = vmul.f32 %v2399, 1.442695
      %v2514 = vpow.pop %v2513
      %v2515 = vmul.f32 %v2400, 1.442695
      %v2516 = vpow.pop %v2515
      %v2517 = vmul.f32 %v2401, 1.442695
      %v2518 = vpow.pop %v2517
      %v2519 = vmul.f32 %v2402, 1.442695
      %v2520 = vpow.pop %v2519
      %v2521 = vmul.f32 %v2403, 1.442695
      %v2522 = vpow.pop %v2521
      %v2523 = vmul.f32 %v2404, 1.442695
      %v2524 = vpow.pop %v2523
      %v2525 = vmul.f32 %v2405, 1.442695
      %v2526 = vpow.pop %v2525
      %v2527 = vmul.f32 %v2406, 1.442695
      %v2528 = vpow.pop %v2527
      %v2529 = vmul.f32 %v2407, 1.442695
      %v2530 = vpow.pop %v2529
      %v2531 = vmul.f32 %v2408, 1.442695
      %v2532 = vpow.pop %v2531
      %v2533 = vmul.f32 %v2409, 1.442695
      %v2534 = vpow.pop %v2533
      %v2535 = vmul.f32 %v2410, 1.442695
      %v2536 = vpow.pop %v2535
      %v2537 = vmul.f32 %v2411, 1.442695
      %v2538 = vpow.pop %v2537
      %v2539 = vmul.f32 %v2412, 1.442695
      %v2540 = vpow.pop %v2539
      %v2541 = vpack.c.bf16 %v2418, %v2414
      %v2542 = vpack.c.bf16 %v2420, %v2416
      %v2543 = vpack.c.bf16 %v2426, %v2422
      %v2544 = vpack.c.bf16 %v2428, %v2424
      %v2545 = vpack.c.bf16 %v2434, %v2430
      %v2546 = vpack.c.bf16 %v2436, %v2432
      %v2547 = vpack.c.bf16 %v2442, %v2438
      %v2548 = vpack.c.bf16 %v2444, %v2440
      %v2549 = vpack.c.bf16 %v2450, %v2446
      %v2550 = vpack.c.bf16 %v2452, %v2448
      %v2551 = vpack.c.bf16 %v2458, %v2454
      %v2552 = vpack.c.bf16 %v2460, %v2456
      %v2553 = vpack.c.bf16 %v2466, %v2462
      %v2554 = vpack.c.bf16 %v2468, %v2464
      %v2555 = vpack.c.bf16 %v2474, %v2470
      %v2556 = vpack.c.bf16 %v2476, %v2472
      %v2557 = vpack.c.bf16 %v2482, %v2478
      %v2558 = vpack.c.bf16 %v2484, %v2480
      %v2559 = vpack.c.bf16 %v2490, %v2486
      %v2560 = vpack.c.bf16 %v2492, %v2488
      %v2561 = vpack.c.bf16 %v2498, %v2494
      %v2562 = vpack.c.bf16 %v2500, %v2496
      %v2563 = vpack.c.bf16 %v2506, %v2502
      %v2564 = vpack.c.bf16 %v2508, %v2504
      %v2565 = vpack.c.bf16 %v2514, %v2510
      %v2566 = vpack.c.bf16 %v2516, %v2512
      %v2567 = vpack.c.bf16 %v2522, %v2518
      %v2568 = vpack.c.bf16 %v2524, %v2520
      %v2569 = vpack.c.bf16 %v2530, %v2526
      %v2570 = vpack.c.bf16 %v2532, %v2528
      %v2571 = vpack.c.bf16 %v2538, %v2534
      %v2572 = vpack.c.bf16 %v2540, %v2536
      %v2573 = vld [vmem:[#allocation4] sm:$0xff]
      %v2575 = vlaneseq
      %v2576 = vshrl.u32 %v2575, 7
      %v2577 = vsub.s32 0, %v2576
      %v2578 = vrot.slane %v2337, %v2577
      %v2579 = vlaneseq
      %v2580 = vshrl.u32 %v2579, 7
      %v2581 = vsub.s32 1, %v2580
      %v2582 = vrot.slane %v2337, %v2581
      %v2586 = vcombine.high %v2573, %v2573
      %v2588 = vmul.f32 %v2578, %v2573
      %v2589 = vmul.f32 %v2582, %v2586
      %v2590 = vld [vmem:[%s561] sm:$0xf]
      %v2593 = vunpack.c.l.s4 1983009808
      %v2594 = vunpack.c.0.s8 %v2593
      %v2595 = vlaneseq
      %v2596 = vshrl.u32 %v2595, 7
      %v2597 = vsub.s32 %v2594, %v2596
      %v2598 = vrot.slane %v2590, %v2597
      %v2599 = vcombine.high %v2598, %v2598
      %2602 = vmatprep.subr.bf16.mxu0 %v2542
      %2603 = vmatpush1.bf16.msra.mxu0 %v2541
      %2604 = vmatprep.subr.bf16.mxu0 %v2544
      %2605 = vmatpush1.bf16.msra.mxu0 %v2543
      %2606 = vmatprep.subr.bf16.mxu0 %v2546
      %2607 = vmatpush1.bf16.msra.mxu0 %v2545
      %2608 = vmatprep.subr.bf16.mxu0 %v2548
      %2609 = vmatpush1.bf16.msra.mxu0 %v2547
      %2610 = vmatprep.subr.bf16.mxu0 %v2550
      %2611 = vmatpush1.bf16.msra.mxu0 %v2549
      %2612 = vmatprep.subr.bf16.mxu0 %v2552
      %2613 = vmatpush1.bf16.msra.mxu0 %v2551
      %2614 = vmatprep.subr.bf16.mxu0 %v2554
      %2615 = vmatpush1.bf16.msra.mxu0 %v2553
      %2616 = vmatprep.subr.bf16.mxu0 %v2556
      %2617 = vmatpush1.bf16.msra.mxu0 %v2555
      %2618 = vmatprep.subr.bf16.mxu0 %v2558
      %2619 = vmatpush1.bf16.msra.mxu0 %v2557
      %2620 = vmatprep.subr.bf16.mxu0 %v2560
      %2621 = vmatpush1.bf16.msra.mxu0 %v2559
      %2622 = vmatprep.subr.bf16.mxu0 %v2562
      %2623 = vmatpush1.bf16.msra.mxu0 %v2561
      %2624 = vmatprep.subr.bf16.mxu0 %v2564
      %2625 = vmatpush1.bf16.msra.mxu0 %v2563
      %2626 = vmatprep.subr.bf16.mxu0 %v2566
      %2627 = vmatpush1.bf16.msra.mxu0 %v2565
      %2628 = vmatprep.subr.bf16.mxu0 %v2568
      %2629 = vmatpush1.bf16.msra.mxu0 %v2567
      %2630 = vmatprep.subr.bf16.mxu0 %v2570
      %2631 = vmatpush1.bf16.msra.mxu0 %v2569
      %2632 = vmatprep.subr.bf16.mxu0 %v2572
      %2633 = vmatpush1.bf16.msra.mxu0 %v2571
      %2634 = vmatprep.mubr.bf16.mxu0 %v2599
      %2635 = vmatmul.mubr.bf16.gmra.mrb[0].mxu0 %v2598
      %v2636 = vpop.f32.mrb[0].mxu0
      %v2637 = vadd.f32 0.0, %v2636
      %v2638 = vpop.f32.mrb[0].mxu0
      %v2639 = vadd.f32 0.0, %v2638
      %v2640 = vpop.f32.mrb[0].mxu0
      %v2641 = vpop.f32.mrb[0].mxu0
      %2642 = vdwg.mxu0
      %v2643 = vadd.f32 %v2588, %v2637
      %v2644 = vadd.f32 %v2589, %v2639
      %v2647 = vcombine.low %v2643, %v2644
      %2649 = vst [vmem:[#allocation4] sm:$0xff] %v2647
      %v2650 = vlaneseq
      %vm2651 = vcmp.ge.s32.totalorder %v2650, 0
      %vm2652 = vcmp.lt.s32.totalorder %v2650, 256
      %vm2653 = vmand %vm2651, %vm2652
      %2654 = vst.msk [vmem:[#allocation3] sm:$0x3] %vm2653, %v2334
      // Predicated region
      $region73: #{tpu_custom_call.1} parent=67 // pred_check
        %p2655 = pneg %p584
      $region74: #{tpu_custom_call.1} parent=67 // pred_check_branch
        %2657 = sbr.rel (%p2655) target = $region76
      $region75: #{tpu_custom_call.1} parent=67 // pred_region
        %v2658 = vld [vmem:[#allocation4] sm:$0xff]
        %v2659 = vrcp.pop %v2658
        %v2661 = vlaneseq
        %v2662 = vshrl.u32 %v2661, 7
        %v2663 = vsub.s32 3, %v2662
        %v2664 = vrot.slane %v2659, %v2663
        %v2665 = vlaneseq
        %v2666 = vshrl.u32 %v2665, 7
        %v2667 = vsub.s32 7, %v2666
        %v2668 = vrot.slane %v2659, %v2667
        %v2671 = vlaneseq
        %v2672 = vshrl.u32 %v2671, 7
        %v2673 = vsub.s32 3, %v2672
        %v2674 = vrot.slane %v2664, %v2673
        %v2675 = vlaneseq
        %v2676 = vshrl.u32 %v2675, 7
        %v2677 = vsub.s32 3, %v2676
        %v2678 = vrot.slane %v2668, %v2677
        %v2681 = vcombine.low %v2674, %v2678
        %v2683 = vmul.f32 %v2658, %v2681
        %v2684 = vld [vmem:[%s7] sm:$0xf]
        %v2685 = vld [vmem:[%s7 + $0x4] sm:$0xf]
        %v2686 = vld [vmem:[%s7 + $0x8] sm:$0xf]
        %v2687 = vld [vmem:[%s7 + $0xc] sm:$0xf]
        %v2688 = vld [vmem:[%s7 + $0x10] sm:$0xf]
        %v2689 = vld [vmem:[%s7 + $0x14] sm:$0xf]
        %v2690 = vld [vmem:[%s7 + $0x18] sm:$0xf]
        %v2691 = vld [vmem:[%s7 + $0x1c] sm:$0xf]
        %v2692 = vld [vmem:[%s8] sm:$0xf]
        %v2693 = vld [vmem:[%s8 + $0x4] sm:$0xf]
        %v2694 = vld [vmem:[%s8 + $0x8] sm:$0xf]
        %v2695 = vld [vmem:[%s8 + $0xc] sm:$0xf]
        %v2696 = vld [vmem:[%s8 + $0x10] sm:$0xf]
        %v2697 = vld [vmem:[%s8 + $0x14] sm:$0xf]
        %v2698 = vld [vmem:[%s8 + $0x18] sm:$0xf]
        %v2699 = vld [vmem:[%s8 + $0x1c] sm:$0xf]
        %v2701 = vcombine.high %v2683, %v2683
        %v2703 = vpack.c.bf16 %v2683, %v2683
        %v2704 = vpack.c.bf16 %v2701, %v2701
        %v2713 = vunpack.c.l.b16 %v2692
        %v2714 = vunpack.c.l.b16 %v2693
        %v2715 = vunpack.c.l.b16 %v2694
        %v2716 = vunpack.c.l.b16 %v2695
        %v2717 = vunpack.c.l.b16 %v2696
        %v2718 = vunpack.c.l.b16 %v2697
        %v2719 = vunpack.c.l.b16 %v2698
        %v2720 = vunpack.c.l.b16 %v2699
        %v2721 = vpack.c.b16 %v2714, %v2713
        %v2722 = vpack.c.b16 %v2716, %v2715
        %v2723 = vpack.c.b16 %v2718, %v2717
        %v2724 = vpack.c.b16 %v2720, %v2719
        %v2726 = vsel %vm1361, %v2721, 0
        %v2729 = vsel %vm1361, %v2722, 0
        %v2732 = vsel %vm1361, %v2723, 0
        %v2735 = vsel %vm1361, %v2724, 0
        %vm2737 = vcmask 1040384
        %vm2738 = vcmask 1041408
        %v2739 = vsel %vm2737, 4294967295, 65535
        %v2740 = vsel %vm2738, %v2739, 0
        %v2742 = vand.u32 %v2703, %v2740
        %v2745 = vand.u32 %v2704, %v2740
        %2747 = vmatprep.subr.bf16.mxu0 %v2745
        %2748 = vmatpush1.bf16.msra.mxu0 %v2742
        %2749 = vmatprep.subr.bf16.mxu0 0
        %2750 = vmatpush1.bf16.msra.mxu0 0
        %2751 = vmatprep.subr.bf16.mxu0 0
        %2752 = vmatpush1.bf16.msra.mxu0 0
        %2753 = vmatprep.subr.bf16.mxu0 0
        %2754 = vmatpush1.bf16.msra.mxu0 0
        %2755 = vmatprep.subr.bf16.mxu0 0
        %2756 = vmatpush1.bf16.msra.mxu0 0
        %2757 = vmatprep.subr.bf16.mxu0 0
        %2758 = vmatpush1.bf16.msra.mxu0 0
        %2759 = vmatprep.subr.bf16.mxu0 0
        %2760 = vmatpush1.bf16.msra.mxu0 0
        %2761 = vmatprep.subr.bf16.mxu0 0
        %2762 = vmatpush1.bf16.msra.mxu0 0
        %2763 = vmatprep.subr.bf16.mxu0 0
        %2764 = vmatpush1.bf16.msra.mxu0 0
        %2765 = vmatprep.subr.bf16.mxu0 0
        %2766 = vmatpush1.bf16.msra.mxu0 0
        %2767 = vmatprep.subr.bf16.mxu0 0
        %2768 = vmatpush1.bf16.msra.mxu0 0
        %2769 = vmatprep.subr.bf16.mxu0 0
        %2770 = vmatpush1.bf16.msra.mxu0 0
        %2771 = vmatprep.subr.bf16.mxu0 0
        %2772 = vmatpush1.bf16.msra.mxu0 0
        %2773 = vmatprep.subr.bf16.mxu0 0
        %2774 = vmatpush1.bf16.msra.mxu0 0
        %2775 = vmatprep.subr.bf16.mxu0 0
        %2776 = vmatpush1.bf16.msra.mxu0 0
        %2777 = vmatprep.subr.bf16.mxu0 0
        %2778 = vmatpush1.bf16.msra.mxu0 0
        %2779 = vmatprep.mubr.bf16.mxu0 0
        %2780 = vmatmul.mubr.bf16.gmra.mrb[0].mxu0 %v2726
        %v2781 = vpop.f32.mrb[0].mxu0
        %v2782 = vadd.f32 0.0, %v2781
        %v2783 = vpop.f32.mrb[0].mxu0
        %v2784 = vadd.f32 0.0, %v2783
        %v2785 = vpop.f32.mrb[0].mxu0
        %v2786 = vadd.f32 0.0, %v2785
        %v2787 = vpop.f32.mrb[0].mxu0
        %v2788 = vadd.f32 0.0, %v2787
        %2789 = vmatprep.mubr.bf16.mxu0 0
        %2790 = vmatmul.mubr.bf16.gmra.mrb[0].mxu0 %v2729
        %v2791 = vpop.f32.mrb[0].mxu0
        %v2792 = vadd.f32 0.0, %v2791
        %v2793 = vpop.f32.mrb[0].mxu0
        %v2794 = vadd.f32 0.0, %v2793
        %v2795 = vpop.f32.mrb[0].mxu0
        %v2796 = vadd.f32 0.0, %v2795
        %v2797 = vpop.f32.mrb[0].mxu0
        %v2798 = vadd.f32 0.0, %v2797
        %2799 = vmatprep.mubr.bf16.mxu0 0
        %2800 = vmatmul.mubr.bf16.gmra.mrb[0].mxu0 %v2732
        %v2801 = vpop.f32.mrb[0].mxu0
        %v2802 = vadd.f32 0.0, %v2801
        %v2803 = vpop.f32.mrb[0].mxu0
        %v2804 = vadd.f32 0.0, %v2803
        %v2805 = vpop.f32.mrb[0].mxu0
        %v2806 = vadd.f32 0.0, %v2805
        %v2807 = vpop.f32.mrb[0].mxu0
        %v2808 = vadd.f32 0.0, %v2807
        %2809 = vmatprep.mubr.bf16.mxu0 0
        %2810 = vmatmul.mubr.bf16.gmra.mrb[0].mxu0 %v2735
        %v2811 = vpop.f32.mrb[0].mxu0
        %v2812 = vadd.f32 0.0, %v2811
        %v2813 = vpop.f32.mrb[0].mxu0
        %v2814 = vadd.f32 0.0, %v2813
        %v2815 = vpop.f32.mrb[0].mxu0
        %v2816 = vadd.f32 0.0, %v2815
        %v2817 = vpop.f32.mrb[0].mxu0
        %v2818 = vadd.f32 0.0, %v2817
        %2819 = vdwg.mxu0
        %v2828 = vunpack.c.l.b16 %v2684
        %v2829 = vunpack.c.l.b16 %v2685
        %v2830 = vunpack.c.l.b16 %v2686
        %v2831 = vunpack.c.l.b16 %v2687
        %v2832 = vunpack.c.l.b16 %v2688
        %v2833 = vunpack.c.l.b16 %v2689
        %v2834 = vunpack.c.l.b16 %v2690
        %v2835 = vunpack.c.l.b16 %v2691
        %v2836 = vpack.c.b16 %v2829, %v2828
        %v2837 = vpack.c.b16 %v2831, %v2830
        %v2838 = vpack.c.b16 %v2833, %v2832
        %v2839 = vpack.c.b16 %v2835, %v2834
        %2844 = vmatprep.subr.bf16.mxu0 0
        %2845 = vmatpush1.bf16.xpose.msra.mxu0 %v2032
        %2846 = vmatprep.subr.bf16.mxu0 0
        %2847 = vmatpush1.bf16.xpose.msra.mxu0 %v2033
        %2848 = vmatprep.subr.bf16.mxu0 0
        %2849 = vmatpush1.bf16.xpose.msra.mxu0 %v2034
        %2850 = vmatprep.subr.bf16.mxu0 0
        %2851 = vmatpush1.bf16.xpose.msra.mxu0 %v2035
        %2852 = vmatprep.subr.bf16.mxu0 0
        %2853 = vmatpush1.bf16.xpose.msra.mxu0 %v2036
        %2854 = vmatprep.subr.bf16.mxu0 0
        %2855 = vmatpush1.bf16.xpose.msra.mxu0 %v2037
        %2856 = vmatprep.subr.bf16.mxu0 0
        %2857 = vmatpush1.bf16.xpose.msra.mxu0 %v2038
        %2858 = vmatprep.subr.bf16.mxu0 0
        %2859 = vmatpush1.bf16.xpose.msra.mxu0 %v2039
        %2860 = vmatprep.subr.bf16.mxu0 0
        %2861 = vmatpush1.bf16.xpose.msra.mxu0 %v2040
        %2862 = vmatprep.subr.bf16.mxu0 0
        %2863 = vmatpush1.bf16.xpose.msra.mxu0 %v2041
        %2864 = vmatprep.subr.bf16.mxu0 0
        %2865 = vmatpush1.bf16.xpose.msra.mxu0 %v2042
        %2866 = vmatprep.subr.bf16.mxu0 0
        %2867 = vmatpush1.bf16.xpose.msra.mxu0 %v2043
        %2868 = vmatprep.subr.bf16.mxu0 0
        %2869 = vmatpush1.bf16.xpose.msra.mxu0 %v2044
        %2870 = vmatprep.subr.bf16.mxu0 0
        %2871 = vmatpush1.bf16.xpose.msra.mxu0 %v2045
        %2872 = vmatprep.subr.bf16.mxu0 0
        %2873 = vmatpush1.bf16.xpose.msra.mxu0 %v2046
        %2874 = vmatprep.subr.bf16.mxu0 0
        %2875 = vmatpush1.bf16.xpose.msra.mxu0 %v2047
        %2876 = vmatprep.mubr.bf16.mxu0 0
        %2877 = vmatmul.mubr.bf16.gmra.mrb[0].mxu0 %v2836
        %v2878 = vpop.f32.mrb[0].mxu0
        %v2879 = vadd.f32 %v2782, %v2878
        %v2880 = vpop.f32.mrb[0].mxu0
        %v2881 = vadd.f32 %v2784, %v2880
        %v2882 = vpop.f32.mrb[0].mxu0
        %v2883 = vadd.f32 %v2786, %v2882
        %v2884 = vpop.f32.mrb[0].mxu0
        %v2885 = vadd.f32 %v2788, %v2884
        %2886 = vmatprep.mubr.bf16.mxu0 0
        %2887 = vmatmul.mubr.bf16.gmra.mrb[0].mxu0 %v2837
        %v2888 = vpop.f32.mrb[0].mxu0
        %v2889 = vadd.f32 %v2792, %v2888
        %v2890 = vpop.f32.mrb[0].mxu0
        %v2891 = vadd.f32 %v2794, %v2890
        %v2892 = vpop.f32.mrb[0].mxu0
        %v2893 = vadd.f32 %v2796, %v2892
        %v2894 = vpop.f32.mrb[0].mxu0
        %v2895 = vadd.f32 %v2798, %v2894
        %2896 = vmatprep.mubr.bf16.mxu0 0
        %2897 = vmatmul.mubr.bf16.gmra.mrb[0].mxu0 %v2838
        %v2898 = vpop.f32.mrb[0].mxu0
        %v2899 = vadd.f32 %v2802, %v2898
        %v2900 = vpop.f32.mrb[0].mxu0
        %v2901 = vadd.f32 %v2804, %v2900
        %v2902 = vpop.f32.mrb[0].mxu0
        %v2903 = vadd.f32 %v2806, %v2902
        %v2904 = vpop.f32.mrb[0].mxu0
        %v2905 = vadd.f32 %v2808, %v2904
        %2906 = vmatprep.mubr.bf16.mxu0 0
        %2907 = vmatmul.mubr.bf16.gmra.mrb[0].mxu0 %v2839
        %v2908 = vpop.f32.mrb[0].mxu0
        %v2909 = vadd.f32 %v2812, %v2908
        %v2910 = vpop.f32.mrb[0].mxu0
        %v2911 = vadd.f32 %v2814, %v2910
        %v2912 = vpop.f32.mrb[0].mxu0
        %v2913 = vadd.f32 %v2816, %v2912
        %v2914 = vpop.f32.mrb[0].mxu0
        %v2915 = vadd.f32 %v2818, %v2914
        %2916 = vdwg.mxu0
        %v2917 = vld [vmem:[%s9] sm:$0xff]
        %v2918 = vld [vmem:[%s9 + $0x8] sm:$0xff]
        %v2919 = vld [vmem:[%s9 + $0x10] sm:$0xff]
        %v2920 = vld [vmem:[%s9 + $0x18] sm:$0xff]
        %v2921 = vld [vmem:[%s9 + $0x20] sm:$0xff]
        %v2922 = vld [vmem:[%s9 + $0x28] sm:$0xff]
        %v2923 = vld [vmem:[%s9 + $0x30] sm:$0xff]
        %v2924 = vld [vmem:[%s9 + $0x38] sm:$0xff]
        %2926 = vset.pattern.permute.xlu0 0
        %2927 = vperm.xlu0 %2926, %v2917
        %v2928 = vpop.permute.xlu0 %2927
        %2931 = vset.pattern.permute.xlu0 0
        %2932 = vperm.xlu0 %2931, %v2918
        %v2933 = vpop.permute.xlu0 %2932
        %2936 = vset.pattern.permute.xlu0 0
        %2937 = vperm.xlu0 %2936, %v2919
        %v2938 = vpop.permute.xlu0 %2937
        %2941 = vset.pattern.permute.xlu0 0
        %2942 = vperm.xlu0 %2941, %v2920
        %v2943 = vpop.permute.xlu0 %2942
        %2946 = vset.pattern.permute.xlu0 0
        %2947 = vperm.xlu0 %2946, %v2921
        %v2948 = vpop.permute.xlu0 %2947
        %2951 = vset.pattern.permute.xlu0 0
        %2952 = vperm.xlu0 %2951, %v2922
        %v2953 = vpop.permute.xlu0 %2952
        %2956 = vset.pattern.permute.xlu0 0
        %2957 = vperm.xlu0 %2956, %v2923
        %v2958 = vpop.permute.xlu0 %2957
        %2961 = vset.pattern.permute.xlu0 0
        %2962 = vperm.xlu0 %2961, %v2924
        %v2963 = vpop.permute.xlu0 %2962
        %v2965 = vadd.f32 %v2879, %v2928
        %v2966 = vadd.f32 %v2881, %v2928
        %v2967 = vadd.f32 %v2883, %v2933
        %v2968 = vadd.f32 %v2885, %v2933
        %v2969 = vadd.f32 %v2889, %v2938
        %v2970 = vadd.f32 %v2891, %v2938
        %v2971 = vadd.f32 %v2893, %v2943
        %v2972 = vadd.f32 %v2895, %v2943
        %v2973 = vadd.f32 %v2899, %v2948
        %v2974 = vadd.f32 %v2901, %v2948
        %v2975 = vadd.f32 %v2903, %v2953
        %v2976 = vadd.f32 %v2905, %v2953
        %v2977 = vadd.f32 %v2909, %v2958
        %v2978 = vadd.f32 %v2911, %v2958
        %v2979 = vadd.f32 %v2913, %v2963
        %v2980 = vadd.f32 %v2915, %v2963
        %v2981 = vmax.f32 %v2965, 0.0
        %v2982 = vmax.f32 %v2966, 0.0
        %v2983 = vmax.f32 %v2967, 0.0
        %v2984 = vmax.f32 %v2968, 0.0
        %v2985 = vmax.f32 %v2969, 0.0
        %v2986 = vmax.f32 %v2970, 0.0
        %v2987 = vmax.f32 %v2971, 0.0
        %v2988 = vmax.f32 %v2972, 0.0
        %v2989 = vmax.f32 %v2973, 0.0
        %v2990 = vmax.f32 %v2974, 0.0
        %v2991 = vmax.f32 %v2975, 0.0
        %v2992 = vmax.f32 %v2976, 0.0
        %v2993 = vmax.f32 %v2977, 0.0
        %v2994 = vmax.f32 %v2978, 0.0
        %v2995 = vmax.f32 %v2979, 0.0
        %v2996 = vmax.f32 %v2980, 0.0
        %v2997 = vld [vmem:[%s10] sm:$0x3]
        %v2998 = vpack.c.bf16 %v2983, %v2981
        %v2999 = vpack.c.bf16 %v2984, %v2982
        %v3000 = vpack.c.bf16 %v2987, %v2985
        %v3001 = vpack.c.bf16 %v2988, %v2986
        %v3002 = vpack.c.bf16 %v2991, %v2989
        %v3003 = vpack.c.bf16 %v2992, %v2990
        %v3004 = vpack.c.bf16 %v2995, %v2993
        %v3005 = vpack.c.bf16 %v2996, %v2994
        %v3006 = vld [vmem:[%s11] sm:$0x7]
        %3008 = vset.pattern.permute.xlu0 0
        %3009 = vperm.xlu0 %3008, %v3006
        %v3010 = vpop.permute.xlu0 %3009
        %v3013 = vsel %vm1774, %v2997, 0
        %3015 = vmatprep.subr.bf16.mxu0 %v2999
        %3016 = vmatpush1.bf16.msra.mxu0 %v2998
        %3017 = vmatprep.subr.bf16.mxu0 %v3001
        %3018 = vmatpush1.bf16.msra.mxu0 %v3000
        %3019 = vmatprep.subr.bf16.mxu0 %v3003
        %3020 = vmatpush1.bf16.msra.mxu0 %v3002
        %3021 = vmatprep.subr.bf16.mxu0 %v3005
        %3022 = vmatpush1.bf16.msra.mxu0 %v3004
        %3023 = vmatprep.subr.bf16.mxu0 0
        %3024 = vmatpush1.bf16.msra.mxu0 0
        %3025 = vmatprep.subr.bf16.mxu0 0
        %3026 = vmatpush1.bf16.msra.mxu0 0
        %3027 = vmatprep.subr.bf16.mxu0 0
        %3028 = vmatpush1.bf16.msra.mxu0 0
        %3029 = vmatprep.subr.bf16.mxu0 0
        %3030 = vmatpush1.bf16.msra.mxu0 0
        %3031 = vmatprep.subr.bf16.mxu0 0
        %3032 = vmatpush1.bf16.msra.mxu0 0
        %3033 = vmatprep.subr.bf16.mxu0 0
        %3034 = vmatpush1.bf16.msra.mxu0 0
        %3035 = vmatprep.subr.bf16.mxu0 0
        %3036 = vmatpush1.bf16.msra.mxu0 0
        %3037 = vmatprep.subr.bf16.mxu0 0
        %3038 = vmatpush1.bf16.msra.mxu0 0
        %3039 = vmatprep.subr.bf16.mxu0 0
        %3040 = vmatpush1.bf16.msra.mxu0 0
        %3041 = vmatprep.subr.bf16.mxu0 0
        %3042 = vmatpush1.bf16.msra.mxu0 0
        %3043 = vmatprep.subr.bf16.mxu0 0
        %3044 = vmatpush1.bf16.msra.mxu0 0
        %3045 = vmatprep.subr.bf16.mxu0 0
        %3046 = vmatpush1.bf16.msra.mxu0 0
        %3047 = vmatprep.mubr.bf16.mxu0 0
        %3048 = vmatmul.mubr.bf16.gmra.mrb[0].mxu0 %v3013
        %v3049 = vpop.f32.mrb[0].mxu0
        %v3050 = vadd.f32 %v3010, %v3049
        %v3051 = vpop.f32.mrb[0].mxu0
        %v3052 = vadd.f32 %v3010, %v3051
        %v3053 = vpop.f32.mrb[0].mxu0
        %v3054 = vpop.f32.mrb[0].mxu0
        %3055 = vdwg.mxu0
        %v3058 = vcombine.low %v3050, %v3052
        %3060 = vst [vmem:[%s571] sm:$0x77] %v3058
        %3061 = vst [vmem:[%s581] sm:$0x77] %v2683
      $region76: #{tpu_custom_call.1} parent=67 // pred_fallthru
        _
      %s3062 = smul.u32 2, %s31
      %p3063 = scmp.lt.s32.totalorder %s30, 1
      %s3064 = scalar_select %p3063, %s30, 1
      %p3065 = scmp.lt.s32.totalorder %s3062, 1
      %s3066 = scalar_select %p3065, %s3062, 1
      %s3067 = smul.addr %s3064, 2
      %s3068 = sadd.s32 %s3066, %s3067
      %s3069 = smul.addr %s3068, 4
      %s3070 = scalar_lea.vmem %s12, %s3069
      %s3071 = smul.u32 2, %s31
      %p3072 = scmp.lt.s32.totalorder %s30, 1
      %s3073 = scalar_select %p3072, %s30, 1
      %p3074 = scmp.lt.s32.totalorder %s3071, 1
      %s3075 = scalar_select %p3074, %s3071, 1
      %s3076 = smul.addr %s3073, 2
      %s3077 = sadd.s32 %s3075, %s3076
      %s3078 = smul.addr %s3077, 4
      %s3079 = scalar_lea.vmem %s13, %s3078
      // Predicated region
      $region77: #{tpu_custom_call.1} parent=67 // pred_check
        %p3080 = pneg %p337
      $region78: #{tpu_custom_call.1} parent=67 // pred_check_branch
        %3082 = sbr.rel (%p3080) target = $region80
      $region79: #{tpu_custom_call.1} parent=67 // pred_region
        %s3083 = smul.u32 2, %s31
      $region80: #{tpu_custom_call.1} parent=67 // pred_fallthru
        _
      // Predicated region
      $region81: #{tpu_custom_call.1} parent=67 // pred_check
        %p3084 = pneg %p365
      $region82: #{tpu_custom_call.1} parent=67 // pred_check_branch
        %3086 = sbr.rel (%p3084) target = $region84
      $region83: #{tpu_custom_call.1} parent=67 // pred_region
        %s3087 = smul.u32 2, %s31
      $region84: #{tpu_custom_call.1} parent=67 // pred_fallthru
        _
    $region68: #{tpu_custom_call.1} parent=5 // pred_fallthru
      _
    %p3088 = scmp.le.s32.totalorder 2, %s20
    // Predicated region
    $region85: #{tpu_custom_call.1} parent=5 // pred_check
      %p3089 = pneg %p3088
    $region86: #{tpu_custom_call.1} parent=5 // pred_check_branch
      %3091 = sbr.rel (%p3089) target = $region88
    $region87: #{tpu_custom_call.1} parent=5 // pred_region
      %s3092 = ssub.s32 %s20, 2
      // Predicated region
      $region89: #{tpu_custom_call.1} parent=87 // pred_check
        %p3093 = pneg %p343
      $region90: #{tpu_custom_call.1} parent=87 // pred_check_branch
        %3095 = sbr.rel (%p3093) target = $region92
      $region91: #{tpu_custom_call.1} parent=87 // pred_region
        %s3096 = smul.u32 2, %s34
        %p3097 = scmp.lt.s32.totalorder %s33, 1
        %s3098 = scalar_select %p3097, %s33, 1
        %p3099 = scmp.lt.s32.totalorder %s3096, 1
        %s3100 = scalar_select %p3099, %s3096, 1
        %s3101 = smul.addr %s3098, 2
        %s3102 = sadd.s32 %s3100, %s3101
        %s3103 = smul.addr %s3102, 4
        %s3104 = scalar_lea.vmem %s12, %s3103
      $region92: #{tpu_custom_call.1} parent=87 // pred_fallthru
        _
      // Predicated region
      $region93: #{tpu_custom_call.1} parent=87 // pred_check
        %p3105 = pneg %p371
      $region94: #{tpu_custom_call.1} parent=87 // pred_check_branch
        %3107 = sbr.rel (%p3105) target = $region96
      $region95: #{tpu_custom_call.1} parent=87 // pred_region
        %s3108 = smul.u32 2, %s34
        %p3109 = scmp.lt.s32.totalorder %s33, 1
        %s3110 = scalar_select %p3109, %s33, 1
        %p3111 = scmp.lt.s32.totalorder %s3108, 1
        %s3112 = scalar_select %p3111, %s3108, 1
        %s3113 = smul.addr %s3110, 2
        %s3114 = sadd.s32 %s3112, %s3113
        %s3115 = smul.addr %s3114, 4
        %s3116 = scalar_lea.vmem %s13, %s3115
      $region96: #{tpu_custom_call.1} parent=87 // pred_fallthru
        _
    $region88: #{tpu_custom_call.1} parent=5 // pred_fallthru
      _
  $region6: #{tpu_custom_call.1} parent=0 // loop_footer
    %s24 = sadd.s32 1, %s20
  $region7: #{tpu_custom_call.1} parent=0 // loop_footer_branch
    %19 = sbr.rel target = $region3
  $region8: #{tpu_custom_call.1} parent=0 // loop_exit
    _

</llo_original>
